<compile_context>
chip_gen: v7x
topology: tpu7x:2x2x1
jax: 0.10.0
libtpu: 0.0.40
codegen_flags: <defaults>
</compile_context>

<pallas_src>
import math

import jax
import jax.numpy as jnp
from jax.experimental import pallas as pl
from jax.experimental.pallas import tpu as pltpu

# ----------------------- small TransformerConfig-equivalent -----------------------
SAMPLE_SIZE = 16        # config.sample_size
PATCH_SIZE = 4          # config.patch_size
CHANNELS = 4            # config.channels
D_MODEL = 32            # config.d_model
LATENT_SIZE = 8         # config.latent_size      (number of latent tokens)
LATENT_CHANNELS = 8     # config.latent_channels
N_HEADS = 2             # config.n_heads
N_LAYERS = 2            # config.n_layers
MLP_RATIO = 4

N_TOKENS = (SAMPLE_SIZE // PATCH_SIZE) ** 2          # 16
N_SEQ = N_TOKENS + LATENT_SIZE                       # 24
PATCH_DIM = CHANNELS * PATCH_SIZE * PATCH_SIZE       # 64
HEAD_DIM = D_MODEL // N_HEADS                        # 16
D_MLP = D_MODEL * MLP_RATIO                          # 128
LN_EPS = 1e-5
NEG_BIG = -1e30


# --------------------------------- Pallas kernel ----------------------------------
def encoder_kernel(patches_ref, w_patch_ref, init_ref, wqkv_ref, bqkv_ref, wo_ref,
                   w1_ref, w2_ref, lnb_ref, b1_ref, w_out_ref, z_ref):
    bt = patches_ref.shape[0]                       # images in this grid step (static)
    m = bt * N_SEQ

    # --- patch projection (conv k=p, s=p == unfold @ W); batch folded into M ---
    p = patches_ref[...].reshape(bt * N_TOKENS, PATCH_DIM)            # bf16
    x_tok = jnp.dot(p, w_patch_ref[...], preferred_element_type=jnp.float32)
    init = init_ref[...]                                              # (S, D) f32
    # init rows [LATENT_SIZE:] already hold pos_enc(token rows) + conv bias
    x_tok = x_tok.reshape(bt, N_TOKENS, D_MODEL) + init[LATENT_SIZE:][None]
    # latent tokens (already include their positional encoding)
    lat = jnp.broadcast_to(init[:LATENT_SIZE][None], (bt, LATENT_SIZE, D_MODEL))
    x = jnp.concatenate([lat, x_tok], axis=1)                         # (bt, S, D) f32

    def layernorm(h, g, b):
        mu = jnp.mean(h, axis=-1, keepdims=True)
        var = jnp.mean(jnp.square(h - mu), axis=-1, keepdims=True)
        return (h - mu) * jax.lax.rsqrt(var + LN_EPS) * g + b

    # small packed parameters (loaded once; everything is tiny)
    wqkv = wqkv_ref[...]            # (L, D, 3D) bf16 (q columns pre-scaled by 1/sqrt(dh))
    bqkv = bqkv_ref[...]            # (L, 3D)   f32   (q part pre-scaled)
    wo = wo_ref[...]                # (L, D, D)    bf16
    w1 = w1_ref[...]                # (L, D, D_MLP) bf16
    w2 = w2_ref[...]                # (L, D_MLP, D) bf16
    lnb = lnb_ref[...]              # (L, 6, D) f32: g1, b1, g2, b2, bo, b2_mlp
    b1v = b1_ref[...]               # (L, D_MLP) f32

    # loop-invariant masks (hoisted: JAX does not CSE broadcast_in_dim inside loops)
    dim_ids = jax.lax.broadcasted_iota(jnp.int32, (1, D_MODEL), 1)
    head_masks = [jnp.logical_and(dim_ids >= h * HEAD_DIM, dim_ids < (h + 1) * HEAD_DIM)
                  for h in range(N_HEADS)]
    col_ids = jax.lax.broadcasted_iota(jnp.int32, (1, N_HEADS * N_SEQ), 1)
    seg_masks = [jnp.logical_and(col_ids >= h * N_SEQ, col_ids < (h + 1) * N_SEQ)
                 for h in range(N_HEADS)]
    zero_bf = jnp.array(0.0, jnp.bfloat16)

    for l in range(N_LAYERS):                                         # static unroll
        # ---------------- attention block (pre-norm) ----------------
        h = layernorm(x, lnb[l, 0], lnb[l, 1])
        hf = h.reshape(m, D_MODEL).astype(jnp.bfloat16)
        # fused QKV: one matmul, one bias add, one cast
        qkv = (jnp.dot(hf, wqkv[l], preferred_element_type=jnp.float32)
               + bqkv[l]).astype(jnp.bfloat16)                        # (m, 3D)
        q3 = qkv[:, :D_MODEL].reshape(bt, N_SEQ, D_MODEL)             # already scaled
        k3 = qkv[:, D_MODEL:2 * D_MODEL].reshape(bt, N_SEQ, D_MODEL)
        v3 = qkv[:, 2 * D_MODEL:].reshape(bt, N_SEQ, D_MODEL)

        # fold both heads into ONE batched score matmul + ONE batched PV matmul:
        # K_cat/V_cat stack per-head masked copies along the sequence axis.
        kcat = jnp.concatenate([jnp.where(hm, k3, zero_bf) for hm in head_masks], axis=1)
        vcat = jnp.concatenate([jnp.where(hm, v3, zero_bf) for hm in head_masks], axis=1)

        s = jax.lax.dot_general(q3, kcat, (((2,), (2,)), ((0,), (0,))),
                                preferred_element_type=jnp.float32)   # (bt, S, H*S)

        # per-head softmax over column segments of s
        mstar = jnp.full_like(s, NEG_BIG)
        for sm in seg_masks:
            mh = jnp.max(jnp.where(sm, s, NEG_BIG), axis=-1, keepdims=True)
            mstar = jnp.where(sm, mh, mstar)
        e = jnp.exp(s - mstar)
        rstar = jnp.zeros_like(s)
        for sm in seg_masks:
            dh = jnp.sum(jnp.where(sm, e, 0.0), axis=-1, keepdims=True)
            rstar = jnp.where(sm, pl.reciprocal(dh, approx=True), rstar)
        pmat = (e * rstar).astype(jnp.bfloat16)

        attn = jax.lax.dot_general(pmat, vcat, (((2,), (1,)), ((0,), (0,))),
                                   preferred_element_type=jnp.float32)  # (bt, S, D)
        af = attn.reshape(m, D_MODEL).astype(jnp.bfloat16)
        proj = jnp.dot(af, wo[l], preferred_element_type=jnp.float32) + lnb[l, 4]
        x = x + proj.reshape(bt, N_SEQ, D_MODEL)

        # ---------------- MLP block (pre-norm) ----------------
        h = layernorm(x, lnb[l, 2], lnb[l, 3])
        hf = h.reshape(m, D_MODEL).astype(jnp.bfloat16)
        h1 = jnp.dot(hf, w1[l], preferred_element_type=jnp.float32) + b1v[l]
        h1 = jax.nn.gelu(h1, approximate=True)
        h2 = jnp.dot(h1.astype(jnp.bfloat16), w2[l],
                     preferred_element_type=jnp.float32) + lnb[l, 5]
        x = x + h2.reshape(bt, N_SEQ, D_MODEL)

    # ---- latent projection (no bias), batch folded into M ----
    zl = x[:, :LATENT_SIZE, :].reshape(bt * LATENT_SIZE, D_MODEL).astype(jnp.bfloat16)
    z = jnp.dot(zl, w_out_ref[...], preferred_element_type=jnp.float32)
    z_ref[...] = z.reshape(bt, LATENT_SIZE, LATENT_CHANNELS)


# ------------------------------------ wrapper --------------------------------------
def _replicated_spec(shape):
    zeros = (0,) * len(shape)
    return pl.BlockSpec(tuple(shape), lambda i: zeros)


def extract_patches(x_nchw):
    """NCHW -> (B, n_tokens, C*p*p); per-patch features ordered (c, kh, kw)."""
    B = x_nchw.shape[0]
    p = PATCH_SIZE
    hp = SAMPLE_SIZE // p
    x = x_nchw.reshape(B, CHANNELS, hp, p, hp, p)
    x = x.transpose(0, 2, 4, 1, 3, 5)                               # (B, hp, wp, C, p, p)
    return x.reshape(B, N_TOKENS, PATCH_DIM)


def _pack_params(params):
    """Pack the 17 module tensors into 10 kernel inputs (bf16 matmul weights, f32 rest)."""
    bf = jnp.bfloat16
    scale = 1.0 / math.sqrt(HEAD_DIM)
    # fused (L, D, 3D) QKV weight/bias with the softmax scale folded into the q columns
    wqkv = jnp.concatenate([params["wqkv"][:, :, :D_MODEL] * scale,
                            params["wqkv"][:, :, D_MODEL:]], axis=-1)           # (L,D,3D)
    bqkv = jnp.concatenate([params["bqkv"][:, :D_MODEL] * scale,
                            params["bqkv"][:, D_MODEL:]], axis=-1)              # (L,3D)
    lnb = jnp.stack([params["ln1_g"], params["ln1_b"],
                     params["ln2_g"], params["ln2_b"],
                     params["bo"], params["b2"]], axis=1)                        # (L,6,D)
    # Fold pos-enc + conv bias: rows[:8] = latents + pos[:8]; rows[8:] = pos[8:] + b_patch
    init = jnp.concatenate(
        [params["latents"] + params["pos"][:LATENT_SIZE],
         params["pos"][LATENT_SIZE:] + params["b_patch"]], axis=0)               # (S,D)
    return [params["w_patch"].astype(bf),           # (PATCH_DIM, D)
            init.astype(jnp.float32),               # (S, D)
            wqkv.astype(bf),                        # (L, D, 3D)
            bqkv.astype(jnp.float32),               # (L, 3D)
            params["wo"].astype(bf),                # (L, D, D)
            params["w1"].astype(bf),                # (L, D, D_MLP)
            params["w2"].astype(bf),                # (L, D_MLP, D)
            lnb.astype(jnp.float32),                # (L, 6, D)
            params["b1"].astype(jnp.float32),       # (L, D_MLP)
            params["w_out"].astype(bf)]             # (D, LATENT_CHANNELS)


def _default_b_tile():
    """Per-generation batch tile: v5e has a 16 MiB default scoped VMEM, v7x only 64 MiB
    physical VMEM -- keep tiles modest; lane padding (D=32 -> 128 lanes) is accounted."""
    try:
        kind = jax.devices()[0].device_kind.lower()
    except Exception:
        return 128
    if "v5 lite" in kind or "v5e" in kind or "v5lite" in kind:
        return 64
    return 128


def encoder_forward(x_nchw, params, b_tile=None):
    B = x_nchw.shape[0]
    if b_tile is None:
        b_tile = _default_b_tile()
    bt = min(b_tile, B)                       # small batches -> single grid step
    nb = pl.cdiv(B, bt)
    Bp = nb * bt

    patches = extract_patches(x_nchw).astype(jnp.bfloat16)
    if Bp != B:
        patches = jnp.pad(patches, ((0, Bp - B), (0, 0), (0, 0)))

    weights = _pack_params(params)

    in_specs = [pl.BlockSpec((bt, N_TOKENS, PATCH_DIM), lambda i: (i, 0, 0))]
    in_specs += [_replicated_spec(w.shape) for w in weights]
    out_spec = pl.BlockSpec((bt, LATENT_SIZE, LATENT_CHANNELS), lambda i: (i, 0, 0))

    # advisory cost estimate so XLA can overlap the patch-extraction glue with the kernel
    flops = 2 * Bp * (
        N_TOKENS * PATCH_DIM * D_MODEL
        + N_LAYERS * (N_SEQ * D_MODEL * (3 * D_MODEL)              # fused QKV
                      + N_SEQ * D_MODEL * D_MODEL                   # attn out proj
                      + 2 * N_SEQ * (N_HEADS * N_SEQ) * D_MODEL     # scores + PV
                      + 2 * N_SEQ * D_MODEL * D_MLP)                # MLP
        + LATENT_SIZE * D_MODEL * LATENT_CHANNELS)
    transc = Bp * N_LAYERS * (N_HEADS * N_SEQ * N_SEQ + N_SEQ * D_MLP)
    w_bytes = int(sum(w.size * w.dtype.itemsize for w in weights))
    bytes_accessed = int(Bp * (N_TOKENS * PATCH_DIM * 2
                               + LATENT_SIZE * LATENT_CHANNELS * 4) + w_bytes)

    z_full = pl.pallas_call(
        encoder_kernel,
        out_shape=jax.ShapeDtypeStruct((Bp, LATENT_SIZE, LATENT_CHANNELS), jnp.float32),
        grid=(nb,),
        in_specs=in_specs,
        out_specs=out_spec,
        compiler_params=pltpu.CompilerParams(
            dimension_semantics=("parallel",),     # TODO(synk): CORE_PARALLEL on v7x
            vmem_limit_bytes=48 * 1024 * 1024),
        cost_estimate=pl.CostEstimate(
            flops=int(flops), transcendentals=int(transc),
            bytes_accessed=bytes_accessed),
    )(patches, *weights)

    return z_full[:B]


# ------------------------------- plain-JAX reference --------------------------------
def encoder_reference(x_nchw, params):
    B = x_nchw.shape[0]
    patches = extract_patches(x_nchw).astype(jnp.float32)
    x = patches @ params["w_patch"] + params["b_patch"]             # (B, n_tok, D)
    z0 = jnp.broadcast_to(params["latents"][None], (B, LATENT_SIZE, D_MODEL))
    x = jnp.concatenate([z0, x], axis=1) + params["pos"][None]

    def ln(h, g, b):
        mu = h.mean(-1, keepdims=True)
        var = ((h - mu) ** 2).mean(-1, keepdims=True)
        return (h - mu) * jax.lax.rsqrt(var + LN_EPS) * g + b

    scale = 1.0 / math.sqrt(HEAD_DIM)
    for l in range(N_LAYERS):
        h = ln(x, params["ln1_g"][l], params["ln1_b"][l])
        qkv = h @ params["wqkv"][l] + params["bqkv"][l]
        q, k, v = jnp.split(qkv, 3, axis=-1)
        q = q.reshape(B, N_SEQ, N_HEADS, HEAD_DIM)
        k = k.reshape(B, N_SEQ, N_HEADS, HEAD_DIM)
        v = v.reshape(B, N_SEQ, N_HEADS, HEAD_DIM)
        s = jnp.einsum("bnhd,bmhd->bhnm", q, k) * scale
        p = jax.nn.softmax(s, axis=-1)
        o = jnp.einsum("bhnm,bmhd->bnhd", p, v).reshape(B, N_SEQ, D_MODEL)
        x = x + (o @ params["wo"][l] + params["bo"][l])

        h = ln(x, params["ln2_g"][l], params["ln2_b"][l])
        h = jax.nn.gelu(h @ params["w1"][l] + params["b1"][l], approximate=True)
        x = x + (h @ params["w2"][l] + params["b2"][l])

    return x[:, :LATENT_SIZE] @ params["w_out"]


# ----------------------------------- parameters -------------------------------------
def init_params(key):
    ks = jax.random.split(key, 9)
    std = 0.02
    # Conv2d weight (d_model, C, p, p) -> flattened (C*p*p, d_model) matmul form.
    w_conv = jax.random.normal(ks[0], (D_MODEL, CHANNELS, PATCH_SIZE, PATCH_SIZE)) * std
    params = {
        "w_patch": w_conv.reshape(D_MODEL, PATCH_DIM).T,
        "b_patch": (jax.random.normal(ks[1], (D_MODEL,)) * std).reshape(1, D_MODEL),
        "latents": jax.random.normal(ks[2], (LATENT_SIZE, D_MODEL)) * std,
        "pos": jax.random.normal(ks[3], (N_SEQ, D_MODEL)) * std,
        "ln1_g": jnp.ones((N_LAYERS, D_MODEL)),
        "ln1_b": jnp.zeros((N_LAYERS, D_MODEL)),
        "wqkv": jax.random.normal(ks[4], (N_LAYERS, D_MODEL, 3 * D_MODEL)) * std,
        "bqkv": jnp.zeros((N_LAYERS, 3 * D_MODEL)),
        "wo": jax.random.normal(ks[5], (N_LAYERS, D_MODEL, D_MODEL)) * std,
        "bo": jnp.zeros((N_LAYERS, D_MODEL)),
        "ln2_g": jnp.ones((N_LAYERS, D_MODEL)),
        "ln2_b": jnp.zeros((N_LAYERS, D_MODEL)),
        "w1": jax.random.normal(ks[6], (N_LAYERS, D_MODEL, D_MLP)) * std,
        "b1": jnp.zeros((N_LAYERS, D_MLP)),
        "w2": jax.random.normal(ks[7], (N_LAYERS, D_MLP, D_MODEL)) * std,
        "b2": jnp.zeros((N_LAYERS, D_MODEL)),
        "w_out": jax.random.normal(ks[8], (D_MODEL, LATENT_CHANNELS)) * std,
    }
    return {k: v.astype(jnp.float32) for k, v in params.items()}


if __name__ == "__main__":
    key = jax.random.PRNGKey(0)
    kx, kp = jax.random.split(key)
    x = jax.random.normal(kx, (2, CHANNELS, SAMPLE_SIZE, SAMPLE_SIZE), jnp.float32)
    params = init_params(kp)

    z = encoder_forward(x, params)
    jax.block_until_ready(z)

    z_ref = encoder_reference(x, params)
    assert z.shape == (2, LATENT_SIZE, LATENT_CHANNELS), z.shape
    err = float(jnp.max(jnp.abs(z - z_ref)))
    # bf16 matmul operands + approx reciprocal -> slightly looser tolerance than pure fp32
    assert err < 5e-3, f"max abs err = {err}"
    print("KERNEL_OK")
</pallas_src>

<mosaic_0001>
module attributes {stable_mosaic.version = 11 : i64} {
  func.func @encoder_kernel(%arg0: i32, %arg1: memref<2x16x64xbf16, #tpu.memory_space<vmem>>, %arg2: memref<64x32xbf16, #tpu.memory_space<vmem>>, %arg3: memref<24x32xf32, #tpu.memory_space<vmem>>, %arg4: memref<2x32x96xbf16, #tpu.memory_space<vmem>>, %arg5: memref<2x96xf32, #tpu.memory_space<vmem>>, %arg6: memref<2x32x32xbf16, #tpu.memory_space<vmem>>, %arg7: memref<2x32x128xbf16, #tpu.memory_space<vmem>>, %arg8: memref<2x128x32xbf16, #tpu.memory_space<vmem>>, %arg9: memref<2x6x32xf32, #tpu.memory_space<vmem>>, %arg10: memref<2x128xf32, #tpu.memory_space<vmem>>, %arg11: memref<32x8xbf16, #tpu.memory_space<vmem>>, %arg12: memref<2x8x8xf32, #tpu.memory_space<vmem>>) attributes {dimension_semantics = [#tpu.dimension_semantics<parallel>], iteration_bounds = array<i64: 1>, scalar_prefetch = 0 : i64, scratch_operands = 0 : i64, tpu.core_type = #tpu.core_type<tc>, window_params = [{transform_indices = @transform_0, window_bounds = array<i64: 2, 16, 64>}, {pipeline_mode = #tpu.pipeline_mode<synchronous>, transform_indices = @transform_1, window_bounds = array<i64: 64, 32>}, {pipeline_mode = #tpu.pipeline_mode<synchronous>, transform_indices = @transform_2, window_bounds = array<i64: 24, 32>}, {pipeline_mode = #tpu.pipeline_mode<synchronous>, transform_indices = @transform_3, window_bounds = array<i64: 2, 32, 96>}, {pipeline_mode = #tpu.pipeline_mode<synchronous>, transform_indices = @transform_4, window_bounds = array<i64: 2, 96>}, {pipeline_mode = #tpu.pipeline_mode<synchronous>, transform_indices = @transform_5, window_bounds = array<i64: 2, 32, 32>}, {pipeline_mode = #tpu.pipeline_mode<synchronous>, transform_indices = @transform_6, window_bounds = array<i64: 2, 32, 128>}, {pipeline_mode = #tpu.pipeline_mode<synchronous>, transform_indices = @transform_7, window_bounds = array<i64: 2, 128, 32>}, {pipeline_mode = #tpu.pipeline_mode<synchronous>, transform_indices = @transform_8, window_bounds = array<i64: 2, 6, 32>}, {pipeline_mode = #tpu.pipeline_mode<synchronous>, transform_indices = @transform_9, window_bounds = array<i64: 2, 128>}, {pipeline_mode = #tpu.pipeline_mode<synchronous>, transform_indices = @transform_10, window_bounds = array<i64: 32, 8>}, {transform_indices = @transform_11, window_bounds = array<i64: 2, 8, 8>}]} {
    %c0 = arith.constant 0 : index
    %c0_0 = arith.constant 0 : index
    %c0_1 = arith.constant 0 : index
    %0 = vector.load %arg1[%c0, %c0_0, %c0_1] : memref<2x16x64xbf16, #tpu.memory_space<vmem>>, vector<2x16x64xbf16>
    %1 = vector.shape_cast %0 : vector<2x16x64xbf16> to vector<32x64xbf16>
    %c0_2 = arith.constant 0 : index
    %c0_3 = arith.constant 0 : index
    %2 = vector.load %arg2[%c0_2, %c0_3] : memref<64x32xbf16, #tpu.memory_space<vmem>>, vector<64x32xbf16>
    %cst = arith.constant dense<0.000000e+00> : vector<32x32xf32>
    %3 = tpu.matmul %1, %2, %cst {dimension_numbers = #tpu.dot_dimension_numbers<[1], [0], [0], [1], [0, 0, 1, 1], [], []>} : vector<32x64xbf16>, vector<64x32xbf16>, vector<32x32xf32> -> vector<32x32xf32>
    %c0_4 = arith.constant 0 : index
    %c0_5 = arith.constant 0 : index
    %4 = vector.load %arg3[%c0_4, %c0_5] : memref<24x32xf32, #tpu.memory_space<vmem>>, vector<24x32xf32>
    %5 = vector.shape_cast %3 : vector<32x32xf32> to vector<2x16x32xf32>
    %6 = vector.extract_strided_slice %4 {offsets = [8, 0], sizes = [16, 32], strides = [1, 1]} : vector<24x32xf32> to vector<16x32xf32>
    %7 = vector.shape_cast %6 : vector<16x32xf32> to vector<1x16x32xf32>
    %8 = vector.broadcast %7 : vector<1x16x32xf32> to vector<2x16x32xf32>
    %9 = arith.addf %5, %8 : vector<2x16x32xf32>
    %10 = vector.extract_strided_slice %4 {offsets = [0, 0], sizes = [8, 32], strides = [1, 1]} : vector<24x32xf32> to vector<8x32xf32>
    %11 = vector.shape_cast %10 : vector<8x32xf32> to vector<1x8x32xf32>
    %12 = vector.shape_cast %11 : vector<1x8x32xf32> to vector<1x8x32xf32>
    %13 = vector.broadcast %12 : vector<1x8x32xf32> to vector<2x8x32xf32>
    %14 = tpu.concatenate %13, %9 in 1 : vector<2x8x32xf32>, vector<2x16x32xf32> -> vector<2x24x32xf32>
    %c0_6 = arith.constant 0 : index
    %c0_7 = arith.constant 0 : index
    %c0_8 = arith.constant 0 : index
    %15 = vector.load %arg4[%c0_6, %c0_7, %c0_8] : memref<2x32x96xbf16, #tpu.memory_space<vmem>>, vector<2x32x96xbf16>
    %c0_9 = arith.constant 0 : index
    %c0_10 = arith.constant 0 : index
    %16 = vector.load %arg5[%c0_9, %c0_10] : memref<2x96xf32, #tpu.memory_space<vmem>>, vector<2x96xf32>
    %c0_11 = arith.constant 0 : index
    %c0_12 = arith.constant 0 : index
    %c0_13 = arith.constant 0 : index
    %17 = vector.load %arg6[%c0_11, %c0_12, %c0_13] : memref<2x32x32xbf16, #tpu.memory_space<vmem>>, vector<2x32x32xbf16>
    %c0_14 = arith.constant 0 : index
    %c0_15 = arith.constant 0 : index
    %c0_16 = arith.constant 0 : index
    %18 = vector.load %arg7[%c0_14, %c0_15, %c0_16] : memref<2x32x128xbf16, #tpu.memory_space<vmem>>, vector<2x32x128xbf16>
    %c0_17 = arith.constant 0 : index
    %c0_18 = arith.constant 0 : index
    %c0_19 = arith.constant 0 : index
    %19 = vector.load %arg8[%c0_17, %c0_18, %c0_19] : memref<2x128x32xbf16, #tpu.memory_space<vmem>>, vector<2x128x32xbf16>
    %c0_20 = arith.constant 0 : index
    %c0_21 = arith.constant 0 : index
    %c0_22 = arith.constant 0 : index
    %20 = vector.load %arg9[%c0_20, %c0_21, %c0_22] : memref<2x6x32xf32, #tpu.memory_space<vmem>>, vector<2x6x32xf32>
    %c0_23 = arith.constant 0 : index
    %c0_24 = arith.constant 0 : index
    %21 = vector.load %arg10[%c0_23, %c0_24] : memref<2x128xf32, #tpu.memory_space<vmem>>, vector<2x128xf32>
    %22 = tpu.iota {dimensions = array<i32: 1>} : vector<1x32xi32>
    %c0_i32 = arith.constant 0 : i32
    %23 = vector.broadcast %c0_i32 : i32 to vector<1x32xi32>
    %24 = arith.cmpi sge, %22, %23 : vector<1x32xi32>
    %c16_i32 = arith.constant 16 : i32
    %25 = vector.broadcast %c16_i32 : i32 to vector<1x32xi32>
    %26 = arith.cmpi slt, %22, %25 : vector<1x32xi32>
    %27 = arith.andi %24, %26 : vector<1x32xi1>
    %c16_i32_25 = arith.constant 16 : i32
    %28 = vector.broadcast %c16_i32_25 : i32 to vector<1x32xi32>
    %29 = arith.cmpi sge, %22, %28 : vector<1x32xi32>
    %c32_i32 = arith.constant 32 : i32
    %30 = vector.broadcast %c32_i32 : i32 to vector<1x32xi32>
    %31 = arith.cmpi slt, %22, %30 : vector<1x32xi32>
    %32 = arith.andi %29, %31 : vector<1x32xi1>
    %33 = tpu.iota {dimensions = array<i32: 1>} : vector<1x48xi32>
    %c0_i32_26 = arith.constant 0 : i32
    %34 = vector.broadcast %c0_i32_26 : i32 to vector<1x48xi32>
    %35 = arith.cmpi sge, %33, %34 : vector<1x48xi32>
    %c24_i32 = arith.constant 24 : i32
    %36 = vector.broadcast %c24_i32 : i32 to vector<1x48xi32>
    %37 = arith.cmpi slt, %33, %36 : vector<1x48xi32>
    %38 = arith.andi %35, %37 : vector<1x48xi1>
    %c24_i32_27 = arith.constant 24 : i32
    %39 = vector.broadcast %c24_i32_27 : i32 to vector<1x48xi32>
    %40 = arith.cmpi sge, %33, %39 : vector<1x48xi32>
    %c48_i32 = arith.constant 48 : i32
    %41 = vector.broadcast %c48_i32 : i32 to vector<1x48xi32>
    %42 = arith.cmpi slt, %33, %41 : vector<1x48xi32>
    %43 = arith.andi %40, %42 : vector<1x48xi1>
    %44 = vector.extract_strided_slice %20 {offsets = [0, 0, 0], sizes = [1, 1, 32], strides = [1, 1, 1]} : vector<2x6x32xf32> to vector<1x1x32xf32>
    %45 = vector.shape_cast %44 : vector<1x1x32xf32> to vector<32xf32>
    %46 = vector.extract_strided_slice %20 {offsets = [0, 1, 0], sizes = [1, 1, 32], strides = [1, 1, 1]} : vector<2x6x32xf32> to vector<1x1x32xf32>
    %47 = vector.shape_cast %46 : vector<1x1x32xf32> to vector<32xf32>
    %cst_28 = arith.constant dense<0.000000e+00> : vector<2x24xf32>
    %48 = vector.multi_reduction <add>, %14, %cst_28 [2] : vector<2x24x32xf32> to vector<2x24xf32>
    %49 = vector.shape_cast %48 : vector<2x24xf32> to vector<2x24x1xf32>
    %cst_29 = arith.constant 3.200000e+01 : f32
    %50 = vector.broadcast %cst_29 : f32 to vector<2x24x1xf32>
    %51 = arith.divf %49, %50 : vector<2x24x1xf32>
    %52 = vector.broadcast %51 : vector<2x24x1xf32> to vector<2x24x32xf32>
    %53 = arith.subf %14, %52 : vector<2x24x32xf32>
    %54 = arith.mulf %53, %53 : vector<2x24x32xf32>
    %cst_30 = arith.constant dense<0.000000e+00> : vector<2x24xf32>
    %55 = vector.multi_reduction <add>, %54, %cst_30 [2] : vector<2x24x32xf32> to vector<2x24xf32>
    %56 = vector.shape_cast %55 : vector<2x24xf32> to vector<2x24x1xf32>
    %cst_31 = arith.constant 3.200000e+01 : f32
    %57 = vector.broadcast %cst_31 : f32 to vector<2x24x1xf32>
    %58 = arith.divf %56, %57 : vector<2x24x1xf32>
    %59 = vector.broadcast %51 : vector<2x24x1xf32> to vector<2x24x32xf32>
    %60 = arith.subf %14, %59 : vector<2x24x32xf32>
    %cst_32 = arith.constant 9.99999974E-6 : f32
    %61 = vector.broadcast %cst_32 : f32 to vector<2x24x1xf32>
    %62 = arith.addf %58, %61 : vector<2x24x1xf32>
    %63 = math.rsqrt %62 : vector<2x24x1xf32>
    %64 = vector.broadcast %63 : vector<2x24x1xf32> to vector<2x24x32xf32>
    %65 = arith.mulf %60, %64 : vector<2x24x32xf32>
    %66 = vector.shape_cast %45 : vector<32xf32> to vector<1x1x32xf32>
    %67 = vector.broadcast %66 : vector<1x1x32xf32> to vector<2x24x32xf32>
    %68 = arith.mulf %65, %67 : vector<2x24x32xf32>
    %69 = vector.shape_cast %47 : vector<32xf32> to vector<1x1x32xf32>
    %70 = vector.broadcast %69 : vector<1x1x32xf32> to vector<2x24x32xf32>
    %71 = arith.addf %68, %70 : vector<2x24x32xf32>
    %72 = vector.shape_cast %71 : vector<2x24x32xf32> to vector<48x32xf32>
    %73 = arith.truncf %72 : vector<48x32xf32> to vector<48x32xbf16>
    %74 = vector.extract_strided_slice %15 {offsets = [0, 0, 0], sizes = [1, 32, 96], strides = [1, 1, 1]} : vector<2x32x96xbf16> to vector<1x32x96xbf16>
    %75 = vector.shape_cast %74 : vector<1x32x96xbf16> to vector<32x96xbf16>
    %cst_33 = arith.constant dense<0.000000e+00> : vector<48x96xf32>
    %76 = tpu.matmul %73, %75, %cst_33 {dimension_numbers = #tpu.dot_dimension_numbers<[1], [0], [0], [1], [0, 0, 1, 1], [], []>} : vector<48x32xbf16>, vector<32x96xbf16>, vector<48x96xf32> -> vector<48x96xf32>
    %77 = vector.extract_strided_slice %16 {offsets = [0, 0], sizes = [1, 96], strides = [1, 1]} : vector<2x96xf32> to vector<1x96xf32>
    %78 = vector.shape_cast %77 : vector<1x96xf32> to vector<96xf32>
    %79 = vector.shape_cast %78 : vector<96xf32> to vector<1x96xf32>
    %80 = vector.broadcast %79 : vector<1x96xf32> to vector<48x96xf32>
    %81 = arith.addf %76, %80 : vector<48x96xf32>
    %82 = arith.truncf %81 : vector<48x96xf32> to vector<48x96xbf16>
    %83 = vector.extract_strided_slice %82 {offsets = [0, 0], sizes = [48, 32], strides = [1, 1]} : vector<48x96xbf16> to vector<48x32xbf16>
    %84 = vector.shape_cast %83 : vector<48x32xbf16> to vector<2x24x32xbf16>
    %85 = vector.extract_strided_slice %82 {offsets = [0, 32], sizes = [48, 32], strides = [1, 1]} : vector<48x96xbf16> to vector<48x32xbf16>
    %86 = vector.shape_cast %85 : vector<48x32xbf16> to vector<2x24x32xbf16>
    %87 = vector.extract_strided_slice %82 {offsets = [0, 64], sizes = [48, 32], strides = [1, 1]} : vector<48x96xbf16> to vector<48x32xbf16>
    %88 = vector.shape_cast %87 : vector<48x32xbf16> to vector<2x24x32xbf16>
    %cst_34 = arith.constant 0.000000e+00 : bf16
    %89 = vector.shape_cast %27 : vector<1x32xi1> to vector<1x1x32xi1>
    %90 = vector.broadcast %89 : vector<1x1x32xi1> to vector<2x24x32xi1>
    %91 = vector.broadcast %cst_34 : bf16 to vector<2x24x32xbf16>
    %92 = arith.select %90, %86, %91 : vector<2x24x32xi1>, vector<2x24x32xbf16>
    %cst_35 = arith.constant 0.000000e+00 : bf16
    %93 = vector.shape_cast %32 : vector<1x32xi1> to vector<1x1x32xi1>
    %94 = vector.broadcast %93 : vector<1x1x32xi1> to vector<2x24x32xi1>
    %95 = vector.broadcast %cst_35 : bf16 to vector<2x24x32xbf16>
    %96 = arith.select %94, %86, %95 : vector<2x24x32xi1>, vector<2x24x32xbf16>
    %97 = tpu.concatenate %92, %96 in 1 : vector<2x24x32xbf16>, vector<2x24x32xbf16> -> vector<2x48x32xbf16>
    %cst_36 = arith.constant 0.000000e+00 : bf16
    %98 = vector.shape_cast %27 : vector<1x32xi1> to vector<1x1x32xi1>
    %99 = vector.broadcast %98 : vector<1x1x32xi1> to vector<2x24x32xi1>
    %100 = vector.broadcast %cst_36 : bf16 to vector<2x24x32xbf16>
    %101 = arith.select %99, %88, %100 : vector<2x24x32xi1>, vector<2x24x32xbf16>
    %cst_37 = arith.constant 0.000000e+00 : bf16
    %102 = vector.shape_cast %32 : vector<1x32xi1> to vector<1x1x32xi1>
    %103 = vector.broadcast %102 : vector<1x1x32xi1> to vector<2x24x32xi1>
    %104 = vector.broadcast %cst_37 : bf16 to vector<2x24x32xbf16>
    %105 = arith.select %103, %88, %104 : vector<2x24x32xi1>, vector<2x24x32xbf16>
    %106 = tpu.concatenate %101, %105 in 1 : vector<2x24x32xbf16>, vector<2x24x32xbf16> -> vector<2x48x32xbf16>
    %cst_38 = arith.constant dense<0.000000e+00> : vector<2x24x48xf32>
    %107 = tpu.matmul %84, %97, %cst_38 {dimension_numbers = #tpu.dot_dimension_numbers<[2], [2], [1], [1], [0, 0, 0, 1, 1, 1], [0], [0]>} : vector<2x24x32xbf16>, vector<2x48x32xbf16>, vector<2x24x48xf32> -> vector<2x24x48xf32>
    %cst_39 = arith.constant -1.000000e+30 : f32
    %108 = vector.broadcast %cst_39 : f32 to vector<2x24x48xf32>
    %cst_40 = arith.constant -1.000000e+30 : f32
    %109 = vector.shape_cast %38 : vector<1x48xi1> to vector<1x1x48xi1>
    %110 = vector.broadcast %109 : vector<1x1x48xi1> to vector<2x24x48xi1>
    %111 = vector.broadcast %cst_40 : f32 to vector<2x24x48xf32>
    %112 = arith.select %110, %107, %111 : vector<2x24x48xi1>, vector<2x24x48xf32>
    %cst_41 = arith.constant dense<0xFF800000> : vector<2x24xf32>
    %113 = vector.multi_reduction <maximumf>, %112, %cst_41 [2] : vector<2x24x48xf32> to vector<2x24xf32>
    %114 = vector.shape_cast %113 : vector<2x24xf32> to vector<2x24x1xf32>
    %115 = vector.shape_cast %38 : vector<1x48xi1> to vector<1x1x48xi1>
    %116 = vector.broadcast %115 : vector<1x1x48xi1> to vector<2x24x48xi1>
    %117 = vector.shape_cast %114 : vector<2x24x1xf32> to vector<2x24x1xf32>
    %118 = vector.broadcast %117 : vector<2x24x1xf32> to vector<2x24x48xf32>
    %119 = arith.select %116, %118, %108 : vector<2x24x48xi1>, vector<2x24x48xf32>
    %cst_42 = arith.constant -1.000000e+30 : f32
    %120 = vector.shape_cast %43 : vector<1x48xi1> to vector<1x1x48xi1>
    %121 = vector.broadcast %120 : vector<1x1x48xi1> to vector<2x24x48xi1>
    %122 = vector.broadcast %cst_42 : f32 to vector<2x24x48xf32>
    %123 = arith.select %121, %107, %122 : vector<2x24x48xi1>, vector<2x24x48xf32>
    %cst_43 = arith.constant dense<0xFF800000> : vector<2x24xf32>
    %124 = vector.multi_reduction <maximumf>, %123, %cst_43 [2] : vector<2x24x48xf32> to vector<2x24xf32>
    %125 = vector.shape_cast %124 : vector<2x24xf32> to vector<2x24x1xf32>
    %126 = vector.shape_cast %43 : vector<1x48xi1> to vector<1x1x48xi1>
    %127 = vector.broadcast %126 : vector<1x1x48xi1> to vector<2x24x48xi1>
    %128 = vector.shape_cast %125 : vector<2x24x1xf32> to vector<2x24x1xf32>
    %129 = vector.broadcast %128 : vector<2x24x1xf32> to vector<2x24x48xf32>
    %130 = arith.select %127, %129, %119 : vector<2x24x48xi1>, vector<2x24x48xf32>
    %131 = arith.subf %107, %130 : vector<2x24x48xf32>
    %132 = math.exp %131 : vector<2x24x48xf32>
    %cst_44 = arith.constant 0.000000e+00 : f32
    %133 = vector.broadcast %cst_44 : f32 to vector<2x24x48xf32>
    %cst_45 = arith.constant 0.000000e+00 : f32
    %134 = vector.shape_cast %38 : vector<1x48xi1> to vector<1x1x48xi1>
    %135 = vector.broadcast %134 : vector<1x1x48xi1> to vector<2x24x48xi1>
    %136 = vector.broadcast %cst_45 : f32 to vector<2x24x48xf32>
    %137 = arith.select %135, %132, %136 : vector<2x24x48xi1>, vector<2x24x48xf32>
    %cst_46 = arith.constant dense<0.000000e+00> : vector<2x24xf32>
    %138 = vector.multi_reduction <add>, %137, %cst_46 [2] : vector<2x24x48xf32> to vector<2x24xf32>
    %139 = vector.shape_cast %138 : vector<2x24xf32> to vector<2x24x1xf32>
    %140 = tpu.reciprocal %139 {approx = true} : vector<2x24x1xf32> -> vector<2x24x1xf32>
    %141 = vector.shape_cast %38 : vector<1x48xi1> to vector<1x1x48xi1>
    %142 = vector.broadcast %141 : vector<1x1x48xi1> to vector<2x24x48xi1>
    %143 = vector.shape_cast %140 : vector<2x24x1xf32> to vector<2x24x1xf32>
    %144 = vector.broadcast %143 : vector<2x24x1xf32> to vector<2x24x48xf32>
    %145 = arith.select %142, %144, %133 : vector<2x24x48xi1>, vector<2x24x48xf32>
    %cst_47 = arith.constant 0.000000e+00 : f32
    %146 = vector.shape_cast %43 : vector<1x48xi1> to vector<1x1x48xi1>
    %147 = vector.broadcast %146 : vector<1x1x48xi1> to vector<2x24x48xi1>
    %148 = vector.broadcast %cst_47 : f32 to vector<2x24x48xf32>
    %149 = arith.select %147, %132, %148 : vector<2x24x48xi1>, vector<2x24x48xf32>
    %cst_48 = arith.constant dense<0.000000e+00> : vector<2x24xf32>
    %150 = vector.multi_reduction <add>, %149, %cst_48 [2] : vector<2x24x48xf32> to vector<2x24xf32>
    %151 = vector.shape_cast %150 : vector<2x24xf32> to vector<2x24x1xf32>
    %152 = tpu.reciprocal %151 {approx = true} : vector<2x24x1xf32> -> vector<2x24x1xf32>
    %153 = vector.shape_cast %43 : vector<1x48xi1> to vector<1x1x48xi1>
    %154 = vector.broadcast %153 : vector<1x1x48xi1> to vector<2x24x48xi1>
    %155 = vector.shape_cast %152 : vector<2x24x1xf32> to vector<2x24x1xf32>
    %156 = vector.broadcast %155 : vector<2x24x1xf32> to vector<2x24x48xf32>
    %157 = arith.select %154, %156, %145 : vector<2x24x48xi1>, vector<2x24x48xf32>
    %158 = arith.mulf %132, %157 : vector<2x24x48xf32>
    %159 = arith.truncf %158 : vector<2x24x48xf32> to vector<2x24x48xbf16>
    %cst_49 = arith.constant dense<0.000000e+00> : vector<2x24x32xf32>
    %160 = tpu.matmul %159, %106, %cst_49 {dimension_numbers = #tpu.dot_dimension_numbers<[2], [1], [1], [2], [0, 0, 0, 1, 1, 2], [0], [0]>} : vector<2x24x48xbf16>, vector<2x48x32xbf16>, vector<2x24x32xf32> -> vector<2x24x32xf32>
    %161 = vector.shape_cast %160 : vector<2x24x32xf32> to vector<48x32xf32>
    %162 = arith.truncf %161 : vector<48x32xf32> to vector<48x32xbf16>
    %163 = vector.extract_strided_slice %17 {offsets = [0, 0, 0], sizes = [1, 32, 32], strides = [1, 1, 1]} : vector<2x32x32xbf16> to vector<1x32x32xbf16>
    %164 = vector.shape_cast %163 : vector<1x32x32xbf16> to vector<32x32xbf16>
    %cst_50 = arith.constant dense<0.000000e+00> : vector<48x32xf32>
    %165 = tpu.matmul %162, %164, %cst_50 {dimension_numbers = #tpu.dot_dimension_numbers<[1], [0], [0], [1], [0, 0, 1, 1], [], []>} : vector<48x32xbf16>, vector<32x32xbf16>, vector<48x32xf32> -> vector<48x32xf32>
    %166 = vector.extract_strided_slice %20 {offsets = [0, 4, 0], sizes = [1, 1, 32], strides = [1, 1, 1]} : vector<2x6x32xf32> to vector<1x1x32xf32>
    %167 = vector.shape_cast %166 : vector<1x1x32xf32> to vector<32xf32>
    %168 = vector.shape_cast %167 : vector<32xf32> to vector<1x32xf32>
    %169 = vector.broadcast %168 : vector<1x32xf32> to vector<48x32xf32>
    %170 = arith.addf %165, %169 : vector<48x32xf32>
    %171 = vector.shape_cast %170 : vector<48x32xf32> to vector<2x24x32xf32>
    %172 = arith.addf %14, %171 : vector<2x24x32xf32>
    %173 = vector.extract_strided_slice %20 {offsets = [0, 2, 0], sizes = [1, 1, 32], strides = [1, 1, 1]} : vector<2x6x32xf32> to vector<1x1x32xf32>
    %174 = vector.shape_cast %173 : vector<1x1x32xf32> to vector<32xf32>
    %175 = vector.extract_strided_slice %20 {offsets = [0, 3, 0], sizes = [1, 1, 32], strides = [1, 1, 1]} : vector<2x6x32xf32> to vector<1x1x32xf32>
    %176 = vector.shape_cast %175 : vector<1x1x32xf32> to vector<32xf32>
    %cst_51 = arith.constant dense<0.000000e+00> : vector<2x24xf32>
    %177 = vector.multi_reduction <add>, %172, %cst_51 [2] : vector<2x24x32xf32> to vector<2x24xf32>
    %178 = vector.shape_cast %177 : vector<2x24xf32> to vector<2x24x1xf32>
    %cst_52 = arith.constant 3.200000e+01 : f32
    %179 = vector.broadcast %cst_52 : f32 to vector<2x24x1xf32>
    %180 = arith.divf %178, %179 : vector<2x24x1xf32>
    %181 = vector.broadcast %180 : vector<2x24x1xf32> to vector<2x24x32xf32>
    %182 = arith.subf %172, %181 : vector<2x24x32xf32>
    %183 = arith.mulf %182, %182 : vector<2x24x32xf32>
    %cst_53 = arith.constant dense<0.000000e+00> : vector<2x24xf32>
    %184 = vector.multi_reduction <add>, %183, %cst_53 [2] : vector<2x24x32xf32> to vector<2x24xf32>
    %185 = vector.shape_cast %184 : vector<2x24xf32> to vector<2x24x1xf32>
    %cst_54 = arith.constant 3.200000e+01 : f32
    %186 = vector.broadcast %cst_54 : f32 to vector<2x24x1xf32>
    %187 = arith.divf %185, %186 : vector<2x24x1xf32>
    %188 = vector.broadcast %180 : vector<2x24x1xf32> to vector<2x24x32xf32>
    %189 = arith.subf %172, %188 : vector<2x24x32xf32>
    %cst_55 = arith.constant 9.99999974E-6 : f32
    %190 = vector.broadcast %cst_55 : f32 to vector<2x24x1xf32>
    %191 = arith.addf %187, %190 : vector<2x24x1xf32>
    %192 = math.rsqrt %191 : vector<2x24x1xf32>
    %193 = vector.broadcast %192 : vector<2x24x1xf32> to vector<2x24x32xf32>
    %194 = arith.mulf %189, %193 : vector<2x24x32xf32>
    %195 = vector.shape_cast %174 : vector<32xf32> to vector<1x1x32xf32>
    %196 = vector.broadcast %195 : vector<1x1x32xf32> to vector<2x24x32xf32>
    %197 = arith.mulf %194, %196 : vector<2x24x32xf32>
    %198 = vector.shape_cast %176 : vector<32xf32> to vector<1x1x32xf32>
    %199 = vector.broadcast %198 : vector<1x1x32xf32> to vector<2x24x32xf32>
    %200 = arith.addf %197, %199 : vector<2x24x32xf32>
    %201 = vector.shape_cast %200 : vector<2x24x32xf32> to vector<48x32xf32>
    %202 = arith.truncf %201 : vector<48x32xf32> to vector<48x32xbf16>
    %203 = vector.extract_strided_slice %18 {offsets = [0, 0, 0], sizes = [1, 32, 128], strides = [1, 1, 1]} : vector<2x32x128xbf16> to vector<1x32x128xbf16>
    %204 = vector.shape_cast %203 : vector<1x32x128xbf16> to vector<32x128xbf16>
    %cst_56 = arith.constant dense<0.000000e+00> : vector<48x128xf32>
    %205 = tpu.matmul %202, %204, %cst_56 {dimension_numbers = #tpu.dot_dimension_numbers<[1], [0], [0], [1], [0, 0, 1, 1], [], []>} : vector<48x32xbf16>, vector<32x128xbf16>, vector<48x128xf32> -> vector<48x128xf32>
    %206 = vector.extract_strided_slice %21 {offsets = [0, 0], sizes = [1, 128], strides = [1, 1]} : vector<2x128xf32> to vector<1x128xf32>
    %207 = vector.shape_cast %206 : vector<1x128xf32> to vector<128xf32>
    %208 = vector.shape_cast %207 : vector<128xf32> to vector<1x128xf32>
    %209 = vector.broadcast %208 : vector<1x128xf32> to vector<48x128xf32>
    %210 = arith.addf %205, %209 : vector<48x128xf32>
    %211 = arith.mulf %210, %210 : vector<48x128xf32>
    %212 = arith.mulf %210, %211 : vector<48x128xf32>
    %cst_57 = arith.constant 4.471500e-02 : f32
    %213 = vector.broadcast %cst_57 : f32 to vector<48x128xf32>
    %214 = arith.mulf %213, %212 : vector<48x128xf32>
    %215 = arith.addf %210, %214 : vector<48x128xf32>
    %cst_58 = arith.constant 0.797884583 : f32
    %216 = vector.broadcast %cst_58 : f32 to vector<48x128xf32>
    %217 = arith.mulf %216, %215 : vector<48x128xf32>
    %218 = math.tanh %217 : vector<48x128xf32>
    %cst_59 = arith.constant 1.000000e+00 : f32
    %219 = vector.broadcast %cst_59 : f32 to vector<48x128xf32>
    %220 = arith.addf %219, %218 : vector<48x128xf32>
    %cst_60 = arith.constant 5.000000e-01 : f32
    %221 = vector.broadcast %cst_60 : f32 to vector<48x128xf32>
    %222 = arith.mulf %221, %220 : vector<48x128xf32>
    %223 = arith.mulf %210, %222 : vector<48x128xf32>
    %224 = arith.truncf %223 : vector<48x128xf32> to vector<48x128xbf16>
    %225 = vector.extract_strided_slice %19 {offsets = [0, 0, 0], sizes = [1, 128, 32], strides = [1, 1, 1]} : vector<2x128x32xbf16> to vector<1x128x32xbf16>
    %226 = vector.shape_cast %225 : vector<1x128x32xbf16> to vector<128x32xbf16>
    %cst_61 = arith.constant dense<0.000000e+00> : vector<48x32xf32>
    %227 = tpu.matmul %224, %226, %cst_61 {dimension_numbers = #tpu.dot_dimension_numbers<[1], [0], [0], [1], [0, 0, 1, 1], [], []>} : vector<48x128xbf16>, vector<128x32xbf16>, vector<48x32xf32> -> vector<48x32xf32>
    %228 = vector.extract_strided_slice %20 {offsets = [0, 5, 0], sizes = [1, 1, 32], strides = [1, 1, 1]} : vector<2x6x32xf32> to vector<1x1x32xf32>
    %229 = vector.shape_cast %228 : vector<1x1x32xf32> to vector<32xf32>
    %230 = vector.shape_cast %229 : vector<32xf32> to vector<1x32xf32>
    %231 = vector.broadcast %230 : vector<1x32xf32> to vector<48x32xf32>
    %232 = arith.addf %227, %231 : vector<48x32xf32>
    %233 = vector.shape_cast %232 : vector<48x32xf32> to vector<2x24x32xf32>
    %234 = arith.addf %172, %233 : vector<2x24x32xf32>
    %235 = vector.extract_strided_slice %20 {offsets = [1, 0, 0], sizes = [1, 1, 32], strides = [1, 1, 1]} : vector<2x6x32xf32> to vector<1x1x32xf32>
    %236 = vector.shape_cast %235 : vector<1x1x32xf32> to vector<32xf32>
    %237 = vector.extract_strided_slice %20 {offsets = [1, 1, 0], sizes = [1, 1, 32], strides = [1, 1, 1]} : vector<2x6x32xf32> to vector<1x1x32xf32>
    %238 = vector.shape_cast %237 : vector<1x1x32xf32> to vector<32xf32>
    %cst_62 = arith.constant dense<0.000000e+00> : vector<2x24xf32>
    %239 = vector.multi_reduction <add>, %234, %cst_62 [2] : vector<2x24x32xf32> to vector<2x24xf32>
    %240 = vector.shape_cast %239 : vector<2x24xf32> to vector<2x24x1xf32>
    %cst_63 = arith.constant 3.200000e+01 : f32
    %241 = vector.broadcast %cst_63 : f32 to vector<2x24x1xf32>
    %242 = arith.divf %240, %241 : vector<2x24x1xf32>
    %243 = vector.broadcast %242 : vector<2x24x1xf32> to vector<2x24x32xf32>
    %244 = arith.subf %234, %243 : vector<2x24x32xf32>
    %245 = arith.mulf %244, %244 : vector<2x24x32xf32>
    %cst_64 = arith.constant dense<0.000000e+00> : vector<2x24xf32>
    %246 = vector.multi_reduction <add>, %245, %cst_64 [2] : vector<2x24x32xf32> to vector<2x24xf32>
    %247 = vector.shape_cast %246 : vector<2x24xf32> to vector<2x24x1xf32>
    %cst_65 = arith.constant 3.200000e+01 : f32
    %248 = vector.broadcast %cst_65 : f32 to vector<2x24x1xf32>
    %249 = arith.divf %247, %248 : vector<2x24x1xf32>
    %250 = vector.broadcast %242 : vector<2x24x1xf32> to vector<2x24x32xf32>
    %251 = arith.subf %234, %250 : vector<2x24x32xf32>
    %cst_66 = arith.constant 9.99999974E-6 : f32
    %252 = vector.broadcast %cst_66 : f32 to vector<2x24x1xf32>
    %253 = arith.addf %249, %252 : vector<2x24x1xf32>
    %254 = math.rsqrt %253 : vector<2x24x1xf32>
    %255 = vector.broadcast %254 : vector<2x24x1xf32> to vector<2x24x32xf32>
    %256 = arith.mulf %251, %255 : vector<2x24x32xf32>
    %257 = vector.shape_cast %236 : vector<32xf32> to vector<1x1x32xf32>
    %258 = vector.broadcast %257 : vector<1x1x32xf32> to vector<2x24x32xf32>
    %259 = arith.mulf %256, %258 : vector<2x24x32xf32>
    %260 = vector.shape_cast %238 : vector<32xf32> to vector<1x1x32xf32>
    %261 = vector.broadcast %260 : vector<1x1x32xf32> to vector<2x24x32xf32>
    %262 = arith.addf %259, %261 : vector<2x24x32xf32>
    %263 = vector.shape_cast %262 : vector<2x24x32xf32> to vector<48x32xf32>
    %264 = arith.truncf %263 : vector<48x32xf32> to vector<48x32xbf16>
    %265 = vector.extract_strided_slice %15 {offsets = [1, 0, 0], sizes = [1, 32, 96], strides = [1, 1, 1]} : vector<2x32x96xbf16> to vector<1x32x96xbf16>
    %266 = vector.shape_cast %265 : vector<1x32x96xbf16> to vector<32x96xbf16>
    %cst_67 = arith.constant dense<0.000000e+00> : vector<48x96xf32>
    %267 = tpu.matmul %264, %266, %cst_67 {dimension_numbers = #tpu.dot_dimension_numbers<[1], [0], [0], [1], [0, 0, 1, 1], [], []>} : vector<48x32xbf16>, vector<32x96xbf16>, vector<48x96xf32> -> vector<48x96xf32>
    %268 = vector.extract_strided_slice %16 {offsets = [1, 0], sizes = [1, 96], strides = [1, 1]} : vector<2x96xf32> to vector<1x96xf32>
    %269 = vector.shape_cast %268 : vector<1x96xf32> to vector<96xf32>
    %270 = vector.shape_cast %269 : vector<96xf32> to vector<1x96xf32>
    %271 = vector.broadcast %270 : vector<1x96xf32> to vector<48x96xf32>
    %272 = arith.addf %267, %271 : vector<48x96xf32>
    %273 = arith.truncf %272 : vector<48x96xf32> to vector<48x96xbf16>
    %274 = vector.extract_strided_slice %273 {offsets = [0, 0], sizes = [48, 32], strides = [1, 1]} : vector<48x96xbf16> to vector<48x32xbf16>
    %275 = vector.shape_cast %274 : vector<48x32xbf16> to vector<2x24x32xbf16>
    %276 = vector.extract_strided_slice %273 {offsets = [0, 32], sizes = [48, 32], strides = [1, 1]} : vector<48x96xbf16> to vector<48x32xbf16>
    %277 = vector.shape_cast %276 : vector<48x32xbf16> to vector<2x24x32xbf16>
    %278 = vector.extract_strided_slice %273 {offsets = [0, 64], sizes = [48, 32], strides = [1, 1]} : vector<48x96xbf16> to vector<48x32xbf16>
    %279 = vector.shape_cast %278 : vector<48x32xbf16> to vector<2x24x32xbf16>
    %cst_68 = arith.constant 0.000000e+00 : bf16
    %280 = vector.shape_cast %27 : vector<1x32xi1> to vector<1x1x32xi1>
    %281 = vector.broadcast %280 : vector<1x1x32xi1> to vector<2x24x32xi1>
    %282 = vector.broadcast %cst_68 : bf16 to vector<2x24x32xbf16>
    %283 = arith.select %281, %277, %282 : vector<2x24x32xi1>, vector<2x24x32xbf16>
    %cst_69 = arith.constant 0.000000e+00 : bf16
    %284 = vector.shape_cast %32 : vector<1x32xi1> to vector<1x1x32xi1>
    %285 = vector.broadcast %284 : vector<1x1x32xi1> to vector<2x24x32xi1>
    %286 = vector.broadcast %cst_69 : bf16 to vector<2x24x32xbf16>
    %287 = arith.select %285, %277, %286 : vector<2x24x32xi1>, vector<2x24x32xbf16>
    %288 = tpu.concatenate %283, %287 in 1 : vector<2x24x32xbf16>, vector<2x24x32xbf16> -> vector<2x48x32xbf16>
    %cst_70 = arith.constant 0.000000e+00 : bf16
    %289 = vector.shape_cast %27 : vector<1x32xi1> to vector<1x1x32xi1>
    %290 = vector.broadcast %289 : vector<1x1x32xi1> to vector<2x24x32xi1>
    %291 = vector.broadcast %cst_70 : bf16 to vector<2x24x32xbf16>
    %292 = arith.select %290, %279, %291 : vector<2x24x32xi1>, vector<2x24x32xbf16>
    %cst_71 = arith.constant 0.000000e+00 : bf16
    %293 = vector.shape_cast %32 : vector<1x32xi1> to vector<1x1x32xi1>
    %294 = vector.broadcast %293 : vector<1x1x32xi1> to vector<2x24x32xi1>
    %295 = vector.broadcast %cst_71 : bf16 to vector<2x24x32xbf16>
    %296 = arith.select %294, %279, %295 : vector<2x24x32xi1>, vector<2x24x32xbf16>
    %297 = tpu.concatenate %292, %296 in 1 : vector<2x24x32xbf16>, vector<2x24x32xbf16> -> vector<2x48x32xbf16>
    %cst_72 = arith.constant dense<0.000000e+00> : vector<2x24x48xf32>
    %298 = tpu.matmul %275, %288, %cst_72 {dimension_numbers = #tpu.dot_dimension_numbers<[2], [2], [1], [1], [0, 0, 0, 1, 1, 1], [0], [0]>} : vector<2x24x32xbf16>, vector<2x48x32xbf16>, vector<2x24x48xf32> -> vector<2x24x48xf32>
    %cst_73 = arith.constant -1.000000e+30 : f32
    %299 = vector.broadcast %cst_73 : f32 to vector<2x24x48xf32>
    %cst_74 = arith.constant -1.000000e+30 : f32
    %300 = vector.shape_cast %38 : vector<1x48xi1> to vector<1x1x48xi1>
    %301 = vector.broadcast %300 : vector<1x1x48xi1> to vector<2x24x48xi1>
    %302 = vector.broadcast %cst_74 : f32 to vector<2x24x48xf32>
    %303 = arith.select %301, %298, %302 : vector<2x24x48xi1>, vector<2x24x48xf32>
    %cst_75 = arith.constant dense<0xFF800000> : vector<2x24xf32>
    %304 = vector.multi_reduction <maximumf>, %303, %cst_75 [2] : vector<2x24x48xf32> to vector<2x24xf32>
    %305 = vector.shape_cast %304 : vector<2x24xf32> to vector<2x24x1xf32>
    %306 = vector.shape_cast %38 : vector<1x48xi1> to vector<1x1x48xi1>
    %307 = vector.broadcast %306 : vector<1x1x48xi1> to vector<2x24x48xi1>
    %308 = vector.shape_cast %305 : vector<2x24x1xf32> to vector<2x24x1xf32>
    %309 = vector.broadcast %308 : vector<2x24x1xf32> to vector<2x24x48xf32>
    %310 = arith.select %307, %309, %299 : vector<2x24x48xi1>, vector<2x24x48xf32>
    %cst_76 = arith.constant -1.000000e+30 : f32
    %311 = vector.shape_cast %43 : vector<1x48xi1> to vector<1x1x48xi1>
    %312 = vector.broadcast %311 : vector<1x1x48xi1> to vector<2x24x48xi1>
    %313 = vector.broadcast %cst_76 : f32 to vector<2x24x48xf32>
    %314 = arith.select %312, %298, %313 : vector<2x24x48xi1>, vector<2x24x48xf32>
    %cst_77 = arith.constant dense<0xFF800000> : vector<2x24xf32>
    %315 = vector.multi_reduction <maximumf>, %314, %cst_77 [2] : vector<2x24x48xf32> to vector<2x24xf32>
    %316 = vector.shape_cast %315 : vector<2x24xf32> to vector<2x24x1xf32>
    %317 = vector.shape_cast %43 : vector<1x48xi1> to vector<1x1x48xi1>
    %318 = vector.broadcast %317 : vector<1x1x48xi1> to vector<2x24x48xi1>
    %319 = vector.shape_cast %316 : vector<2x24x1xf32> to vector<2x24x1xf32>
    %320 = vector.broadcast %319 : vector<2x24x1xf32> to vector<2x24x48xf32>
    %321 = arith.select %318, %320, %310 : vector<2x24x48xi1>, vector<2x24x48xf32>
    %322 = arith.subf %298, %321 : vector<2x24x48xf32>
    %323 = math.exp %322 : vector<2x24x48xf32>
    %cst_78 = arith.constant 0.000000e+00 : f32
    %324 = vector.broadcast %cst_78 : f32 to vector<2x24x48xf32>
    %cst_79 = arith.constant 0.000000e+00 : f32
    %325 = vector.shape_cast %38 : vector<1x48xi1> to vector<1x1x48xi1>
    %326 = vector.broadcast %325 : vector<1x1x48xi1> to vector<2x24x48xi1>
    %327 = vector.broadcast %cst_79 : f32 to vector<2x24x48xf32>
    %328 = arith.select %326, %323, %327 : vector<2x24x48xi1>, vector<2x24x48xf32>
    %cst_80 = arith.constant dense<0.000000e+00> : vector<2x24xf32>
    %329 = vector.multi_reduction <add>, %328, %cst_80 [2] : vector<2x24x48xf32> to vector<2x24xf32>
    %330 = vector.shape_cast %329 : vector<2x24xf32> to vector<2x24x1xf32>
    %331 = tpu.reciprocal %330 {approx = true} : vector<2x24x1xf32> -> vector<2x24x1xf32>
    %332 = vector.shape_cast %38 : vector<1x48xi1> to vector<1x1x48xi1>
    %333 = vector.broadcast %332 : vector<1x1x48xi1> to vector<2x24x48xi1>
    %334 = vector.shape_cast %331 : vector<2x24x1xf32> to vector<2x24x1xf32>
    %335 = vector.broadcast %334 : vector<2x24x1xf32> to vector<2x24x48xf32>
    %336 = arith.select %333, %335, %324 : vector<2x24x48xi1>, vector<2x24x48xf32>
    %cst_81 = arith.constant 0.000000e+00 : f32
    %337 = vector.shape_cast %43 : vector<1x48xi1> to vector<1x1x48xi1>
    %338 = vector.broadcast %337 : vector<1x1x48xi1> to vector<2x24x48xi1>
    %339 = vector.broadcast %cst_81 : f32 to vector<2x24x48xf32>
    %340 = arith.select %338, %323, %339 : vector<2x24x48xi1>, vector<2x24x48xf32>
    %cst_82 = arith.constant dense<0.000000e+00> : vector<2x24xf32>
    %341 = vector.multi_reduction <add>, %340, %cst_82 [2] : vector<2x24x48xf32> to vector<2x24xf32>
    %342 = vector.shape_cast %341 : vector<2x24xf32> to vector<2x24x1xf32>
    %343 = tpu.reciprocal %342 {approx = true} : vector<2x24x1xf32> -> vector<2x24x1xf32>
    %344 = vector.shape_cast %43 : vector<1x48xi1> to vector<1x1x48xi1>
    %345 = vector.broadcast %344 : vector<1x1x48xi1> to vector<2x24x48xi1>
    %346 = vector.shape_cast %343 : vector<2x24x1xf32> to vector<2x24x1xf32>
    %347 = vector.broadcast %346 : vector<2x24x1xf32> to vector<2x24x48xf32>
    %348 = arith.select %345, %347, %336 : vector<2x24x48xi1>, vector<2x24x48xf32>
    %349 = arith.mulf %323, %348 : vector<2x24x48xf32>
    %350 = arith.truncf %349 : vector<2x24x48xf32> to vector<2x24x48xbf16>
    %cst_83 = arith.constant dense<0.000000e+00> : vector<2x24x32xf32>
    %351 = tpu.matmul %350, %297, %cst_83 {dimension_numbers = #tpu.dot_dimension_numbers<[2], [1], [1], [2], [0, 0, 0, 1, 1, 2], [0], [0]>} : vector<2x24x48xbf16>, vector<2x48x32xbf16>, vector<2x24x32xf32> -> vector<2x24x32xf32>
    %352 = vector.shape_cast %351 : vector<2x24x32xf32> to vector<48x32xf32>
    %353 = arith.truncf %352 : vector<48x32xf32> to vector<48x32xbf16>
    %354 = vector.extract_strided_slice %17 {offsets = [1, 0, 0], sizes = [1, 32, 32], strides = [1, 1, 1]} : vector<2x32x32xbf16> to vector<1x32x32xbf16>
    %355 = vector.shape_cast %354 : vector<1x32x32xbf16> to vector<32x32xbf16>
    %cst_84 = arith.constant dense<0.000000e+00> : vector<48x32xf32>
    %356 = tpu.matmul %353, %355, %cst_84 {dimension_numbers = #tpu.dot_dimension_numbers<[1], [0], [0], [1], [0, 0, 1, 1], [], []>} : vector<48x32xbf16>, vector<32x32xbf16>, vector<48x32xf32> -> vector<48x32xf32>
    %357 = vector.extract_strided_slice %20 {offsets = [1, 4, 0], sizes = [1, 1, 32], strides = [1, 1, 1]} : vector<2x6x32xf32> to vector<1x1x32xf32>
    %358 = vector.shape_cast %357 : vector<1x1x32xf32> to vector<32xf32>
    %359 = vector.shape_cast %358 : vector<32xf32> to vector<1x32xf32>
    %360 = vector.broadcast %359 : vector<1x32xf32> to vector<48x32xf32>
    %361 = arith.addf %356, %360 : vector<48x32xf32>
    %362 = vector.shape_cast %361 : vector<48x32xf32> to vector<2x24x32xf32>
    %363 = arith.addf %234, %362 : vector<2x24x32xf32>
    %364 = vector.extract_strided_slice %20 {offsets = [1, 2, 0], sizes = [1, 1, 32], strides = [1, 1, 1]} : vector<2x6x32xf32> to vector<1x1x32xf32>
    %365 = vector.shape_cast %364 : vector<1x1x32xf32> to vector<32xf32>
    %366 = vector.extract_strided_slice %20 {offsets = [1, 3, 0], sizes = [1, 1, 32], strides = [1, 1, 1]} : vector<2x6x32xf32> to vector<1x1x32xf32>
    %367 = vector.shape_cast %366 : vector<1x1x32xf32> to vector<32xf32>
    %cst_85 = arith.constant dense<0.000000e+00> : vector<2x24xf32>
    %368 = vector.multi_reduction <add>, %363, %cst_85 [2] : vector<2x24x32xf32> to vector<2x24xf32>
    %369 = vector.shape_cast %368 : vector<2x24xf32> to vector<2x24x1xf32>
    %cst_86 = arith.constant 3.200000e+01 : f32
    %370 = vector.broadcast %cst_86 : f32 to vector<2x24x1xf32>
    %371 = arith.divf %369, %370 : vector<2x24x1xf32>
    %372 = vector.broadcast %371 : vector<2x24x1xf32> to vector<2x24x32xf32>
    %373 = arith.subf %363, %372 : vector<2x24x32xf32>
    %374 = arith.mulf %373, %373 : vector<2x24x32xf32>
    %cst_87 = arith.constant dense<0.000000e+00> : vector<2x24xf32>
    %375 = vector.multi_reduction <add>, %374, %cst_87 [2] : vector<2x24x32xf32> to vector<2x24xf32>
    %376 = vector.shape_cast %375 : vector<2x24xf32> to vector<2x24x1xf32>
    %cst_88 = arith.constant 3.200000e+01 : f32
    %377 = vector.broadcast %cst_88 : f32 to vector<2x24x1xf32>
    %378 = arith.divf %376, %377 : vector<2x24x1xf32>
    %379 = vector.broadcast %371 : vector<2x24x1xf32> to vector<2x24x32xf32>
    %380 = arith.subf %363, %379 : vector<2x24x32xf32>
    %cst_89 = arith.constant 9.99999974E-6 : f32
    %381 = vector.broadcast %cst_89 : f32 to vector<2x24x1xf32>
    %382 = arith.addf %378, %381 : vector<2x24x1xf32>
    %383 = math.rsqrt %382 : vector<2x24x1xf32>
    %384 = vector.broadcast %383 : vector<2x24x1xf32> to vector<2x24x32xf32>
    %385 = arith.mulf %380, %384 : vector<2x24x32xf32>
    %386 = vector.shape_cast %365 : vector<32xf32> to vector<1x1x32xf32>
    %387 = vector.broadcast %386 : vector<1x1x32xf32> to vector<2x24x32xf32>
    %388 = arith.mulf %385, %387 : vector<2x24x32xf32>
    %389 = vector.shape_cast %367 : vector<32xf32> to vector<1x1x32xf32>
    %390 = vector.broadcast %389 : vector<1x1x32xf32> to vector<2x24x32xf32>
    %391 = arith.addf %388, %390 : vector<2x24x32xf32>
    %392 = vector.shape_cast %391 : vector<2x24x32xf32> to vector<48x32xf32>
    %393 = arith.truncf %392 : vector<48x32xf32> to vector<48x32xbf16>
    %394 = vector.extract_strided_slice %18 {offsets = [1, 0, 0], sizes = [1, 32, 128], strides = [1, 1, 1]} : vector<2x32x128xbf16> to vector<1x32x128xbf16>
    %395 = vector.shape_cast %394 : vector<1x32x128xbf16> to vector<32x128xbf16>
    %cst_90 = arith.constant dense<0.000000e+00> : vector<48x128xf32>
    %396 = tpu.matmul %393, %395, %cst_90 {dimension_numbers = #tpu.dot_dimension_numbers<[1], [0], [0], [1], [0, 0, 1, 1], [], []>} : vector<48x32xbf16>, vector<32x128xbf16>, vector<48x128xf32> -> vector<48x128xf32>
    %397 = vector.extract_strided_slice %21 {offsets = [1, 0], sizes = [1, 128], strides = [1, 1]} : vector<2x128xf32> to vector<1x128xf32>
    %398 = vector.shape_cast %397 : vector<1x128xf32> to vector<128xf32>
    %399 = vector.shape_cast %398 : vector<128xf32> to vector<1x128xf32>
    %400 = vector.broadcast %399 : vector<1x128xf32> to vector<48x128xf32>
    %401 = arith.addf %396, %400 : vector<48x128xf32>
    %402 = arith.mulf %401, %401 : vector<48x128xf32>
    %403 = arith.mulf %401, %402 : vector<48x128xf32>
    %cst_91 = arith.constant 4.471500e-02 : f32
    %404 = vector.broadcast %cst_91 : f32 to vector<48x128xf32>
    %405 = arith.mulf %404, %403 : vector<48x128xf32>
    %406 = arith.addf %401, %405 : vector<48x128xf32>
    %cst_92 = arith.constant 0.797884583 : f32
    %407 = vector.broadcast %cst_92 : f32 to vector<48x128xf32>
    %408 = arith.mulf %407, %406 : vector<48x128xf32>
    %409 = math.tanh %408 : vector<48x128xf32>
    %cst_93 = arith.constant 1.000000e+00 : f32
    %410 = vector.broadcast %cst_93 : f32 to vector<48x128xf32>
    %411 = arith.addf %410, %409 : vector<48x128xf32>
    %cst_94 = arith.constant 5.000000e-01 : f32
    %412 = vector.broadcast %cst_94 : f32 to vector<48x128xf32>
    %413 = arith.mulf %412, %411 : vector<48x128xf32>
    %414 = arith.mulf %401, %413 : vector<48x128xf32>
    %415 = arith.truncf %414 : vector<48x128xf32> to vector<48x128xbf16>
    %416 = vector.extract_strided_slice %19 {offsets = [1, 0, 0], sizes = [1, 128, 32], strides = [1, 1, 1]} : vector<2x128x32xbf16> to vector<1x128x32xbf16>
    %417 = vector.shape_cast %416 : vector<1x128x32xbf16> to vector<128x32xbf16>
    %cst_95 = arith.constant dense<0.000000e+00> : vector<48x32xf32>
    %418 = tpu.matmul %415, %417, %cst_95 {dimension_numbers = #tpu.dot_dimension_numbers<[1], [0], [0], [1], [0, 0, 1, 1], [], []>} : vector<48x128xbf16>, vector<128x32xbf16>, vector<48x32xf32> -> vector<48x32xf32>
    %419 = vector.extract_strided_slice %20 {offsets = [1, 5, 0], sizes = [1, 1, 32], strides = [1, 1, 1]} : vector<2x6x32xf32> to vector<1x1x32xf32>
    %420 = vector.shape_cast %419 : vector<1x1x32xf32> to vector<32xf32>
    %421 = vector.shape_cast %420 : vector<32xf32> to vector<1x32xf32>
    %422 = vector.broadcast %421 : vector<1x32xf32> to vector<48x32xf32>
    %423 = arith.addf %418, %422 : vector<48x32xf32>
    %424 = vector.shape_cast %423 : vector<48x32xf32> to vector<2x24x32xf32>
    %425 = arith.addf %363, %424 : vector<2x24x32xf32>
    %426 = vector.extract_strided_slice %425 {offsets = [0, 0, 0], sizes = [2, 8, 32], strides = [1, 1, 1]} : vector<2x24x32xf32> to vector<2x8x32xf32>
    %427 = vector.shape_cast %426 : vector<2x8x32xf32> to vector<16x32xf32>
    %428 = arith.truncf %427 : vector<16x32xf32> to vector<16x32xbf16>
    %c0_96 = arith.constant 0 : index
    %c0_97 = arith.constant 0 : index
    %429 = vector.load %arg11[%c0_96, %c0_97] : memref<32x8xbf16, #tpu.memory_space<vmem>>, vector<32x8xbf16>
    %cst_98 = arith.constant dense<0.000000e+00> : vector<16x8xf32>
    %430 = tpu.matmul %428, %429, %cst_98 {dimension_numbers = #tpu.dot_dimension_numbers<[1], [0], [0], [1], [0, 0, 1, 1], [], []>} : vector<16x32xbf16>, vector<32x8xbf16>, vector<16x8xf32> -> vector<16x8xf32>
    %431 = vector.shape_cast %430 : vector<16x8xf32> to vector<2x8x8xf32>
    %c0_99 = arith.constant 0 : index
    %c0_100 = arith.constant 0 : index
    %c0_101 = arith.constant 0 : index
    %432 = vector.load %arg12[%c0_99, %c0_100, %c0_101] : memref<2x8x8xf32, #tpu.memory_space<vmem>>, vector<2x8x8xf32>
    tpu.vector_store %arg12[%c0_99, %c0_100, %c0_101], %431 {strides = array<i32>} : memref<2x8x8xf32, #tpu.memory_space<vmem>>, vector<2x8x8xf32>,
    return
  }
  func.func @transform_0(%arg0: i32) -> (i32, i32, i32) {
    %c0_i32 = arith.constant 0 : i32
    %c0_i32_0 = arith.constant 0 : i32
    %c0_i32_1 = arith.constant 0 : i32
    return %arg0, %c0_i32, %c0_i32_0 : i32, i32, i32
  }
  func.func @transform_1(%arg0: i32) -> (i32, i32) {
    %c0_i32 = arith.constant 0 : i32
    %c0_i32_0 = arith.constant 0 : i32
    %c0_i32_1 = arith.constant 0 : i32
    return %c0_i32, %c0_i32_0 : i32, i32
  }
  func.func @transform_2(%arg0: i32) -> (i32, i32) {
    %c0_i32 = arith.constant 0 : i32
    %c0_i32_0 = arith.constant 0 : i32
    %c0_i32_1 = arith.constant 0 : i32
    return %c0_i32, %c0_i32_0 : i32, i32
  }
  func.func @transform_3(%arg0: i32) -> (i32, i32, i32) {
    %c0_i32 = arith.constant 0 : i32
    %c0_i32_0 = arith.constant 0 : i32
    %c0_i32_1 = arith.constant 0 : i32
    %c0_i32_2 = arith.constant 0 : i32
    return %c0_i32, %c0_i32_0, %c0_i32_1 : i32, i32, i32
  }
  func.func @transform_4(%arg0: i32) -> (i32, i32) {
    %c0_i32 = arith.constant 0 : i32
    %c0_i32_0 = arith.constant 0 : i32
    %c0_i32_1 = arith.constant 0 : i32
    return %c0_i32, %c0_i32_0 : i32, i32
  }
  func.func @transform_5(%arg0: i32) -> (i32, i32, i32) {
    %c0_i32 = arith.constant 0 : i32
    %c0_i32_0 = arith.constant 0 : i32
    %c0_i32_1 = arith.constant 0 : i32
    %c0_i32_2 = arith.constant 0 : i32
    return %c0_i32, %c0_i32_0, %c0_i32_1 : i32, i32, i32
  }
  func.func @transform_6(%arg0: i32) -> (i32, i32, i32) {
    %c0_i32 = arith.constant 0 : i32
    %c0_i32_0 = arith.constant 0 : i32
    %c0_i32_1 = arith.constant 0 : i32
    %c0_i32_2 = arith.constant 0 : i32
    return %c0_i32, %c0_i32_0, %c0_i32_1 : i32, i32, i32
  }
  func.func @transform_7(%arg0: i32) -> (i32, i32, i32) {
    %c0_i32 = arith.constant 0 : i32
    %c0_i32_0 = arith.constant 0 : i32
    %c0_i32_1 = arith.constant 0 : i32
    %c0_i32_2 = arith.constant 0 : i32
    return %c0_i32, %c0_i32_0, %c0_i32_1 : i32, i32, i32
  }
  func.func @transform_8(%arg0: i32) -> (i32, i32, i32) {
    %c0_i32 = arith.constant 0 : i32
    %c0_i32_0 = arith.constant 0 : i32
    %c0_i32_1 = arith.constant 0 : i32
    %c0_i32_2 = arith.constant 0 : i32
    return %c0_i32, %c0_i32_0, %c0_i32_1 : i32, i32, i32
  }
  func.func @transform_9(%arg0: i32) -> (i32, i32) {
    %c0_i32 = arith.constant 0 : i32
    %c0_i32_0 = arith.constant 0 : i32
    %c0_i32_1 = arith.constant 0 : i32
    return %c0_i32, %c0_i32_0 : i32, i32
  }
  func.func @transform_10(%arg0: i32) -> (i32, i32) {
    %c0_i32 = arith.constant 0 : i32
    %c0_i32_0 = arith.constant 0 : i32
    %c0_i32_1 = arith.constant 0 : i32
    return %c0_i32, %c0_i32_0 : i32, i32
  }
  func.func @transform_11(%arg0: i32) -> (i32, i32, i32) {
    %c0_i32 = arith.constant 0 : i32
    %c0_i32_0 = arith.constant 0 : i32
    %c0_i32_1 = arith.constant 0 : i32
    return %arg0, %c0_i32, %c0_i32_0 : i32, i32, i32
  }
}

</mosaic_0001>

<llo_original>
// kernel: tpu_custom_call.1
$region0: #{tpu_custom_call.1}
  #allocation0 [shape = 'u32[]', space=smem, size = 0x4, offset = 0x4, fixed_abs, tag = 'smem constant byte address 0x4 - core index']
  #allocation1 [shape = 'u32[144,128]{1,0:T(1,128)}', space=vmem, size = 0x12000, scoped, tag = 'internal scratch']
  %s0 = inlined_call_operand.vmem [shape: bf16[2,16,64], index: 0, kind: input, shape index: {}]
  %s1 = inlined_call_operand.vmem [shape: bf16[64,32], index: 1, kind: input, shape index: {}]
  %s2 = inlined_call_operand.vmem [shape: f32[24,32], index: 2, kind: input, shape index: {}]
  %s3 = inlined_call_operand.vmem [shape: bf16[2,32,96], index: 3, kind: input, shape index: {}]
  %s4 = inlined_call_operand.vmem [shape: f32[2,96], index: 4, kind: input, shape index: {}]
  %s5 = inlined_call_operand.vmem [shape: bf16[2,32,32], index: 5, kind: input, shape index: {}]
  %s6 = inlined_call_operand.vmem [shape: bf16[2,32,128], index: 6, kind: input, shape index: {}]
  %s7 = inlined_call_operand.vmem [shape: bf16[2,128,32], index: 7, kind: input, shape index: {}]
  %s8 = inlined_call_operand.vmem [shape: f32[2,6,32], index: 8, kind: input, shape index: {}]
  %s9 = inlined_call_operand.vmem [shape: f32[2,128], index: 9, kind: input, shape index: {}]
  %s10 = inlined_call_operand.vmem [shape: bf16[32,8], index: 10, kind: input, shape index: {}]
  %s11 = inlined_call_operand.hbm [shape: f32[2,8,8], index: 11, kind: output, shape index: {}]
  %s12 = sld [smem:[#allocation0]]
  $region54: #{tpu_custom_call.1} parent=0
    _
  %s14 = ssub.s32 1, %s12
  %s15 = scalar_select 0, %s14, %s12
  $region1: #{tpu_custom_call.1} parent=0
    #allocation2 [shape = 'u8[8192]{0}', space=vmem, size = 0x2000, scoped, tag = 'output window, operand 0, single buffered']
    #allocation3 [shape = 's32[1]{0}', space=sflag, size = 0x4, scoped, tag = 'scoped memory for tpu_custom_call.1']
    %16 = vsyncpa [#allocation3], 0
    // Predicated region
    $region2: #{tpu_custom_call.1} parent=1 // pred_check
      _
    $region3: #{tpu_custom_call.1} parent=1 // pred_check_branch
      %18 = sbr.rel (0) target = $region5
    $region4: #{tpu_custom_call.1} parent=1 // pred_region
      _
    $region5: #{tpu_custom_call.1} parent=1 // pred_fallthru
      _
    // Predicated region
    $region6: #{tpu_custom_call.1} parent=1 // pred_check
      _
    $region7: #{tpu_custom_call.1} parent=1 // pred_check_branch
      %20 = sbr.rel (0) target = $region9
    $region8: #{tpu_custom_call.1} parent=1 // pred_region
      _
    $region9: #{tpu_custom_call.1} parent=1 // pred_fallthru
      _
    // Predicated region
    $region10: #{tpu_custom_call.1} parent=1 // pred_check
      _
    $region11: #{tpu_custom_call.1} parent=1 // pred_check_branch
      %22 = sbr.rel (0) target = $region13
    $region12: #{tpu_custom_call.1} parent=1 // pred_region
      _
    $region13: #{tpu_custom_call.1} parent=1 // pred_fallthru
      _
    // Predicated region
    $region14: #{tpu_custom_call.1} parent=1 // pred_check
      _
    $region15: #{tpu_custom_call.1} parent=1 // pred_check_branch
      %24 = sbr.rel (0) target = $region17
    $region16: #{tpu_custom_call.1} parent=1 // pred_region
      _
    $region17: #{tpu_custom_call.1} parent=1 // pred_fallthru
      _
    // Predicated region
    $region18: #{tpu_custom_call.1} parent=1 // pred_check
      _
    $region19: #{tpu_custom_call.1} parent=1 // pred_check_branch
      %26 = sbr.rel (0) target = $region21
    $region20: #{tpu_custom_call.1} parent=1 // pred_region
      _
    $region21: #{tpu_custom_call.1} parent=1 // pred_fallthru
      _
    // Predicated region
    $region22: #{tpu_custom_call.1} parent=1 // pred_check
      _
    $region23: #{tpu_custom_call.1} parent=1 // pred_check_branch
      %28 = sbr.rel (0) target = $region25
    $region24: #{tpu_custom_call.1} parent=1 // pred_region
      _
    $region25: #{tpu_custom_call.1} parent=1 // pred_fallthru
      _
    // Predicated region
    $region26: #{tpu_custom_call.1} parent=1 // pred_check
      _
    $region27: #{tpu_custom_call.1} parent=1 // pred_check_branch
      %30 = sbr.rel (0) target = $region29
    $region28: #{tpu_custom_call.1} parent=1 // pred_region
      _
    $region29: #{tpu_custom_call.1} parent=1 // pred_fallthru
      _
    // Predicated region
    $region30: #{tpu_custom_call.1} parent=1 // pred_check
      _
    $region31: #{tpu_custom_call.1} parent=1 // pred_check_branch
      %32 = sbr.rel (0) target = $region33
    $region32: #{tpu_custom_call.1} parent=1 // pred_region
      _
    $region33: #{tpu_custom_call.1} parent=1 // pred_fallthru
      _
    // Predicated region
    $region34: #{tpu_custom_call.1} parent=1 // pred_check
      _
    $region35: #{tpu_custom_call.1} parent=1 // pred_check_branch
      %34 = sbr.rel (0) target = $region37
    $region36: #{tpu_custom_call.1} parent=1 // pred_region
      _
    $region37: #{tpu_custom_call.1} parent=1 // pred_fallthru
      _
    // Predicated region
    $region38: #{tpu_custom_call.1} parent=1 // pred_check
      _
    $region39: #{tpu_custom_call.1} parent=1 // pred_check_branch
      %36 = sbr.rel (0) target = $region41
    $region40: #{tpu_custom_call.1} parent=1 // pred_region
      _
    $region41: #{tpu_custom_call.1} parent=1 // pred_fallthru
      _
    // Predicated region
    $region42: #{tpu_custom_call.1} parent=1 // pred_check
      _
    $region43: #{tpu_custom_call.1} parent=1 // pred_check_branch
      %38 = sbr.rel (0) target = $region45
    $region44: #{tpu_custom_call.1} parent=1 // pred_region
      _
    $region45: #{tpu_custom_call.1} parent=1 // pred_fallthru
      _
    %v42 = vld [vmem:[%s0] sm:$0xf]
    %v43 = vld [vmem:[%s0 + $0x4] sm:$0xf]
    %v44 = vld [vmem:[%s0 + $0x8] sm:$0xf]
    %v45 = vld [vmem:[%s0 + $0xc] sm:$0xf]
    %v46 = vld [vmem:[%s1] sm:$0xf]
    %v47 = vld [vmem:[%s1 + $0x4] sm:$0xf]
    %v48 = vld [vmem:[%s1 + $0x8] sm:$0xf]
    %v49 = vld [vmem:[%s1 + $0xc] sm:$0xf]
    %v50 = vld [vmem:[%s1 + $0x10] sm:$0xf]
    %v51 = vld [vmem:[%s1 + $0x14] sm:$0xf]
    %v52 = vld [vmem:[%s1 + $0x18] sm:$0xf]
    %v53 = vld [vmem:[%s1 + $0x1c] sm:$0xf]
    %v58 = vunpack.c.l.b16 %v42
    %v59 = vunpack.c.l.b16 %v43
    %v60 = vunpack.c.l.b16 %v44
    %v61 = vunpack.c.l.b16 %v45
    %v62 = vpack.c.b16 %v59, %v58
    %v63 = vpack.c.b16 %v61, %v60
    %v72 = vunpack.c.l.b16 %v46
    %v73 = vunpack.c.l.b16 %v47
    %v74 = vunpack.c.l.b16 %v48
    %v75 = vunpack.c.l.b16 %v49
    %v76 = vunpack.c.l.b16 %v50
    %v77 = vunpack.c.l.b16 %v51
    %v78 = vunpack.c.l.b16 %v52
    %v79 = vunpack.c.l.b16 %v53
    %v80 = vpack.c.b16 %v73, %v72
    %v81 = vpack.c.b16 %v75, %v74
    %v82 = vpack.c.b16 %v77, %v76
    %v83 = vpack.c.b16 %v79, %v78
    %vm88 = vcmask 523264
    %v90 = vsel %vm88, %v62, 0
    %v93 = vsel %vm88, %v63, 0
    %95 = vmatprep.subr.bf16.mxu0 0
    %96 = vmatpush1.bf16.msra.mxu0 %v80
    %97 = vmatprep.subr.bf16.mxu0 0
    %98 = vmatpush1.bf16.msra.mxu0 %v81
    %99 = vmatprep.subr.bf16.mxu0 0
    %100 = vmatpush1.bf16.msra.mxu0 %v82
    %101 = vmatprep.subr.bf16.mxu0 0
    %102 = vmatpush1.bf16.msra.mxu0 %v83
    %103 = vmatprep.subr.bf16.mxu0 0
    %104 = vmatpush1.bf16.msra.mxu0 0
    %105 = vmatprep.subr.bf16.mxu0 0
    %106 = vmatpush1.bf16.msra.mxu0 0
    %107 = vmatprep.subr.bf16.mxu0 0
    %108 = vmatpush1.bf16.msra.mxu0 0
    %109 = vmatprep.subr.bf16.mxu0 0
    %110 = vmatpush1.bf16.msra.mxu0 0
    %111 = vmatprep.subr.bf16.mxu0 0
    %112 = vmatpush1.bf16.msra.mxu0 0
    %113 = vmatprep.subr.bf16.mxu0 0
    %114 = vmatpush1.bf16.msra.mxu0 0
    %115 = vmatprep.subr.bf16.mxu0 0
    %116 = vmatpush1.bf16.msra.mxu0 0
    %117 = vmatprep.subr.bf16.mxu0 0
    %118 = vmatpush1.bf16.msra.mxu0 0
    %119 = vmatprep.subr.bf16.mxu0 0
    %120 = vmatpush1.bf16.msra.mxu0 0
    %121 = vmatprep.subr.bf16.mxu0 0
    %122 = vmatpush1.bf16.msra.mxu0 0
    %123 = vmatprep.subr.bf16.mxu0 0
    %124 = vmatpush1.bf16.msra.mxu0 0
    %125 = vmatprep.subr.bf16.mxu0 0
    %126 = vmatpush1.bf16.msra.mxu0 0
    %127 = vmatprep.mubr.bf16.mxu0 0
    %128 = vmatmul.mubr.bf16.gmra.mrb[0].mxu0 %v90
    %v129 = vpop.f32.mrb[0].mxu0
    %v130 = vadd.f32 0.0, %v129
    %v131 = vpop.f32.mrb[0].mxu0
    %v132 = vpop.f32.mrb[0].mxu0
    %v133 = vadd.f32 0.0, %v132
    %v134 = vpop.f32.mrb[0].mxu0
    %135 = vmatprep.mubr.bf16.mxu0 0
    %136 = vmatmul.mubr.bf16.gmra.mrb[0].mxu0 %v93
    %v137 = vpop.f32.mrb[0].mxu0
    %v138 = vadd.f32 0.0, %v137
    %v139 = vpop.f32.mrb[0].mxu0
    %v140 = vpop.f32.mrb[0].mxu0
    %v141 = vadd.f32 0.0, %v140
    %v142 = vpop.f32.mrb[0].mxu0
    %143 = vdwg.mxu0
    %v144 = vld [vmem:[%s2] sm:$0xff]
    %v145 = vld [vmem:[%s2 + $0x8] sm:$0xff]
    %v146 = vld [vmem:[%s2 + $0x10] sm:$0xff]
    %v147 = vadd.f32 %v130, %v145
    %v148 = vadd.f32 %v133, %v146
    %v149 = vadd.f32 %v138, %v145
    %v150 = vadd.f32 %v141, %v146
    %v151 = vld [vmem:[%s3] sm:$0xf]
    %v152 = vld [vmem:[%s3 + $0x4] sm:$0xf]
    %v153 = vld [vmem:[%s3 + $0x8] sm:$0xf]
    %v154 = vld [vmem:[%s3 + $0xc] sm:$0xf]
    %v155 = vld [vmem:[%s3 + $0x10] sm:$0xf]
    %v156 = vld [vmem:[%s3 + $0x14] sm:$0xf]
    %v157 = vld [vmem:[%s3 + $0x18] sm:$0xf]
    %v158 = vld [vmem:[%s3 + $0x1c] sm:$0xf]
    %v159 = vld [vmem:[%s4] sm:$0x3]
    %v160 = vld [vmem:[%s5] sm:$0xf]
    %v161 = vld [vmem:[%s5 + $0x4] sm:$0xf]
    %v162 = vld [vmem:[%s5 + $0x8] sm:$0xf]
    %v163 = vld [vmem:[%s5 + $0xc] sm:$0xf]
    %v164 = vld [vmem:[%s5 + $0x10] sm:$0xf]
    %v165 = vld [vmem:[%s5 + $0x14] sm:$0xf]
    %v166 = vld [vmem:[%s5 + $0x18] sm:$0xf]
    %v167 = vld [vmem:[%s5 + $0x1c] sm:$0xf]
    %v168 = vld [vmem:[%s6] sm:$0xf]
    %v169 = vld [vmem:[%s6 + $0x4] sm:$0xf]
    %v170 = vld [vmem:[%s6 + $0x8] sm:$0xf]
    %v171 = vld [vmem:[%s6 + $0xc] sm:$0xf]
    %v172 = vld [vmem:[%s6 + $0x10] sm:$0xf]
    %v173 = vld [vmem:[%s6 + $0x14] sm:$0xf]
    %v174 = vld [vmem:[%s6 + $0x18] sm:$0xf]
    %v175 = vld [vmem:[%s6 + $0x1c] sm:$0xf]
    %v176 = vld [vmem:[%s7] sm:$0xf]
    %v177 = vld [vmem:[%s7 + $0x4] sm:$0xf]
    %v178 = vld [vmem:[%s7 + $0x8] sm:$0xf]
    %v179 = vld [vmem:[%s7 + $0xc] sm:$0xf]
    %v180 = vld [vmem:[%s7 + $0x10] sm:$0xf]
    %v181 = vld [vmem:[%s7 + $0x14] sm:$0xf]
    %v182 = vld [vmem:[%s7 + $0x18] sm:$0xf]
    %v183 = vld [vmem:[%s7 + $0x1c] sm:$0xf]
    %v184 = vld [vmem:[%s7 + $0x20] sm:$0xf]
    %v185 = vld [vmem:[%s7 + $0x24] sm:$0xf]
    %v186 = vld [vmem:[%s7 + $0x28] sm:$0xf]
    %v187 = vld [vmem:[%s7 + $0x2c] sm:$0xf]
    %v188 = vld [vmem:[%s7 + $0x30] sm:$0xf]
    %v189 = vld [vmem:[%s7 + $0x34] sm:$0xf]
    %v190 = vld [vmem:[%s7 + $0x38] sm:$0xf]
    %v191 = vld [vmem:[%s7 + $0x3c] sm:$0xf]
    %v192 = vld [vmem:[%s7 + $0x40] sm:$0xf]
    %v193 = vld [vmem:[%s7 + $0x44] sm:$0xf]
    %v194 = vld [vmem:[%s7 + $0x48] sm:$0xf]
    %v195 = vld [vmem:[%s7 + $0x4c] sm:$0xf]
    %v196 = vld [vmem:[%s7 + $0x50] sm:$0xf]
    %v197 = vld [vmem:[%s7 + $0x54] sm:$0xf]
    %v198 = vld [vmem:[%s7 + $0x58] sm:$0xf]
    %v199 = vld [vmem:[%s7 + $0x5c] sm:$0xf]
    %v200 = vld [vmem:[%s7 + $0x60] sm:$0xf]
    %v201 = vld [vmem:[%s7 + $0x64] sm:$0xf]
    %v202 = vld [vmem:[%s7 + $0x68] sm:$0xf]
    %v203 = vld [vmem:[%s7 + $0x6c] sm:$0xf]
    %v204 = vld [vmem:[%s7 + $0x70] sm:$0xf]
    %v205 = vld [vmem:[%s7 + $0x74] sm:$0xf]
    %v206 = vld [vmem:[%s7 + $0x78] sm:$0xf]
    %v207 = vld [vmem:[%s7 + $0x7c] sm:$0xf]
    %v208 = vld [vmem:[%s8] sm:$0x3f]
    %v209 = vld [vmem:[%s8 + $0x8] sm:$0x3f]
    %v210 = vld [vmem:[%s9] sm:$0x3]
    %v211 = vlaneseq
    %v212 = vand.u32 %v211, 127
    %vm213 = vcmp.ge.s32.totalorder %v212, 0
    %vm214 = vcmp.lt.s32.totalorder %v212, 16
    %vm215 = vmand %vm213, %vm214
    %vm216 = vcmp.ge.s32.totalorder %v212, 16
    %vm217 = vcmp.lt.s32.totalorder %v212, 32
    %vm218 = vmand %vm216, %vm217
    %vm219 = vcmp.lt.s32.totalorder %v212, 24
    %vm220 = vmand %vm213, %vm219
    %vm221 = vcmp.ge.s32.totalorder %v212, 24
    %vm222 = vcmp.lt.s32.totalorder %v212, 48
    %vm223 = vmand %vm221, %vm222
    %vm224 = vcmask 261120
    %v225 = vsel %vm224, %v144, 0.0
    %226 = vadd.xlane.f32.xlu0 %v225
    %v227 = vpop.xlane.xlu0 %226
    %v228 = vsel %vm224, %v147, 0.0
    %229 = vadd.xlane.f32.xlu0 %v228
    %v230 = vpop.xlane.xlu0 %229
    %v231 = vsel %vm224, %v148, 0.0
    %232 = vadd.xlane.f32.xlu0 %v231
    %v233 = vpop.xlane.xlu0 %232
    %v234 = vsel %vm224, %v149, 0.0
    %235 = vadd.xlane.f32.xlu0 %v234
    %v236 = vpop.xlane.xlu0 %235
    %v237 = vsel %vm224, %v150, 0.0
    %238 = vadd.xlane.f32.xlu0 %v237
    %v239 = vpop.xlane.xlu0 %238
    %v240 = vrcp.pop 32.0
    %v241 = vmul.f32 %v227, %v240
    %v242 = vmul.f32 %v230, %v240
    %v243 = vmul.f32 %v233, %v240
    %v244 = vmul.f32 %v236, %v240
    %v245 = vmul.f32 %v239, %v240
    %v246 = vsub.f32 %v144, %v241
    %v247 = vsub.f32 %v147, %v242
    %v248 = vsub.f32 %v148, %v243
    %v249 = vsub.f32 %v149, %v244
    %v250 = vsub.f32 %v150, %v245
    %v251 = vmul.f32 %v246, %v246
    %v252 = vmul.f32 %v247, %v247
    %v253 = vmul.f32 %v248, %v248
    %v254 = vmul.f32 %v249, %v249
    %v255 = vmul.f32 %v250, %v250
    %v256 = vsel %vm224, %v251, 0.0
    %257 = vadd.xlane.f32.xlu0 %v256
    %v258 = vpop.xlane.xlu0 %257
    %v259 = vsel %vm224, %v252, 0.0
    %260 = vadd.xlane.f32.xlu0 %v259
    %v261 = vpop.xlane.xlu0 %260
    %v262 = vsel %vm224, %v253, 0.0
    %263 = vadd.xlane.f32.xlu0 %v262
    %v264 = vpop.xlane.xlu0 %263
    %v265 = vsel %vm224, %v254, 0.0
    %266 = vadd.xlane.f32.xlu0 %v265
    %v267 = vpop.xlane.xlu0 %266
    %v268 = vsel %vm224, %v255, 0.0
    %269 = vadd.xlane.f32.xlu0 %v268
    %v270 = vpop.xlane.xlu0 %269
    %v271 = vmul.f32 %v258, %v240
    %v272 = vmul.f32 %v261, %v240
    %v273 = vmul.f32 %v264, %v240
    %v274 = vmul.f32 %v267, %v240
    %v275 = vmul.f32 %v270, %v240
    %v276 = vadd.f32 %v271, 1e-05
    %v277 = vadd.f32 %v272, 1e-05
    %v278 = vadd.f32 %v273, 1e-05
    %v279 = vadd.f32 %v274, 1e-05
    %v280 = vadd.f32 %v275, 1e-05
    %v281 = vrsqrt.pop %v276
    %v282 = vrsqrt.pop %v277
    %v283 = vrsqrt.pop %v278
    %v284 = vrsqrt.pop %v279
    %v285 = vrsqrt.pop %v280
    %v286 = vmul.f32 %v246, %v281
    %v287 = vmul.f32 %v247, %v282
    %v288 = vmul.f32 %v248, %v283
    %v289 = vmul.f32 %v249, %v284
    %v290 = vmul.f32 %v250, %v285
    %v291 = vlaneseq
    %v292 = vshrl.u32 %v291, 7
    %v293 = vsub.s32 0, %v292
    %v294 = vrot.slane %v208, %v293
    %v295 = vmul.f32 %v286, %v294
    %v296 = vmul.f32 %v287, %v294
    %v297 = vmul.f32 %v288, %v294
    %v298 = vmul.f32 %v289, %v294
    %v299 = vmul.f32 %v290, %v294
    %v300 = vlaneseq
    %v301 = vshrl.u32 %v300, 7
    %v302 = vsub.s32 1, %v301
    %v303 = vrot.slane %v208, %v302
    %v304 = vadd.f32 %v295, %v303
    %v305 = vadd.f32 %v296, %v303
    %v306 = vadd.f32 %v297, %v303
    %v307 = vadd.f32 %v298, %v303
    %v308 = vadd.f32 %v299, %v303
    %v309 = vpack.c.bf16 %v305, %v304
    %v310 = vpack.c.bf16 %v304, %v306
    %v311 = vpack.c.bf16 %v308, %v307
    %v312 = vlaneseq
    %v313 = vshrl.u32 %v312, 7
    %v314 = vsub.s32 0, %v313
    %v315 = vrot.slane %v159, %v314
    %v320 = vunpack.c.l.b16 %v151
    %v321 = vunpack.c.l.b16 %v152
    %v322 = vunpack.c.l.b16 %v153
    %v323 = vunpack.c.l.b16 %v154
    %v324 = vpack.c.b16 %v321, %v320
    %v325 = vpack.c.b16 %v323, %v322
    %v329 = vsel %vm224, %v309, 0
    %v332 = vsel %vm224, %v310, 0
    %v335 = vsel %vm224, %v311, 0
    %337 = vmatprep.subr.bf16.mxu0 0
    %338 = vmatpush1.bf16.msra.mxu0 %v324
    %339 = vmatprep.subr.bf16.mxu0 0
    %340 = vmatpush1.bf16.msra.mxu0 %v325
    %341 = vmatprep.subr.bf16.mxu0 0
    %342 = vmatpush1.bf16.msra.mxu0 0
    %343 = vmatprep.subr.bf16.mxu0 0
    %344 = vmatpush1.bf16.msra.mxu0 0
    %345 = vmatprep.subr.bf16.mxu0 0
    %346 = vmatpush1.bf16.msra.mxu0 0
    %347 = vmatprep.subr.bf16.mxu0 0
    %348 = vmatpush1.bf16.msra.mxu0 0
    %349 = vmatprep.subr.bf16.mxu0 0
    %350 = vmatpush1.bf16.msra.mxu0 0
    %351 = vmatprep.subr.bf16.mxu0 0
    %352 = vmatpush1.bf16.msra.mxu0 0
    %353 = vmatprep.subr.bf16.mxu0 0
    %354 = vmatpush1.bf16.msra.mxu0 0
    %355 = vmatprep.subr.bf16.mxu0 0
    %356 = vmatpush1.bf16.msra.mxu0 0
    %357 = vmatprep.subr.bf16.mxu0 0
    %358 = vmatpush1.bf16.msra.mxu0 0
    %359 = vmatprep.subr.bf16.mxu0 0
    %360 = vmatpush1.bf16.msra.mxu0 0
    %361 = vmatprep.subr.bf16.mxu0 0
    %362 = vmatpush1.bf16.msra.mxu0 0
    %363 = vmatprep.subr.bf16.mxu0 0
    %364 = vmatpush1.bf16.msra.mxu0 0
    %365 = vmatprep.subr.bf16.mxu0 0
    %366 = vmatpush1.bf16.msra.mxu0 0
    %367 = vmatprep.subr.bf16.mxu0 0
    %368 = vmatpush1.bf16.msra.mxu0 0
    %369 = vmatprep.mubr.bf16.mxu0 0
    %370 = vmatmul.mubr.bf16.gmra.mrb[0].mxu0 %v329
    %v371 = vpop.f32.mrb[0].mxu0
    %v372 = vadd.f32 %v315, %v371
    %v373 = vpop.f32.mrb[0].mxu0
    %v374 = vpop.f32.mrb[0].mxu0
    %v375 = vadd.f32 %v315, %v374
    %v376 = vpop.f32.mrb[0].mxu0
    %377 = vmatprep.mubr.bf16.mxu0 0
    %378 = vmatmul.mubr.bf16.gmra.mrb[0].mxu0 %v332
    %v379 = vpop.f32.mrb[0].mxu0
    %v380 = vadd.f32 %v315, %v379
    %v381 = vpop.f32.mrb[0].mxu0
    %v382 = vpop.f32.mrb[0].mxu0
    %v383 = vadd.f32 %v315, %v382
    %v384 = vpop.f32.mrb[0].mxu0
    %385 = vmatprep.mubr.bf16.mxu0 0
    %386 = vmatmul.mubr.bf16.gmra.mrb[0].mxu0 %v335
    %v387 = vpop.f32.mrb[0].mxu0
    %v388 = vadd.f32 %v315, %v387
    %v389 = vpop.f32.mrb[0].mxu0
    %v390 = vpop.f32.mrb[0].mxu0
    %v391 = vadd.f32 %v315, %v390
    %v392 = vpop.f32.mrb[0].mxu0
    %393 = vdwg.mxu0
    %v394 = vpack.c.bf16 %v375, %v372
    %v395 = vpack.c.bf16 %v383, %v380
    %v396 = vpack.c.bf16 %v391, %v388
    %v400 = vunpack.c.l.b16 %v394
    %v401 = vunpack.c.h.b16 %v394
    %v402 = vunpack.c.l.b16 %v395
    %v403 = vunpack.c.h.b16 %v395
    %v404 = vunpack.c.l.b16 %v396
    %v405 = vunpack.c.h.b16 %v396
    %v406 = vpack.c.b16 %v400, %v400
    %v407 = vpack.c.b16 %v401, %v401
    %v408 = vpack.c.b16 %v402, %v402
    %v409 = vpack.c.b16 %v403, %v403
    %v410 = vpack.c.b16 %v404, %v404
    %v411 = vpack.c.b16 %v405, %v405
    %v418 = vsel %vm215, 1, 0
    %vm419 = vcmp.eq.s32.totalorder %v418, 1
    %vm420 = vmpackc.low %vm419, %vm419
    %v421 = vsel %vm420, 65537, 0
    %422 = vrot.lane.b32.xlu0 %v421, 32
    %v423 = vpop.permute.xlu0 %422
    %vm424 = vcmp.ne.s16.totalorder %v423, 0
    %v425 = vsel %vm424, %v406, 0
    %v426 = vsel %vm424, %v407, 0
    %v427 = vsel %vm424, %v408, 0
    %v428 = vsel %vm424, %v409, 0
    %v429 = vsel %vm424, %v410, 0
    %v430 = vsel %vm424, %v411, 0
    %v431 = vsel %vm218, 1, 0
    %vm432 = vcmp.eq.s32.totalorder %v431, 1
    %vm433 = vmpackc.low %vm432, %vm432
    %v434 = vsel %vm433, 65537, 0
    %435 = vrot.lane.b32.xlu0 %v434, 32
    %v436 = vpop.permute.xlu0 %435
    %vm437 = vcmp.ne.s16.totalorder %v436, 0
    %v438 = vsel %vm437, %v406, 0
    %v439 = vsel %vm437, %v407, 0
    %v440 = vsel %vm437, %v408, 0
    %v441 = vsel %vm437, %v409, 0
    %v442 = vsel %vm437, %v410, 0
    %v443 = vsel %vm437, %v411, 0
    %v450 = vunpack.c.l.b16 %v425
    %v451 = vunpack.c.l.b16 %v426
    %v452 = vunpack.c.l.b16 %v427
    %v453 = vunpack.c.l.b16 %v428
    %v454 = vunpack.c.l.b16 %v429
    %v455 = vunpack.c.l.b16 %v430
    %v456 = vpack.c.b16 %v451, %v450
    %v457 = vpack.c.b16 %v452, %v452
    %v458 = vpack.c.b16 %v454, %v453
    %v459 = vpack.c.b16 %v455, %v455
    %v466 = vunpack.c.l.b16 %v438
    %v467 = vunpack.c.l.b16 %v439
    %v468 = vunpack.c.l.b16 %v440
    %v469 = vunpack.c.l.b16 %v441
    %v470 = vunpack.c.l.b16 %v442
    %v471 = vunpack.c.l.b16 %v443
    %v472 = vpack.c.b16 %v466, %v466
    %v473 = vpack.c.b16 %v468, %v467
    %v474 = vpack.c.b16 %v469, %v469
    %v475 = vpack.c.b16 %v471, %v470
    %vm476 = vcmask 1043456
    %v479 = vsel %vm476, %v457, %v472
    %v482 = vsel %vm476, %v459, %v474
    %483 = vrot.lane.b32.xlu0 %v421, 64
    %v484 = vpop.permute.xlu0 %483
    %vm485 = vcmp.ne.s16.totalorder %v484, 0
    %v486 = vsel %vm485, %v406, 0
    %v487 = vsel %vm485, %v407, 0
    %v488 = vsel %vm485, %v408, 0
    %v489 = vsel %vm485, %v409, 0
    %v490 = vsel %vm485, %v410, 0
    %v491 = vsel %vm485, %v411, 0
    %492 = vrot.lane.b32.xlu0 %v434, 64
    %v493 = vpop.permute.xlu0 %492
    %vm494 = vcmp.ne.s16.totalorder %v493, 0
    %v495 = vsel %vm494, %v406, 0
    %v496 = vsel %vm494, %v407, 0
    %v497 = vsel %vm494, %v408, 0
    %v498 = vsel %vm494, %v409, 0
    %v499 = vsel %vm494, %v410, 0
    %v500 = vsel %vm494, %v411, 0
    %v507 = vunpack.c.l.b16 %v486
    %v508 = vunpack.c.l.b16 %v487
    %v509 = vunpack.c.l.b16 %v488
    %v510 = vunpack.c.l.b16 %v489
    %v511 = vunpack.c.l.b16 %v490
    %v512 = vunpack.c.l.b16 %v491
    %v513 = vpack.c.b16 %v508, %v507
    %v514 = vpack.c.b16 %v509, %v509
    %v515 = vpack.c.b16 %v511, %v510
    %v516 = vpack.c.b16 %v512, %v512
    %v523 = vunpack.c.l.b16 %v495
    %v524 = vunpack.c.l.b16 %v496
    %v525 = vunpack.c.l.b16 %v497
    %v526 = vunpack.c.l.b16 %v498
    %v527 = vunpack.c.l.b16 %v499
    %v528 = vunpack.c.l.b16 %v500
    %v529 = vpack.c.b16 %v523, %v523
    %v530 = vpack.c.b16 %v525, %v524
    %v531 = vpack.c.b16 %v526, %v526
    %v532 = vpack.c.b16 %v528, %v527
    %v535 = vsel %vm476, %v514, %v529
    %v538 = vsel %vm476, %v516, %v531
    %v539 = vpack.c.b16 %v401, %v400
    %541 = vrot.lane.b32.xlu0 %v456, 96
    %v542 = vpop.permute.xlu0 %541
    %543 = vrot.lane.b32.xlu0 %v479, 96
    %v544 = vpop.permute.xlu0 %543
    %545 = vrot.lane.b32.xlu0 %v473, 96
    %v546 = vpop.permute.xlu0 %545
    %v548 = vsel %vm224, %v539, 0
    %v551 = vsel %vm224, %v408, 0
    %v554 = vsel %vm224, %v542, 0
    %v557 = vsel %vm224, %v544, 0
    %v560 = vsel %vm224, %v546, 0
    %562 = vmatprep.subr.bf16.mxu0 0
    %563 = vmatpush1.bf16.xpose.msra.mxu0 %v554
    %564 = vmatprep.subr.bf16.mxu0 0
    %565 = vmatpush1.bf16.xpose.msra.mxu0 %v557
    %566 = vmatprep.subr.bf16.mxu0 0
    %567 = vmatpush1.bf16.xpose.msra.mxu0 %v560
    %568 = vmatprep.subr.bf16.mxu0 0
    %569 = vmatpush1.bf16.xpose.msra.mxu0 0
    %570 = vmatprep.subr.bf16.mxu0 0
    %571 = vmatpush1.bf16.xpose.msra.mxu0 0
    %572 = vmatprep.subr.bf16.mxu0 0
    %573 = vmatpush1.bf16.xpose.msra.mxu0 0
    %574 = vmatprep.subr.bf16.mxu0 0
    %575 = vmatpush1.bf16.xpose.msra.mxu0 0
    %576 = vmatprep.subr.bf16.mxu0 0
    %577 = vmatpush1.bf16.xpose.msra.mxu0 0
    %578 = vmatprep.subr.bf16.mxu0 0
    %579 = vmatpush1.bf16.xpose.msra.mxu0 0
    %580 = vmatprep.subr.bf16.mxu0 0
    %581 = vmatpush1.bf16.xpose.msra.mxu0 0
    %582 = vmatprep.subr.bf16.mxu0 0
    %583 = vmatpush1.bf16.xpose.msra.mxu0 0
    %584 = vmatprep.subr.bf16.mxu0 0
    %585 = vmatpush1.bf16.xpose.msra.mxu0 0
    %586 = vmatprep.subr.bf16.mxu0 0
    %587 = vmatpush1.bf16.xpose.msra.mxu0 0
    %588 = vmatprep.subr.bf16.mxu0 0
    %589 = vmatpush1.bf16.xpose.msra.mxu0 0
    %590 = vmatprep.subr.bf16.mxu0 0
    %591 = vmatpush1.bf16.xpose.msra.mxu0 0
    %592 = vmatprep.subr.bf16.mxu0 0
    %593 = vmatpush1.bf16.xpose.msra.mxu0 0
    %594 = vmatprep.mubr.bf16.mxu0 0
    %595 = vmatmul.mubr.bf16.gmra.mrb[0].mxu0 %v548
    %v596 = vpop.f32.mrb[0].mxu0
    %v597 = vadd.f32 0.0, %v596
    %v598 = vpop.f32.mrb[0].mxu0
    %v599 = vpop.f32.mrb[0].mxu0
    %v600 = vadd.f32 0.0, %v599
    %v601 = vpop.f32.mrb[0].mxu0
    %602 = vmatprep.mubr.bf16.mxu0 0
    %603 = vmatmul.mubr.bf16.gmra.mrb[0].mxu0 %v551
    %v604 = vpop.f32.mrb[0].mxu0
    %v605 = vadd.f32 0.0, %v604
    %v606 = vpop.f32.mrb[0].mxu0
    %v607 = vpop.f32.mrb[0].mxu0
    %v608 = vpop.f32.mrb[0].mxu0
    %609 = vdwg.mxu0
    %v610 = vpack.c.b16 %v404, %v403
    %612 = vrot.lane.b32.xlu0 %v458, 96
    %v613 = vpop.permute.xlu0 %612
    %614 = vrot.lane.b32.xlu0 %v482, 96
    %v615 = vpop.permute.xlu0 %614
    %616 = vrot.lane.b32.xlu0 %v475, 96
    %v617 = vpop.permute.xlu0 %616
    %v619 = vsel %vm224, %v610, 0
    %v622 = vsel %vm224, %v411, 0
    %v625 = vsel %vm224, %v613, 0
    %v628 = vsel %vm224, %v615, 0
    %v631 = vsel %vm224, %v617, 0
    %633 = vmatprep.subr.bf16.mxu0 0
    %634 = vmatpush1.bf16.xpose.msra.mxu0 %v625
    %635 = vmatprep.subr.bf16.mxu0 0
    %636 = vmatpush1.bf16.xpose.msra.mxu0 %v628
    %637 = vmatprep.subr.bf16.mxu0 0
    %638 = vmatpush1.bf16.xpose.msra.mxu0 %v631
    %639 = vmatprep.subr.bf16.mxu0 0
    %640 = vmatpush1.bf16.xpose.msra.mxu0 0
    %641 = vmatprep.subr.bf16.mxu0 0
    %642 = vmatpush1.bf16.xpose.msra.mxu0 0
    %643 = vmatprep.subr.bf16.mxu0 0
    %644 = vmatpush1.bf16.xpose.msra.mxu0 0
    %645 = vmatprep.subr.bf16.mxu0 0
    %646 = vmatpush1.bf16.xpose.msra.mxu0 0
    %647 = vmatprep.subr.bf16.mxu0 0
    %648 = vmatpush1.bf16.xpose.msra.mxu0 0
    %649 = vmatprep.subr.bf16.mxu0 0
    %650 = vmatpush1.bf16.xpose.msra.mxu0 0
    %651 = vmatprep.subr.bf16.mxu0 0
    %652 = vmatpush1.bf16.xpose.msra.mxu0 0
    %653 = vmatprep.subr.bf16.mxu0 0
    %654 = vmatpush1.bf16.xpose.msra.mxu0 0
    %655 = vmatprep.subr.bf16.mxu0 0
    %656 = vmatpush1.bf16.xpose.msra.mxu0 0
    %657 = vmatprep.subr.bf16.mxu0 0
    %658 = vmatpush1.bf16.xpose.msra.mxu0 0
    %659 = vmatprep.subr.bf16.mxu0 0
    %660 = vmatpush1.bf16.xpose.msra.mxu0 0
    %661 = vmatprep.subr.bf16.mxu0 0
    %662 = vmatpush1.bf16.xpose.msra.mxu0 0
    %663 = vmatprep.subr.bf16.mxu0 0
    %664 = vmatpush1.bf16.xpose.msra.mxu0 0
    %665 = vmatprep.mubr.bf16.mxu0 0
    %666 = vmatmul.mubr.bf16.gmra.mrb[0].mxu0 %v619
    %v667 = vpop.f32.mrb[0].mxu0
    %v668 = vadd.f32 0.0, %v667
    %v669 = vpop.f32.mrb[0].mxu0
    %v670 = vpop.f32.mrb[0].mxu0
    %v671 = vadd.f32 0.0, %v670
    %v672 = vpop.f32.mrb[0].mxu0
    %673 = vmatprep.mubr.bf16.mxu0 0
    %674 = vmatmul.mubr.bf16.gmra.mrb[0].mxu0 %v622
    %v675 = vpop.f32.mrb[0].mxu0
    %v676 = vadd.f32 0.0, %v675
    %v677 = vpop.f32.mrb[0].mxu0
    %v678 = vpop.f32.mrb[0].mxu0
    %v679 = vpop.f32.mrb[0].mxu0
    %680 = vdwg.mxu0
    %v681 = vsel %vm220, 1, 0
    %vm682 = vcmp.eq.s32.totalorder %v681, 1
    %v683 = vsel %vm682, %v597, -1e+30
    %v684 = vsel %vm682, %v600, -1e+30
    %v685 = vsel %vm682, %v605, -1e+30
    %v686 = vsel %vm682, %v668, -1e+30
    %v687 = vsel %vm682, %v671, -1e+30
    %v688 = vsel %vm682, %v676, -1e+30
    %vm689 = vcmask 392192
    %v690 = vsel %vm689, %v683, -inf
    %691 = vmax.xlane.f32.xlu0 %v690
    %v692 = vpop.xlane.xlu0 %691
    %v693 = vsel %vm689, %v684, -inf
    %694 = vmax.xlane.f32.xlu0 %v693
    %v695 = vpop.xlane.xlu0 %694
    %v696 = vsel %vm689, %v685, -inf
    %697 = vmax.xlane.f32.xlu0 %v696
    %v698 = vpop.xlane.xlu0 %697
    %v699 = vsel %vm689, %v686, -inf
    %700 = vmax.xlane.f32.xlu0 %v699
    %v701 = vpop.xlane.xlu0 %700
    %v702 = vsel %vm689, %v687, -inf
    %703 = vmax.xlane.f32.xlu0 %v702
    %v704 = vpop.xlane.xlu0 %703
    %v705 = vsel %vm689, %v688, -inf
    %706 = vmax.xlane.f32.xlu0 %v705
    %v707 = vpop.xlane.xlu0 %706
    %v708 = vsel %vm682, %v692, -1e+30
    %v709 = vsel %vm682, %v695, -1e+30
    %v710 = vsel %vm682, %v698, -1e+30
    %v711 = vsel %vm682, %v701, -1e+30
    %v712 = vsel %vm682, %v704, -1e+30
    %v713 = vsel %vm682, %v707, -1e+30
    %v714 = vsel %vm223, 1, 0
    %vm715 = vcmp.eq.s32.totalorder %v714, 1
    %v716 = vsel %vm715, %v597, -1e+30
    %v717 = vsel %vm715, %v600, -1e+30
    %v718 = vsel %vm715, %v605, -1e+30
    %v719 = vsel %vm715, %v668, -1e+30
    %v720 = vsel %vm715, %v671, -1e+30
    %v721 = vsel %vm715, %v676, -1e+30
    %v722 = vsel %vm689, %v716, -inf
    %723 = vmax.xlane.f32.xlu0 %v722
    %v724 = vpop.xlane.xlu0 %723
    %v725 = vsel %vm689, %v717, -inf
    %726 = vmax.xlane.f32.xlu0 %v725
    %v727 = vpop.xlane.xlu0 %726
    %v728 = vsel %vm689, %v718, -inf
    %729 = vmax.xlane.f32.xlu0 %v728
    %v730 = vpop.xlane.xlu0 %729
    %v731 = vsel %vm689, %v719, -inf
    %732 = vmax.xlane.f32.xlu0 %v731
    %v733 = vpop.xlane.xlu0 %732
    %v734 = vsel %vm689, %v720, -inf
    %735 = vmax.xlane.f32.xlu0 %v734
    %v736 = vpop.xlane.xlu0 %735
    %v737 = vsel %vm689, %v721, -inf
    %738 = vmax.xlane.f32.xlu0 %v737
    %v739 = vpop.xlane.xlu0 %738
    %v740 = vsel %vm715, %v724, %v708
    %v741 = vsel %vm715, %v727, %v709
    %v742 = vsel %vm715, %v730, %v710
    %v743 = vsel %vm715, %v733, %v711
    %v744 = vsel %vm715, %v736, %v712
    %v745 = vsel %vm715, %v739, %v713
    %v746 = vsub.f32 %v597, %v740
    %v747 = vsub.f32 %v600, %v741
    %v748 = vsub.f32 %v605, %v742
    %v749 = vsub.f32 %v668, %v743
    %v750 = vsub.f32 %v671, %v744
    %v751 = vsub.f32 %v676, %v745
    %v752 = vmul.f32 %v746, 1.442695
    %v753 = vpow.pop %v752
    %v754 = vmul.f32 %v747, 1.442695
    %v755 = vpow.pop %v754
    %v756 = vmul.f32 %v748, 1.442695
    %v757 = vpow.pop %v756
    %v758 = vmul.f32 %v749, 1.442695
    %v759 = vpow.pop %v758
    %v760 = vmul.f32 %v750, 1.442695
    %v761 = vpow.pop %v760
    %v762 = vmul.f32 %v751, 1.442695
    %v763 = vpow.pop %v762
    %v764 = vsel %vm682, %v753, 0.0
    %v765 = vsel %vm682, %v755, 0.0
    %v766 = vsel %vm682, %v757, 0.0
    %v767 = vsel %vm682, %v759, 0.0
    %v768 = vsel %vm682, %v761, 0.0
    %v769 = vsel %vm682, %v763, 0.0
    %v770 = vsel %vm689, %v764, 0.0
    %771 = vadd.xlane.f32.xlu0 %v770
    %v772 = vpop.xlane.xlu0 %771
    %v773 = vsel %vm689, %v765, 0.0
    %774 = vadd.xlane.f32.xlu0 %v773
    %v775 = vpop.xlane.xlu0 %774
    %v776 = vsel %vm689, %v766, 0.0
    %777 = vadd.xlane.f32.xlu0 %v776
    %v778 = vpop.xlane.xlu0 %777
    %v779 = vsel %vm689, %v767, 0.0
    %780 = vadd.xlane.f32.xlu0 %v779
    %v781 = vpop.xlane.xlu0 %780
    %v782 = vsel %vm689, %v768, 0.0
    %783 = vadd.xlane.f32.xlu0 %v782
    %v784 = vpop.xlane.xlu0 %783
    %v785 = vsel %vm689, %v769, 0.0
    %786 = vadd.xlane.f32.xlu0 %v785
    %v787 = vpop.xlane.xlu0 %786
    %v788 = vrcp.pop %v772
    %v789 = vrcp.pop %v775
    %v790 = vrcp.pop %v778
    %v791 = vrcp.pop %v781
    %v792 = vrcp.pop %v784
    %v793 = vrcp.pop %v787
    %v794 = vsel %vm682, %v788, 0.0
    %v795 = vsel %vm682, %v789, 0.0
    %v796 = vsel %vm682, %v790, 0.0
    %v797 = vsel %vm682, %v791, 0.0
    %v798 = vsel %vm682, %v792, 0.0
    %v799 = vsel %vm682, %v793, 0.0
    %v800 = vsel %vm715, %v753, 0.0
    %v801 = vsel %vm715, %v755, 0.0
    %v802 = vsel %vm715, %v757, 0.0
    %v803 = vsel %vm715, %v759, 0.0
    %v804 = vsel %vm715, %v761, 0.0
    %v805 = vsel %vm715, %v763, 0.0
    %v806 = vsel %vm689, %v800, 0.0
    %807 = vadd.xlane.f32.xlu0 %v806
    %v808 = vpop.xlane.xlu0 %807
    %v809 = vsel %vm689, %v801, 0.0
    %810 = vadd.xlane.f32.xlu0 %v809
    %v811 = vpop.xlane.xlu0 %810
    %v812 = vsel %vm689, %v802, 0.0
    %813 = vadd.xlane.f32.xlu0 %v812
    %v814 = vpop.xlane.xlu0 %813
    %v815 = vsel %vm689, %v803, 0.0
    %816 = vadd.xlane.f32.xlu0 %v815
    %v817 = vpop.xlane.xlu0 %816
    %v818 = vsel %vm689, %v804, 0.0
    %819 = vadd.xlane.f32.xlu0 %v818
    %v820 = vpop.xlane.xlu0 %819
    %v821 = vsel %vm689, %v805, 0.0
    %822 = vadd.xlane.f32.xlu0 %v821
    %v823 = vpop.xlane.xlu0 %822
    %v824 = vrcp.pop %v808
    %v825 = vrcp.pop %v811
    %v826 = vrcp.pop %v814
    %v827 = vrcp.pop %v817
    %v828 = vrcp.pop %v820
    %v829 = vrcp.pop %v823
    %v830 = vsel %vm715, %v824, %v794
    %v831 = vsel %vm715, %v825, %v795
    %v832 = vsel %vm715, %v826, %v796
    %v833 = vsel %vm715, %v827, %v797
    %v834 = vsel %vm715, %v828, %v798
    %v835 = vsel %vm715, %v829, %v799
    %v836 = vmul.f32 %v753, %v830
    %v837 = vmul.f32 %v755, %v831
    %v838 = vmul.f32 %v757, %v832
    %v839 = vmul.f32 %v759, %v833
    %v840 = vmul.f32 %v761, %v834
    %v841 = vmul.f32 %v763, %v835
    %v842 = vpack.c.bf16 %v837, %v836
    %v843 = vpack.c.bf16 %v838, %v838
    %v844 = vpack.c.bf16 %v840, %v839
    %v845 = vpack.c.bf16 %v841, %v841
    %847 = vrot.lane.b32.xlu0 %v513, 64
    %v848 = vpop.permute.xlu0 %847
    %849 = vrot.lane.b32.xlu0 %v535, 64
    %v850 = vpop.permute.xlu0 %849
    %851 = vrot.lane.b32.xlu0 %v530, 64
    %v852 = vpop.permute.xlu0 %851
    %v857 = vsel %vm689, %v842, 0
    %v860 = vsel %vm689, %v843, 0
    %862 = vmatprep.subr.bf16.mxu0 0
    %863 = vmatpush1.bf16.msra.mxu0 %v848
    %864 = vmatprep.subr.bf16.mxu0 0
    %865 = vmatpush1.bf16.msra.mxu0 %v850
    %866 = vmatprep.subr.bf16.mxu0 0
    %867 = vmatpush1.bf16.msra.mxu0 %v852
    %868 = vmatprep.subr.bf16.mxu0 0
    %869 = vmatpush1.bf16.msra.mxu0 0
    %870 = vmatprep.subr.bf16.mxu0 0
    %871 = vmatpush1.bf16.msra.mxu0 0
    %872 = vmatprep.subr.bf16.mxu0 0
    %873 = vmatpush1.bf16.msra.mxu0 0
    %874 = vmatprep.subr.bf16.mxu0 0
    %875 = vmatpush1.bf16.msra.mxu0 0
    %876 = vmatprep.subr.bf16.mxu0 0
    %877 = vmatpush1.bf16.msra.mxu0 0
    %878 = vmatprep.subr.bf16.mxu0 0
    %879 = vmatpush1.bf16.msra.mxu0 0
    %880 = vmatprep.subr.bf16.mxu0 0
    %881 = vmatpush1.bf16.msra.mxu0 0
    %882 = vmatprep.subr.bf16.mxu0 0
    %883 = vmatpush1.bf16.msra.mxu0 0
    %884 = vmatprep.subr.bf16.mxu0 0
    %885 = vmatpush1.bf16.msra.mxu0 0
    %886 = vmatprep.subr.bf16.mxu0 0
    %887 = vmatpush1.bf16.msra.mxu0 0
    %888 = vmatprep.subr.bf16.mxu0 0
    %889 = vmatpush1.bf16.msra.mxu0 0
    %890 = vmatprep.subr.bf16.mxu0 0
    %891 = vmatpush1.bf16.msra.mxu0 0
    %892 = vmatprep.subr.bf16.mxu0 0
    %893 = vmatpush1.bf16.msra.mxu0 0
    %894 = vmatprep.mubr.bf16.mxu0 0
    %895 = vmatmul.mubr.bf16.gmra.mrb[0].mxu0 %v857
    %v896 = vpop.f32.mrb[0].mxu0
    %v897 = vadd.f32 0.0, %v896
    %v898 = vpop.f32.mrb[0].mxu0
    %v899 = vpop.f32.mrb[0].mxu0
    %v900 = vadd.f32 0.0, %v899
    %v901 = vpop.f32.mrb[0].mxu0
    %902 = vmatprep.mubr.bf16.mxu0 0
    %903 = vmatmul.mubr.bf16.gmra.mrb[0].mxu0 %v860
    %v904 = vpop.f32.mrb[0].mxu0
    %v905 = vadd.f32 0.0, %v904
    %v906 = vpop.f32.mrb[0].mxu0
    %v907 = vpop.f32.mrb[0].mxu0
    %v908 = vpop.f32.mrb[0].mxu0
    %909 = vdwg.mxu0
    %911 = vrot.lane.b32.xlu0 %v515, 64
    %v912 = vpop.permute.xlu0 %911
    %913 = vrot.lane.b32.xlu0 %v538, 64
    %v914 = vpop.permute.xlu0 %913
    %915 = vrot.lane.b32.xlu0 %v532, 64
    %v916 = vpop.permute.xlu0 %915
    %v921 = vsel %vm689, %v844, 0
    %v924 = vsel %vm689, %v845, 0
    %926 = vmatprep.subr.bf16.mxu0 0
    %927 = vmatpush1.bf16.msra.mxu0 %v912
    %928 = vmatprep.subr.bf16.mxu0 0
    %929 = vmatpush1.bf16.msra.mxu0 %v914
    %930 = vmatprep.subr.bf16.mxu0 0
    %931 = vmatpush1.bf16.msra.mxu0 %v916
    %932 = vmatprep.subr.bf16.mxu0 0
    %933 = vmatpush1.bf16.msra.mxu0 0
    %934 = vmatprep.subr.bf16.mxu0 0
    %935 = vmatpush1.bf16.msra.mxu0 0
    %936 = vmatprep.subr.bf16.mxu0 0
    %937 = vmatpush1.bf16.msra.mxu0 0
    %938 = vmatprep.subr.bf16.mxu0 0
    %939 = vmatpush1.bf16.msra.mxu0 0
    %940 = vmatprep.subr.bf16.mxu0 0
    %941 = vmatpush1.bf16.msra.mxu0 0
    %942 = vmatprep.subr.bf16.mxu0 0
    %943 = vmatpush1.bf16.msra.mxu0 0
    %944 = vmatprep.subr.bf16.mxu0 0
    %945 = vmatpush1.bf16.msra.mxu0 0
    %946 = vmatprep.subr.bf16.mxu0 0
    %947 = vmatpush1.bf16.msra.mxu0 0
    %948 = vmatprep.subr.bf16.mxu0 0
    %949 = vmatpush1.bf16.msra.mxu0 0
    %950 = vmatprep.subr.bf16.mxu0 0
    %951 = vmatpush1.bf16.msra.mxu0 0
    %952 = vmatprep.subr.bf16.mxu0 0
    %953 = vmatpush1.bf16.msra.mxu0 0
    %954 = vmatprep.subr.bf16.mxu0 0
    %955 = vmatpush1.bf16.msra.mxu0 0
    %956 = vmatprep.subr.bf16.mxu0 0
    %957 = vmatpush1.bf16.msra.mxu0 0
    %958 = vmatprep.mubr.bf16.mxu0 0
    %959 = vmatmul.mubr.bf16.gmra.mrb[0].mxu0 %v921
    %v960 = vpop.f32.mrb[0].mxu0
    %v961 = vadd.f32 0.0, %v960
    %v962 = vpop.f32.mrb[0].mxu0
    %v963 = vpop.f32.mrb[0].mxu0
    %v964 = vadd.f32 0.0, %v963
    %v965 = vpop.f32.mrb[0].mxu0
    %966 = vmatprep.mubr.bf16.mxu0 0
    %967 = vmatmul.mubr.bf16.gmra.mrb[0].mxu0 %v924
    %v968 = vpop.f32.mrb[0].mxu0
    %v969 = vadd.f32 0.0, %v968
    %v970 = vpop.f32.mrb[0].mxu0
    %v971 = vpop.f32.mrb[0].mxu0
    %v972 = vpop.f32.mrb[0].mxu0
    %973 = vdwg.mxu0
    %v974 = vpack.c.bf16 %v900, %v897
    %v975 = vpack.c.bf16 %v961, %v905
    %v976 = vpack.c.bf16 %v969, %v964
    %v977 = vlaneseq
    %v978 = vshrl.u32 %v977, 7
    %v979 = vsub.s32 4, %v978
    %v980 = vrot.slane %v208, %v979
    %v985 = vunpack.c.l.b16 %v160
    %v986 = vunpack.c.l.b16 %v161
    %v987 = vunpack.c.l.b16 %v162
    %v988 = vunpack.c.l.b16 %v163
    %v989 = vpack.c.b16 %v986, %v985
    %v990 = vpack.c.b16 %v988, %v987
    %v994 = vsel %vm224, %v974, 0
    %v997 = vsel %vm224, %v975, 0
    %v1000 = vsel %vm224, %v976, 0
    %1002 = vmatprep.subr.bf16.mxu0 0
    %1003 = vmatpush1.bf16.msra.mxu0 %v989
    %1004 = vmatprep.subr.bf16.mxu0 0
    %1005 = vmatpush1.bf16.msra.mxu0 %v990
    %1006 = vmatprep.subr.bf16.mxu0 0
    %1007 = vmatpush1.bf16.msra.mxu0 0
    %1008 = vmatprep.subr.bf16.mxu0 0
    %1009 = vmatpush1.bf16.msra.mxu0 0
    %1010 = vmatprep.subr.bf16.mxu0 0
    %1011 = vmatpush1.bf16.msra.mxu0 0
    %1012 = vmatprep.subr.bf16.mxu0 0
    %1013 = vmatpush1.bf16.msra.mxu0 0
    %1014 = vmatprep.subr.bf16.mxu0 0
    %1015 = vmatpush1.bf16.msra.mxu0 0
    %1016 = vmatprep.subr.bf16.mxu0 0
    %1017 = vmatpush1.bf16.msra.mxu0 0
    %1018 = vmatprep.subr.bf16.mxu0 0
    %1019 = vmatpush1.bf16.msra.mxu0 0
    %1020 = vmatprep.subr.bf16.mxu0 0
    %1021 = vmatpush1.bf16.msra.mxu0 0
    %1022 = vmatprep.subr.bf16.mxu0 0
    %1023 = vmatpush1.bf16.msra.mxu0 0
    %1024 = vmatprep.subr.bf16.mxu0 0
    %1025 = vmatpush1.bf16.msra.mxu0 0
    %1026 = vmatprep.subr.bf16.mxu0 0
    %1027 = vmatpush1.bf16.msra.mxu0 0
    %1028 = vmatprep.subr.bf16.mxu0 0
    %1029 = vmatpush1.bf16.msra.mxu0 0
    %1030 = vmatprep.subr.bf16.mxu0 0
    %1031 = vmatpush1.bf16.msra.mxu0 0
    %1032 = vmatprep.subr.bf16.mxu0 0
    %1033 = vmatpush1.bf16.msra.mxu0 0
    %1034 = vmatprep.mubr.bf16.mxu0 0
    %1035 = vmatmul.mubr.bf16.gmra.mrb[0].mxu0 %v994
    %v1036 = vpop.f32.mrb[0].mxu0
    %v1037 = vadd.f32 %v980, %v1036
    %v1038 = vpop.f32.mrb[0].mxu0
    %v1039 = vpop.f32.mrb[0].mxu0
    %v1040 = vadd.f32 %v980, %v1039
    %v1041 = vpop.f32.mrb[0].mxu0
    %1042 = vmatprep.mubr.bf16.mxu0 0
    %1043 = vmatmul.mubr.bf16.gmra.mrb[0].mxu0 %v997
    %v1044 = vpop.f32.mrb[0].mxu0
    %v1045 = vadd.f32 %v980, %v1044
    %v1046 = vpop.f32.mrb[0].mxu0
    %v1047 = vpop.f32.mrb[0].mxu0
    %v1048 = vadd.f32 %v980, %v1047
    %v1049 = vpop.f32.mrb[0].mxu0
    %1050 = vmatprep.mubr.bf16.mxu0 0
    %1051 = vmatmul.mubr.bf16.gmra.mrb[0].mxu0 %v1000
    %v1052 = vpop.f32.mrb[0].mxu0
    %v1053 = vadd.f32 %v980, %v1052
    %v1054 = vpop.f32.mrb[0].mxu0
    %v1055 = vpop.f32.mrb[0].mxu0
    %v1056 = vadd.f32 %v980, %v1055
    %v1057 = vpop.f32.mrb[0].mxu0
    %1058 = vdwg.mxu0
    %v1059 = vadd.f32 %v144, %v1037
    %v1060 = vadd.f32 %v147, %v1040
    %v1061 = vadd.f32 %v148, %v1045
    %v1062 = vadd.f32 %v144, %v1048
    %v1063 = vadd.f32 %v149, %v1053
    %v1064 = vadd.f32 %v150, %v1056
    %v1065 = vsel %vm224, %v1059, 0.0
    %1066 = vadd.xlane.f32.xlu0 %v1065
    %v1067 = vpop.xlane.xlu0 %1066
    %v1068 = vsel %vm224, %v1060, 0.0
    %1069 = vadd.xlane.f32.xlu0 %v1068
    %v1070 = vpop.xlane.xlu0 %1069
    %v1071 = vsel %vm224, %v1061, 0.0
    %1072 = vadd.xlane.f32.xlu0 %v1071
    %v1073 = vpop.xlane.xlu0 %1072
    %v1074 = vsel %vm224, %v1062, 0.0
    %1075 = vadd.xlane.f32.xlu0 %v1074
    %v1076 = vpop.xlane.xlu0 %1075
    %v1077 = vsel %vm224, %v1063, 0.0
    %1078 = vadd.xlane.f32.xlu0 %v1077
    %v1079 = vpop.xlane.xlu0 %1078
    %v1080 = vsel %vm224, %v1064, 0.0
    %1081 = vadd.xlane.f32.xlu0 %v1080
    %v1082 = vpop.xlane.xlu0 %1081
    %v1083 = vmul.f32 %v1067, %v240
    %v1084 = vmul.f32 %v1070, %v240
    %v1085 = vmul.f32 %v1073, %v240
    %v1086 = vmul.f32 %v1076, %v240
    %v1087 = vmul.f32 %v1079, %v240
    %v1088 = vmul.f32 %v1082, %v240
    %v1089 = vsub.f32 %v1059, %v1083
    %v1090 = vsub.f32 %v1060, %v1084
    %v1091 = vsub.f32 %v1061, %v1085
    %v1092 = vsub.f32 %v1062, %v1086
    %v1093 = vsub.f32 %v1063, %v1087
    %v1094 = vsub.f32 %v1064, %v1088
    %v1095 = vmul.f32 %v1089, %v1089
    %v1096 = vmul.f32 %v1090, %v1090
    %v1097 = vmul.f32 %v1091, %v1091
    %v1098 = vmul.f32 %v1092, %v1092
    %v1099 = vmul.f32 %v1093, %v1093
    %v1100 = vmul.f32 %v1094, %v1094
    %v1101 = vsel %vm224, %v1095, 0.0
    %1102 = vadd.xlane.f32.xlu0 %v1101
    %v1103 = vpop.xlane.xlu0 %1102
    %v1104 = vsel %vm224, %v1096, 0.0
    %1105 = vadd.xlane.f32.xlu0 %v1104
    %v1106 = vpop.xlane.xlu0 %1105
    %v1107 = vsel %vm224, %v1097, 0.0
    %1108 = vadd.xlane.f32.xlu0 %v1107
    %v1109 = vpop.xlane.xlu0 %1108
    %v1110 = vsel %vm224, %v1098, 0.0
    %1111 = vadd.xlane.f32.xlu0 %v1110
    %v1112 = vpop.xlane.xlu0 %1111
    %v1113 = vsel %vm224, %v1099, 0.0
    %1114 = vadd.xlane.f32.xlu0 %v1113
    %v1115 = vpop.xlane.xlu0 %1114
    %v1116 = vsel %vm224, %v1100, 0.0
    %1117 = vadd.xlane.f32.xlu0 %v1116
    %v1118 = vpop.xlane.xlu0 %1117
    %v1119 = vmul.f32 %v1103, %v240
    %v1120 = vmul.f32 %v1106, %v240
    %v1121 = vmul.f32 %v1109, %v240
    %v1122 = vmul.f32 %v1112, %v240
    %v1123 = vmul.f32 %v1115, %v240
    %v1124 = vmul.f32 %v1118, %v240
    %v1125 = vadd.f32 %v1119, 1e-05
    %v1126 = vadd.f32 %v1120, 1e-05
    %v1127 = vadd.f32 %v1121, 1e-05
    %v1128 = vadd.f32 %v1122, 1e-05
    %v1129 = vadd.f32 %v1123, 1e-05
    %v1130 = vadd.f32 %v1124, 1e-05
    %v1131 = vrsqrt.pop %v1125
    %v1132 = vrsqrt.pop %v1126
    %v1133 = vrsqrt.pop %v1127
    %v1134 = vrsqrt.pop %v1128
    %v1135 = vrsqrt.pop %v1129
    %v1136 = vrsqrt.pop %v1130
    %v1137 = vmul.f32 %v1089, %v1131
    %v1138 = vmul.f32 %v1090, %v1132
    %v1139 = vmul.f32 %v1091, %v1133
    %v1140 = vmul.f32 %v1092, %v1134
    %v1141 = vmul.f32 %v1093, %v1135
    %v1142 = vmul.f32 %v1094, %v1136
    %v1143 = vlaneseq
    %v1144 = vshrl.u32 %v1143, 7
    %v1145 = vsub.s32 2, %v1144
    %v1146 = vrot.slane %v208, %v1145
    %v1147 = vmul.f32 %v1137, %v1146
    %v1148 = vmul.f32 %v1138, %v1146
    %v1149 = vmul.f32 %v1139, %v1146
    %v1150 = vmul.f32 %v1140, %v1146
    %v1151 = vmul.f32 %v1141, %v1146
    %v1152 = vmul.f32 %v1142, %v1146
    %v1153 = vlaneseq
    %v1154 = vshrl.u32 %v1153, 7
    %v1155 = vsub.s32 3, %v1154
    %v1156 = vrot.slane %v208, %v1155
    %v1157 = vadd.f32 %v1147, %v1156
    %v1158 = vadd.f32 %v1148, %v1156
    %v1159 = vadd.f32 %v1149, %v1156
    %v1160 = vadd.f32 %v1150, %v1156
    %v1161 = vadd.f32 %v1151, %v1156
    %v1162 = vadd.f32 %v1152, %v1156
    %v1163 = vpack.c.bf16 %v1158, %v1157
    %v1164 = vpack.c.bf16 %v1160, %v1159
    %v1165 = vpack.c.bf16 %v1162, %v1161
    %v1166 = vlaneseq
    %v1167 = vshrl.u32 %v1166, 7
    %v1168 = vsub.s32 0, %v1167
    %v1169 = vrot.slane %v210, %v1168
    %v1174 = vunpack.c.l.b16 %v168
    %v1175 = vunpack.c.l.b16 %v169
    %v1176 = vunpack.c.l.b16 %v170
    %v1177 = vunpack.c.l.b16 %v171
    %v1178 = vpack.c.b16 %v1175, %v1174
    %v1179 = vpack.c.b16 %v1177, %v1176
    %v1183 = vsel %vm224, %v1163, 0
    %v1186 = vsel %vm224, %v1164, 0
    %v1189 = vsel %vm224, %v1165, 0
    %1191 = vmatprep.subr.bf16.mxu0 0
    %1192 = vmatpush1.bf16.msra.mxu0 %v1178
    %1193 = vmatprep.subr.bf16.mxu0 0
    %1194 = vmatpush1.bf16.msra.mxu0 %v1179
    %1195 = vmatprep.subr.bf16.mxu0 0
    %1196 = vmatpush1.bf16.msra.mxu0 0
    %1197 = vmatprep.subr.bf16.mxu0 0
    %1198 = vmatpush1.bf16.msra.mxu0 0
    %1199 = vmatprep.subr.bf16.mxu0 0
    %1200 = vmatpush1.bf16.msra.mxu0 0
    %1201 = vmatprep.subr.bf16.mxu0 0
    %1202 = vmatpush1.bf16.msra.mxu0 0
    %1203 = vmatprep.subr.bf16.mxu0 0
    %1204 = vmatpush1.bf16.msra.mxu0 0
    %1205 = vmatprep.subr.bf16.mxu0 0
    %1206 = vmatpush1.bf16.msra.mxu0 0
    %1207 = vmatprep.subr.bf16.mxu0 0
    %1208 = vmatpush1.bf16.msra.mxu0 0
    %1209 = vmatprep.subr.bf16.mxu0 0
    %1210 = vmatpush1.bf16.msra.mxu0 0
    %1211 = vmatprep.subr.bf16.mxu0 0
    %1212 = vmatpush1.bf16.msra.mxu0 0
    %1213 = vmatprep.subr.bf16.mxu0 0
    %1214 = vmatpush1.bf16.msra.mxu0 0
    %1215 = vmatprep.subr.bf16.mxu0 0
    %1216 = vmatpush1.bf16.msra.mxu0 0
    %1217 = vmatprep.subr.bf16.mxu0 0
    %1218 = vmatpush1.bf16.msra.mxu0 0
    %1219 = vmatprep.subr.bf16.mxu0 0
    %1220 = vmatpush1.bf16.msra.mxu0 0
    %1221 = vmatprep.subr.bf16.mxu0 0
    %1222 = vmatpush1.bf16.msra.mxu0 0
    %1223 = vmatprep.mubr.bf16.mxu0 0
    %1224 = vmatmul.mubr.bf16.gmra.mrb[0].mxu0 %v1183
    %v1225 = vpop.f32.mrb[0].mxu0
    %v1226 = vadd.f32 %v1169, %v1225
    %v1227 = vpop.f32.mrb[0].mxu0
    %v1228 = vpop.f32.mrb[0].mxu0
    %v1229 = vadd.f32 %v1169, %v1228
    %v1230 = vpop.f32.mrb[0].mxu0
    %1231 = vmatprep.mubr.bf16.mxu0 0
    %1232 = vmatmul.mubr.bf16.gmra.mrb[0].mxu0 %v1186
    %v1233 = vpop.f32.mrb[0].mxu0
    %v1234 = vadd.f32 %v1169, %v1233
    %v1235 = vpop.f32.mrb[0].mxu0
    %v1236 = vpop.f32.mrb[0].mxu0
    %v1237 = vadd.f32 %v1169, %v1236
    %v1238 = vpop.f32.mrb[0].mxu0
    %1239 = vmatprep.mubr.bf16.mxu0 0
    %1240 = vmatmul.mubr.bf16.gmra.mrb[0].mxu0 %v1189
    %v1241 = vpop.f32.mrb[0].mxu0
    %v1242 = vadd.f32 %v1169, %v1241
    %v1243 = vpop.f32.mrb[0].mxu0
    %v1244 = vpop.f32.mrb[0].mxu0
    %v1245 = vadd.f32 %v1169, %v1244
    %v1246 = vpop.f32.mrb[0].mxu0
    %1247 = vdwg.mxu0
    %v1248 = vmul.f32 %v1226, %v1226
    %v1249 = vmul.f32 %v1229, %v1229
    %v1250 = vmul.f32 %v1234, %v1234
    %v1251 = vmul.f32 %v1237, %v1237
    %v1252 = vmul.f32 %v1242, %v1242
    %v1253 = vmul.f32 %v1245, %v1245
    %v1254 = vmul.f32 %v1226, %v1248
    %v1255 = vmul.f32 %v1229, %v1249
    %v1256 = vmul.f32 %v1234, %v1250
    %v1257 = vmul.f32 %v1237, %v1251
    %v1258 = vmul.f32 %v1242, %v1252
    %v1259 = vmul.f32 %v1245, %v1253
    %v1260 = vmul.f32 %v1254, 0.044715
    %v1261 = vmul.f32 %v1255, 0.044715
    %v1262 = vmul.f32 %v1256, 0.044715
    %v1263 = vmul.f32 %v1257, 0.044715
    %v1264 = vmul.f32 %v1258, 0.044715
    %v1265 = vmul.f32 %v1259, 0.044715
    %v1266 = vadd.f32 %v1226, %v1260
    %v1267 = vadd.f32 %v1229, %v1261
    %v1268 = vadd.f32 %v1234, %v1262
    %v1269 = vadd.f32 %v1237, %v1263
    %v1270 = vadd.f32 %v1242, %v1264
    %v1271 = vadd.f32 %v1245, %v1265
    %v1272 = vmul.f32 %v1266, 0.7978846
    %v1273 = vmul.f32 %v1267, 0.7978846
    %v1274 = vmul.f32 %v1268, 0.7978846
    %v1275 = vmul.f32 %v1269, 0.7978846
    %v1276 = vmul.f32 %v1270, 0.7978846
    %v1277 = vmul.f32 %v1271, 0.7978846
    %v1278 = vtanh.pop %v1272
    %v1279 = vtanh.pop %v1273
    %v1280 = vtanh.pop %v1274
    %v1281 = vtanh.pop %v1275
    %v1282 = vtanh.pop %v1276
    %v1283 = vtanh.pop %v1277
    %v1284 = vadd.f32 %v1278, 1.0
    %v1285 = vadd.f32 %v1279, 1.0
    %v1286 = vadd.f32 %v1280, 1.0
    %v1287 = vadd.f32 %v1281, 1.0
    %v1288 = vadd.f32 %v1282, 1.0
    %v1289 = vadd.f32 %v1283, 1.0
    %v1290 = vmul.f32 %v1284, 0.5
    %v1291 = vmul.f32 %v1285, 0.5
    %v1292 = vmul.f32 %v1286, 0.5
    %v1293 = vmul.f32 %v1287, 0.5
    %v1294 = vmul.f32 %v1288, 0.5
    %v1295 = vmul.f32 %v1289, 0.5
    %v1296 = vmul.f32 %v1226, %v1290
    %v1297 = vmul.f32 %v1229, %v1291
    %v1298 = vmul.f32 %v1234, %v1292
    %v1299 = vmul.f32 %v1237, %v1293
    %v1300 = vmul.f32 %v1242, %v1294
    %v1301 = vmul.f32 %v1245, %v1295
    %v1302 = vpack.c.bf16 %v1297, %v1296
    %v1303 = vpack.c.bf16 %v1299, %v1298
    %v1304 = vpack.c.bf16 %v1301, %v1300
    %v1305 = vlaneseq
    %v1306 = vshrl.u32 %v1305, 7
    %v1307 = vsub.s32 5, %v1306
    %v1308 = vrot.slane %v208, %v1307
    %v1325 = vunpack.c.l.b16 %v176
    %v1326 = vunpack.c.l.b16 %v177
    %v1327 = vunpack.c.l.b16 %v178
    %v1328 = vunpack.c.l.b16 %v179
    %v1329 = vunpack.c.l.b16 %v180
    %v1330 = vunpack.c.l.b16 %v181
    %v1331 = vunpack.c.l.b16 %v182
    %v1332 = vunpack.c.l.b16 %v183
    %v1333 = vunpack.c.l.b16 %v184
    %v1334 = vunpack.c.l.b16 %v185
    %v1335 = vunpack.c.l.b16 %v186
    %v1336 = vunpack.c.l.b16 %v187
    %v1337 = vunpack.c.l.b16 %v188
    %v1338 = vunpack.c.l.b16 %v189
    %v1339 = vunpack.c.l.b16 %v190
    %v1340 = vunpack.c.l.b16 %v191
    %v1341 = vpack.c.b16 %v1326, %v1325
    %v1342 = vpack.c.b16 %v1328, %v1327
    %v1343 = vpack.c.b16 %v1330, %v1329
    %v1344 = vpack.c.b16 %v1332, %v1331
    %v1345 = vpack.c.b16 %v1334, %v1333
    %v1346 = vpack.c.b16 %v1336, %v1335
    %v1347 = vpack.c.b16 %v1338, %v1337
    %v1348 = vpack.c.b16 %v1340, %v1339
    %1357 = vmatprep.subr.bf16.mxu0 0
    %1358 = vmatpush1.bf16.msra.mxu0 %v1341
    %1359 = vmatprep.subr.bf16.mxu0 0
    %1360 = vmatpush1.bf16.msra.mxu0 %v1342
    %1361 = vmatprep.subr.bf16.mxu0 0
    %1362 = vmatpush1.bf16.msra.mxu0 %v1343
    %1363 = vmatprep.subr.bf16.mxu0 0
    %1364 = vmatpush1.bf16.msra.mxu0 %v1344
    %1365 = vmatprep.subr.bf16.mxu0 0
    %1366 = vmatpush1.bf16.msra.mxu0 %v1345
    %1367 = vmatprep.subr.bf16.mxu0 0
    %1368 = vmatpush1.bf16.msra.mxu0 %v1346
    %1369 = vmatprep.subr.bf16.mxu0 0
    %1370 = vmatpush1.bf16.msra.mxu0 %v1347
    %1371 = vmatprep.subr.bf16.mxu0 0
    %1372 = vmatpush1.bf16.msra.mxu0 %v1348
    %1373 = vmatprep.subr.bf16.mxu0 0
    %1374 = vmatpush1.bf16.msra.mxu0 0
    %1375 = vmatprep.subr.bf16.mxu0 0
    %1376 = vmatpush1.bf16.msra.mxu0 0
    %1377 = vmatprep.subr.bf16.mxu0 0
    %1378 = vmatpush1.bf16.msra.mxu0 0
    %1379 = vmatprep.subr.bf16.mxu0 0
    %1380 = vmatpush1.bf16.msra.mxu0 0
    %1381 = vmatprep.subr.bf16.mxu0 0
    %1382 = vmatpush1.bf16.msra.mxu0 0
    %1383 = vmatprep.subr.bf16.mxu0 0
    %1384 = vmatpush1.bf16.msra.mxu0 0
    %1385 = vmatprep.subr.bf16.mxu0 0
    %1386 = vmatpush1.bf16.msra.mxu0 0
    %1387 = vmatprep.subr.bf16.mxu0 0
    %1388 = vmatpush1.bf16.msra.mxu0 0
    %1389 = vmatprep.mubr.bf16.mxu0 0
    %1390 = vmatmul.mubr.bf16.gmra.mrb[0].mxu0 %v1302
    %v1391 = vpop.f32.mrb[0].mxu0
    %v1392 = vadd.f32 %v1308, %v1391
    %v1393 = vpop.f32.mrb[0].mxu0
    %v1394 = vpop.f32.mrb[0].mxu0
    %v1395 = vadd.f32 %v1308, %v1394
    %v1396 = vpop.f32.mrb[0].mxu0
    %1397 = vmatprep.mubr.bf16.mxu0 0
    %1398 = vmatmul.mubr.bf16.gmra.mrb[0].mxu0 %v1303
    %v1399 = vpop.f32.mrb[0].mxu0
    %v1400 = vadd.f32 %v1308, %v1399
    %v1401 = vpop.f32.mrb[0].mxu0
    %v1402 = vpop.f32.mrb[0].mxu0
    %v1403 = vadd.f32 %v1308, %v1402
    %v1404 = vpop.f32.mrb[0].mxu0
    %1405 = vmatprep.mubr.bf16.mxu0 0
    %1406 = vmatmul.mubr.bf16.gmra.mrb[0].mxu0 %v1304
    %v1407 = vpop.f32.mrb[0].mxu0
    %v1408 = vadd.f32 %v1308, %v1407
    %v1409 = vpop.f32.mrb[0].mxu0
    %v1410 = vpop.f32.mrb[0].mxu0
    %v1411 = vadd.f32 %v1308, %v1410
    %v1412 = vpop.f32.mrb[0].mxu0
    %1413 = vdwg.mxu0
    %v1414 = vadd.f32 %v1059, %v1392
    %v1415 = vadd.f32 %v1060, %v1395
    %v1416 = vadd.f32 %v1061, %v1400
    %v1417 = vadd.f32 %v1062, %v1403
    %v1418 = vadd.f32 %v1063, %v1408
    %v1419 = vadd.f32 %v1064, %v1411
    %v1420 = vsel %vm224, %v1414, 0.0
    %1421 = vadd.xlane.f32.xlu0 %v1420
    %v1422 = vpop.xlane.xlu0 %1421
    %v1423 = vsel %vm224, %v1415, 0.0
    %1424 = vadd.xlane.f32.xlu0 %v1423
    %v1425 = vpop.xlane.xlu0 %1424
    %v1426 = vsel %vm224, %v1416, 0.0
    %1427 = vadd.xlane.f32.xlu0 %v1426
    %v1428 = vpop.xlane.xlu0 %1427
    %v1429 = vsel %vm224, %v1417, 0.0
    %1430 = vadd.xlane.f32.xlu0 %v1429
    %v1431 = vpop.xlane.xlu0 %1430
    %v1432 = vsel %vm224, %v1418, 0.0
    %1433 = vadd.xlane.f32.xlu0 %v1432
    %v1434 = vpop.xlane.xlu0 %1433
    %v1435 = vsel %vm224, %v1419, 0.0
    %1436 = vadd.xlane.f32.xlu0 %v1435
    %v1437 = vpop.xlane.xlu0 %1436
    %v1438 = vmul.f32 %v1422, %v240
    %v1439 = vmul.f32 %v1425, %v240
    %v1440 = vmul.f32 %v1428, %v240
    %v1441 = vmul.f32 %v1431, %v240
    %v1442 = vmul.f32 %v1434, %v240
    %v1443 = vmul.f32 %v1437, %v240
    %v1444 = vsub.f32 %v1414, %v1438
    %v1445 = vsub.f32 %v1415, %v1439
    %v1446 = vsub.f32 %v1416, %v1440
    %v1447 = vsub.f32 %v1417, %v1441
    %v1448 = vsub.f32 %v1418, %v1442
    %v1449 = vsub.f32 %v1419, %v1443
    %v1450 = vmul.f32 %v1444, %v1444
    %v1451 = vmul.f32 %v1445, %v1445
    %v1452 = vmul.f32 %v1446, %v1446
    %v1453 = vmul.f32 %v1447, %v1447
    %v1454 = vmul.f32 %v1448, %v1448
    %v1455 = vmul.f32 %v1449, %v1449
    %v1456 = vsel %vm224, %v1450, 0.0
    %1457 = vadd.xlane.f32.xlu0 %v1456
    %v1458 = vpop.xlane.xlu0 %1457
    %v1459 = vsel %vm224, %v1451, 0.0
    %1460 = vadd.xlane.f32.xlu0 %v1459
    %v1461 = vpop.xlane.xlu0 %1460
    %v1462 = vsel %vm224, %v1452, 0.0
    %1463 = vadd.xlane.f32.xlu0 %v1462
    %v1464 = vpop.xlane.xlu0 %1463
    %v1465 = vsel %vm224, %v1453, 0.0
    %1466 = vadd.xlane.f32.xlu0 %v1465
    %v1467 = vpop.xlane.xlu0 %1466
    %v1468 = vsel %vm224, %v1454, 0.0
    %1469 = vadd.xlane.f32.xlu0 %v1468
    %v1470 = vpop.xlane.xlu0 %1469
    %v1471 = vsel %vm224, %v1455, 0.0
    %1472 = vadd.xlane.f32.xlu0 %v1471
    %v1473 = vpop.xlane.xlu0 %1472
    %v1474 = vmul.f32 %v1458, %v240
    %v1475 = vmul.f32 %v1461, %v240
    %v1476 = vmul.f32 %v1464, %v240
    %v1477 = vmul.f32 %v1467, %v240
    %v1478 = vmul.f32 %v1470, %v240
    %v1479 = vmul.f32 %v1473, %v240
    %v1480 = vadd.f32 %v1474, 1e-05
    %v1481 = vadd.f32 %v1475, 1e-05
    %v1482 = vadd.f32 %v1476, 1e-05
    %v1483 = vadd.f32 %v1477, 1e-05
    %v1484 = vadd.f32 %v1478, 1e-05
    %v1485 = vadd.f32 %v1479, 1e-05
    %v1486 = vrsqrt.pop %v1480
    %v1487 = vrsqrt.pop %v1481
    %v1488 = vrsqrt.pop %v1482
    %v1489 = vrsqrt.pop %v1483
    %v1490 = vrsqrt.pop %v1484
    %v1491 = vrsqrt.pop %v1485
    %v1492 = vmul.f32 %v1444, %v1486
    %v1493 = vmul.f32 %v1445, %v1487
    %v1494 = vmul.f32 %v1446, %v1488
    %v1495 = vmul.f32 %v1447, %v1489
    %v1496 = vmul.f32 %v1448, %v1490
    %v1497 = vmul.f32 %v1449, %v1491
    %v1498 = vlaneseq
    %v1499 = vshrl.u32 %v1498, 7
    %v1500 = vsub.s32 0, %v1499
    %v1501 = vrot.slane %v209, %v1500
    %v1502 = vmul.f32 %v1492, %v1501
    %v1503 = vmul.f32 %v1493, %v1501
    %v1504 = vmul.f32 %v1494, %v1501
    %v1505 = vmul.f32 %v1495, %v1501
    %v1506 = vmul.f32 %v1496, %v1501
    %v1507 = vmul.f32 %v1497, %v1501
    %v1508 = vlaneseq
    %v1509 = vshrl.u32 %v1508, 7
    %v1510 = vsub.s32 1, %v1509
    %v1511 = vrot.slane %v209, %v1510
    %v1512 = vadd.f32 %v1502, %v1511
    %v1513 = vadd.f32 %v1503, %v1511
    %v1514 = vadd.f32 %v1504, %v1511
    %v1515 = vadd.f32 %v1505, %v1511
    %v1516 = vadd.f32 %v1506, %v1511
    %v1517 = vadd.f32 %v1507, %v1511
    %v1518 = vpack.c.bf16 %v1513, %v1512
    %v1519 = vpack.c.bf16 %v1515, %v1514
    %v1520 = vpack.c.bf16 %v1517, %v1516
    %v1521 = vlaneseq
    %v1522 = vshrl.u32 %v1521, 7
    %v1523 = vsub.s32 1, %v1522
    %v1524 = vrot.slane %v159, %v1523
    %v1529 = vunpack.c.l.b16 %v155
    %v1530 = vunpack.c.l.b16 %v156
    %v1531 = vunpack.c.l.b16 %v157
    %v1532 = vunpack.c.l.b16 %v158
    %v1533 = vpack.c.b16 %v1530, %v1529
    %v1534 = vpack.c.b16 %v1532, %v1531
    %v1538 = vsel %vm224, %v1518, 0
    %v1541 = vsel %vm224, %v1519, 0
    %v1544 = vsel %vm224, %v1520, 0
    %1546 = vmatprep.subr.bf16.mxu0 0
    %1547 = vmatpush1.bf16.msra.mxu0 %v1533
    %1548 = vmatprep.subr.bf16.mxu0 0
    %1549 = vmatpush1.bf16.msra.mxu0 %v1534
    %1550 = vmatprep.subr.bf16.mxu0 0
    %1551 = vmatpush1.bf16.msra.mxu0 0
    %1552 = vmatprep.subr.bf16.mxu0 0
    %1553 = vmatpush1.bf16.msra.mxu0 0
    %1554 = vmatprep.subr.bf16.mxu0 0
    %1555 = vmatpush1.bf16.msra.mxu0 0
    %1556 = vmatprep.subr.bf16.mxu0 0
    %1557 = vmatpush1.bf16.msra.mxu0 0
    %1558 = vmatprep.subr.bf16.mxu0 0
    %1559 = vmatpush1.bf16.msra.mxu0 0
    %1560 = vmatprep.subr.bf16.mxu0 0
    %1561 = vmatpush1.bf16.msra.mxu0 0
    %1562 = vmatprep.subr.bf16.mxu0 0
    %1563 = vmatpush1.bf16.msra.mxu0 0
    %1564 = vmatprep.subr.bf16.mxu0 0
    %1565 = vmatpush1.bf16.msra.mxu0 0
    %1566 = vmatprep.subr.bf16.mxu0 0
    %1567 = vmatpush1.bf16.msra.mxu0 0
    %1568 = vmatprep.subr.bf16.mxu0 0
    %1569 = vmatpush1.bf16.msra.mxu0 0
    %1570 = vmatprep.subr.bf16.mxu0 0
    %1571 = vmatpush1.bf16.msra.mxu0 0
    %1572 = vmatprep.subr.bf16.mxu0 0
    %1573 = vmatpush1.bf16.msra.mxu0 0
    %1574 = vmatprep.subr.bf16.mxu0 0
    %1575 = vmatpush1.bf16.msra.mxu0 0
    %1576 = vmatprep.subr.bf16.mxu0 0
    %1577 = vmatpush1.bf16.msra.mxu0 0
    %1578 = vmatprep.mubr.bf16.mxu0 0
    %1579 = vmatmul.mubr.bf16.gmra.mrb[0].mxu0 %v1538
    %v1580 = vpop.f32.mrb[0].mxu0
    %v1581 = vadd.f32 %v1524, %v1580
    %v1582 = vpop.f32.mrb[0].mxu0
    %v1583 = vpop.f32.mrb[0].mxu0
    %v1584 = vadd.f32 %v1524, %v1583
    %v1585 = vpop.f32.mrb[0].mxu0
    %1586 = vmatprep.mubr.bf16.mxu0 0
    %1587 = vmatmul.mubr.bf16.gmra.mrb[0].mxu0 %v1541
    %v1588 = vpop.f32.mrb[0].mxu0
    %v1589 = vadd.f32 %v1524, %v1588
    %v1590 = vpop.f32.mrb[0].mxu0
    %v1591 = vpop.f32.mrb[0].mxu0
    %v1592 = vadd.f32 %v1524, %v1591
    %v1593 = vpop.f32.mrb[0].mxu0
    %1594 = vmatprep.mubr.bf16.mxu0 0
    %1595 = vmatmul.mubr.bf16.gmra.mrb[0].mxu0 %v1544
    %v1596 = vpop.f32.mrb[0].mxu0
    %v1597 = vadd.f32 %v1524, %v1596
    %v1598 = vpop.f32.mrb[0].mxu0
    %v1599 = vpop.f32.mrb[0].mxu0
    %v1600 = vadd.f32 %v1524, %v1599
    %v1601 = vpop.f32.mrb[0].mxu0
    %1602 = vdwg.mxu0
    %v1603 = vpack.c.bf16 %v1584, %v1581
    %v1604 = vpack.c.bf16 %v1592, %v1589
    %v1605 = vpack.c.bf16 %v1600, %v1597
    %v1609 = vunpack.c.l.b16 %v1603
    %v1610 = vunpack.c.h.b16 %v1603
    %v1611 = vunpack.c.l.b16 %v1604
    %v1612 = vunpack.c.h.b16 %v1604
    %v1613 = vunpack.c.l.b16 %v1605
    %v1614 = vunpack.c.h.b16 %v1605
    %v1615 = vpack.c.b16 %v1609, %v1609
    %v1616 = vpack.c.b16 %v1610, %v1610
    %v1617 = vpack.c.b16 %v1611, %v1611
    %v1618 = vpack.c.b16 %v1612, %v1612
    %v1619 = vpack.c.b16 %v1613, %v1613
    %v1620 = vpack.c.b16 %v1614, %v1614
    %v1627 = vsel %vm424, %v1615, 0
    %v1628 = vsel %vm424, %v1616, 0
    %v1629 = vsel %vm424, %v1617, 0
    %v1630 = vsel %vm424, %v1618, 0
    %v1631 = vsel %vm424, %v1619, 0
    %v1632 = vsel %vm424, %v1620, 0
    %v1633 = vsel %vm437, %v1615, 0
    %v1634 = vsel %vm437, %v1616, 0
    %v1635 = vsel %vm437, %v1617, 0
    %v1636 = vsel %vm437, %v1618, 0
    %v1637 = vsel %vm437, %v1619, 0
    %v1638 = vsel %vm437, %v1620, 0
    %v1645 = vunpack.c.l.b16 %v1627
    %v1646 = vunpack.c.l.b16 %v1628
    %v1647 = vunpack.c.l.b16 %v1629
    %v1648 = vunpack.c.l.b16 %v1630
    %v1649 = vunpack.c.l.b16 %v1631
    %v1650 = vunpack.c.l.b16 %v1632
    %v1651 = vpack.c.b16 %v1646, %v1645
    %v1652 = vpack.c.b16 %v1647, %v1647
    %v1653 = vpack.c.b16 %v1649, %v1648
    %v1654 = vpack.c.b16 %v1650, %v1650
    %v1661 = vunpack.c.l.b16 %v1633
    %v1662 = vunpack.c.l.b16 %v1634
    %v1663 = vunpack.c.l.b16 %v1635
    %v1664 = vunpack.c.l.b16 %v1636
    %v1665 = vunpack.c.l.b16 %v1637
    %v1666 = vunpack.c.l.b16 %v1638
    %v1667 = vpack.c.b16 %v1661, %v1661
    %v1668 = vpack.c.b16 %v1663, %v1662
    %v1669 = vpack.c.b16 %v1664, %v1664
    %v1670 = vpack.c.b16 %v1666, %v1665
    %v1673 = vsel %vm476, %v1652, %v1667
    %v1676 = vsel %vm476, %v1654, %v1669
    %v1677 = vsel %vm485, %v1615, 0
    %v1678 = vsel %vm485, %v1616, 0
    %v1679 = vsel %vm485, %v1617, 0
    %v1680 = vsel %vm485, %v1618, 0
    %v1681 = vsel %vm485, %v1619, 0
    %v1682 = vsel %vm485, %v1620, 0
    %v1683 = vsel %vm494, %v1615, 0
    %v1684 = vsel %vm494, %v1616, 0
    %v1685 = vsel %vm494, %v1617, 0
    %v1686 = vsel %vm494, %v1618, 0
    %v1687 = vsel %vm494, %v1619, 0
    %v1688 = vsel %vm494, %v1620, 0
    %v1695 = vunpack.c.l.b16 %v1677
    %v1696 = vunpack.c.l.b16 %v1678
    %v1697 = vunpack.c.l.b16 %v1679
    %v1698 = vunpack.c.l.b16 %v1680
    %v1699 = vunpack.c.l.b16 %v1681
    %v1700 = vunpack.c.l.b16 %v1682
    %v1701 = vpack.c.b16 %v1696, %v1695
    %v1702 = vpack.c.b16 %v1697, %v1697
    %v1703 = vpack.c.b16 %v1699, %v1698
    %v1704 = vpack.c.b16 %v1700, %v1700
    %v1711 = vunpack.c.l.b16 %v1683
    %v1712 = vunpack.c.l.b16 %v1684
    %v1713 = vunpack.c.l.b16 %v1685
    %v1714 = vunpack.c.l.b16 %v1686
    %v1715 = vunpack.c.l.b16 %v1687
    %v1716 = vunpack.c.l.b16 %v1688
    %v1717 = vpack.c.b16 %v1711, %v1711
    %v1718 = vpack.c.b16 %v1713, %v1712
    %v1719 = vpack.c.b16 %v1714, %v1714
    %v1720 = vpack.c.b16 %v1716, %v1715
    %v1723 = vsel %vm476, %v1702, %v1717
    %v1726 = vsel %vm476, %v1704, %v1719
    %v1727 = vpack.c.b16 %v1610, %v1609
    %1729 = vrot.lane.b32.xlu0 %v1651, 96
    %v1730 = vpop.permute.xlu0 %1729
    %1731 = vrot.lane.b32.xlu0 %v1673, 96
    %v1732 = vpop.permute.xlu0 %1731
    %1733 = vrot.lane.b32.xlu0 %v1668, 96
    %v1734 = vpop.permute.xlu0 %1733
    %v1736 = vsel %vm224, %v1727, 0
    %v1739 = vsel %vm224, %v1617, 0
    %v1742 = vsel %vm224, %v1730, 0
    %v1745 = vsel %vm224, %v1732, 0
    %v1748 = vsel %vm224, %v1734, 0
    %1750 = vmatprep.subr.bf16.mxu0 0
    %1751 = vmatpush1.bf16.xpose.msra.mxu0 %v1742
    %1752 = vmatprep.subr.bf16.mxu0 0
    %1753 = vmatpush1.bf16.xpose.msra.mxu0 %v1745
    %1754 = vmatprep.subr.bf16.mxu0 0
    %1755 = vmatpush1.bf16.xpose.msra.mxu0 %v1748
    %1756 = vmatprep.subr.bf16.mxu0 0
    %1757 = vmatpush1.bf16.xpose.msra.mxu0 0
    %1758 = vmatprep.subr.bf16.mxu0 0
    %1759 = vmatpush1.bf16.xpose.msra.mxu0 0
    %1760 = vmatprep.subr.bf16.mxu0 0
    %1761 = vmatpush1.bf16.xpose.msra.mxu0 0
    %1762 = vmatprep.subr.bf16.mxu0 0
    %1763 = vmatpush1.bf16.xpose.msra.mxu0 0
    %1764 = vmatprep.subr.bf16.mxu0 0
    %1765 = vmatpush1.bf16.xpose.msra.mxu0 0
    %1766 = vmatprep.subr.bf16.mxu0 0
    %1767 = vmatpush1.bf16.xpose.msra.mxu0 0
    %1768 = vmatprep.subr.bf16.mxu0 0
    %1769 = vmatpush1.bf16.xpose.msra.mxu0 0
    %1770 = vmatprep.subr.bf16.mxu0 0
    %1771 = vmatpush1.bf16.xpose.msra.mxu0 0
    %1772 = vmatprep.subr.bf16.mxu0 0
    %1773 = vmatpush1.bf16.xpose.msra.mxu0 0
    %1774 = vmatprep.subr.bf16.mxu0 0
    %1775 = vmatpush1.bf16.xpose.msra.mxu0 0
    %1776 = vmatprep.subr.bf16.mxu0 0
    %1777 = vmatpush1.bf16.xpose.msra.mxu0 0
    %1778 = vmatprep.subr.bf16.mxu0 0
    %1779 = vmatpush1.bf16.xpose.msra.mxu0 0
    %1780 = vmatprep.subr.bf16.mxu0 0
    %1781 = vmatpush1.bf16.xpose.msra.mxu0 0
    %1782 = vmatprep.mubr.bf16.mxu0 0
    %1783 = vmatmul.mubr.bf16.gmra.mrb[0].mxu0 %v1736
    %v1784 = vpop.f32.mrb[0].mxu0
    %v1785 = vadd.f32 0.0, %v1784
    %v1786 = vpop.f32.mrb[0].mxu0
    %v1787 = vpop.f32.mrb[0].mxu0
    %v1788 = vadd.f32 0.0, %v1787
    %v1789 = vpop.f32.mrb[0].mxu0
    %1790 = vmatprep.mubr.bf16.mxu0 0
    %1791 = vmatmul.mubr.bf16.gmra.mrb[0].mxu0 %v1739
    %v1792 = vpop.f32.mrb[0].mxu0
    %v1793 = vadd.f32 0.0, %v1792
    %v1794 = vpop.f32.mrb[0].mxu0
    %v1795 = vpop.f32.mrb[0].mxu0
    %v1796 = vpop.f32.mrb[0].mxu0
    %1797 = vdwg.mxu0
    %v1798 = vpack.c.b16 %v1613, %v1612
    %1800 = vrot.lane.b32.xlu0 %v1653, 96
    %v1801 = vpop.permute.xlu0 %1800
    %1802 = vrot.lane.b32.xlu0 %v1676, 96
    %v1803 = vpop.permute.xlu0 %1802
    %1804 = vrot.lane.b32.xlu0 %v1670, 96
    %v1805 = vpop.permute.xlu0 %1804
    %v1807 = vsel %vm224, %v1798, 0
    %v1810 = vsel %vm224, %v1620, 0
    %v1813 = vsel %vm224, %v1801, 0
    %v1816 = vsel %vm224, %v1803, 0
    %v1819 = vsel %vm224, %v1805, 0
    %1821 = vmatprep.subr.bf16.mxu0 0
    %1822 = vmatpush1.bf16.xpose.msra.mxu0 %v1813
    %1823 = vmatprep.subr.bf16.mxu0 0
    %1824 = vmatpush1.bf16.xpose.msra.mxu0 %v1816
    %1825 = vmatprep.subr.bf16.mxu0 0
    %1826 = vmatpush1.bf16.xpose.msra.mxu0 %v1819
    %1827 = vmatprep.subr.bf16.mxu0 0
    %1828 = vmatpush1.bf16.xpose.msra.mxu0 0
    %1829 = vmatprep.subr.bf16.mxu0 0
    %1830 = vmatpush1.bf16.xpose.msra.mxu0 0
    %1831 = vmatprep.subr.bf16.mxu0 0
    %1832 = vmatpush1.bf16.xpose.msra.mxu0 0
    %1833 = vmatprep.subr.bf16.mxu0 0
    %1834 = vmatpush1.bf16.xpose.msra.mxu0 0
    %1835 = vmatprep.subr.bf16.mxu0 0
    %1836 = vmatpush1.bf16.xpose.msra.mxu0 0
    %1837 = vmatprep.subr.bf16.mxu0 0
    %1838 = vmatpush1.bf16.xpose.msra.mxu0 0
    %1839 = vmatprep.subr.bf16.mxu0 0
    %1840 = vmatpush1.bf16.xpose.msra.mxu0 0
    %1841 = vmatprep.subr.bf16.mxu0 0
    %1842 = vmatpush1.bf16.xpose.msra.mxu0 0
    %1843 = vmatprep.subr.bf16.mxu0 0
    %1844 = vmatpush1.bf16.xpose.msra.mxu0 0
    %1845 = vmatprep.subr.bf16.mxu0 0
    %1846 = vmatpush1.bf16.xpose.msra.mxu0 0
    %1847 = vmatprep.subr.bf16.mxu0 0
    %1848 = vmatpush1.bf16.xpose.msra.mxu0 0
    %1849 = vmatprep.subr.bf16.mxu0 0
    %1850 = vmatpush1.bf16.xpose.msra.mxu0 0
    %1851 = vmatprep.subr.bf16.mxu0 0
    %1852 = vmatpush1.bf16.xpose.msra.mxu0 0
    %1853 = vmatprep.mubr.bf16.mxu0 0
    %1854 = vmatmul.mubr.bf16.gmra.mrb[0].mxu0 %v1807
    %v1855 = vpop.f32.mrb[0].mxu0
    %v1856 = vadd.f32 0.0, %v1855
    %v1857 = vpop.f32.mrb[0].mxu0
    %v1858 = vpop.f32.mrb[0].mxu0
    %v1859 = vadd.f32 0.0, %v1858
    %v1860 = vpop.f32.mrb[0].mxu0
    %1861 = vmatprep.mubr.bf16.mxu0 0
    %1862 = vmatmul.mubr.bf16.gmra.mrb[0].mxu0 %v1810
    %v1863 = vpop.f32.mrb[0].mxu0
    %v1864 = vadd.f32 0.0, %v1863
    %v1865 = vpop.f32.mrb[0].mxu0
    %v1866 = vpop.f32.mrb[0].mxu0
    %v1867 = vpop.f32.mrb[0].mxu0
    %1868 = vdwg.mxu0
    %v1869 = vsel %vm682, %v1785, -1e+30
    %v1870 = vsel %vm682, %v1788, -1e+30
    %v1871 = vsel %vm682, %v1793, -1e+30
    %v1872 = vsel %vm682, %v1856, -1e+30
    %v1873 = vsel %vm682, %v1859, -1e+30
    %v1874 = vsel %vm682, %v1864, -1e+30
    %v1875 = vsel %vm689, %v1869, -inf
    %1876 = vmax.xlane.f32.xlu0 %v1875
    %v1877 = vpop.xlane.xlu0 %1876
    %v1878 = vsel %vm689, %v1870, -inf
    %1879 = vmax.xlane.f32.xlu0 %v1878
    %v1880 = vpop.xlane.xlu0 %1879
    %v1881 = vsel %vm689, %v1871, -inf
    %1882 = vmax.xlane.f32.xlu0 %v1881
    %v1883 = vpop.xlane.xlu0 %1882
    %v1884 = vsel %vm689, %v1872, -inf
    %1885 = vmax.xlane.f32.xlu0 %v1884
    %v1886 = vpop.xlane.xlu0 %1885
    %v1887 = vsel %vm689, %v1873, -inf
    %1888 = vmax.xlane.f32.xlu0 %v1887
    %v1889 = vpop.xlane.xlu0 %1888
    %v1890 = vsel %vm689, %v1874, -inf
    %1891 = vmax.xlane.f32.xlu0 %v1890
    %v1892 = vpop.xlane.xlu0 %1891
    %v1893 = vsel %vm682, %v1877, -1e+30
    %v1894 = vsel %vm682, %v1880, -1e+30
    %v1895 = vsel %vm682, %v1883, -1e+30
    %v1896 = vsel %vm682, %v1886, -1e+30
    %v1897 = vsel %vm682, %v1889, -1e+30
    %v1898 = vsel %vm682, %v1892, -1e+30
    %v1899 = vsel %vm715, %v1785, -1e+30
    %v1900 = vsel %vm715, %v1788, -1e+30
    %v1901 = vsel %vm715, %v1793, -1e+30
    %v1902 = vsel %vm715, %v1856, -1e+30
    %v1903 = vsel %vm715, %v1859, -1e+30
    %v1904 = vsel %vm715, %v1864, -1e+30
    %v1905 = vsel %vm689, %v1899, -inf
    %1906 = vmax.xlane.f32.xlu0 %v1905
    %v1907 = vpop.xlane.xlu0 %1906
    %v1908 = vsel %vm689, %v1900, -inf
    %1909 = vmax.xlane.f32.xlu0 %v1908
    %v1910 = vpop.xlane.xlu0 %1909
    %v1911 = vsel %vm689, %v1901, -inf
    %1912 = vmax.xlane.f32.xlu0 %v1911
    %v1913 = vpop.xlane.xlu0 %1912
    %v1914 = vsel %vm689, %v1902, -inf
    %1915 = vmax.xlane.f32.xlu0 %v1914
    %v1916 = vpop.xlane.xlu0 %1915
    %v1917 = vsel %vm689, %v1903, -inf
    %1918 = vmax.xlane.f32.xlu0 %v1917
    %v1919 = vpop.xlane.xlu0 %1918
    %v1920 = vsel %vm689, %v1904, -inf
    %1921 = vmax.xlane.f32.xlu0 %v1920
    %v1922 = vpop.xlane.xlu0 %1921
    %v1923 = vsel %vm715, %v1907, %v1893
    %v1924 = vsel %vm715, %v1910, %v1894
    %v1925 = vsel %vm715, %v1913, %v1895
    %v1926 = vsel %vm715, %v1916, %v1896
    %v1927 = vsel %vm715, %v1919, %v1897
    %v1928 = vsel %vm715, %v1922, %v1898
    %v1929 = vsub.f32 %v1785, %v1923
    %v1930 = vsub.f32 %v1788, %v1924
    %v1931 = vsub.f32 %v1793, %v1925
    %v1932 = vsub.f32 %v1856, %v1926
    %v1933 = vsub.f32 %v1859, %v1927
    %v1934 = vsub.f32 %v1864, %v1928
    %v1935 = vmul.f32 %v1929, 1.442695
    %v1936 = vpow.pop %v1935
    %v1937 = vmul.f32 %v1930, 1.442695
    %v1938 = vpow.pop %v1937
    %v1939 = vmul.f32 %v1931, 1.442695
    %v1940 = vpow.pop %v1939
    %v1941 = vmul.f32 %v1932, 1.442695
    %v1942 = vpow.pop %v1941
    %v1943 = vmul.f32 %v1933, 1.442695
    %v1944 = vpow.pop %v1943
    %v1945 = vmul.f32 %v1934, 1.442695
    %v1946 = vpow.pop %v1945
    %v1947 = vsel %vm682, %v1936, 0.0
    %v1948 = vsel %vm682, %v1938, 0.0
    %v1949 = vsel %vm682, %v1940, 0.0
    %v1950 = vsel %vm682, %v1942, 0.0
    %v1951 = vsel %vm682, %v1944, 0.0
    %v1952 = vsel %vm682, %v1946, 0.0
    %v1953 = vsel %vm689, %v1947, 0.0
    %1954 = vadd.xlane.f32.xlu0 %v1953
    %v1955 = vpop.xlane.xlu0 %1954
    %v1956 = vsel %vm689, %v1948, 0.0
    %1957 = vadd.xlane.f32.xlu0 %v1956
    %v1958 = vpop.xlane.xlu0 %1957
    %v1959 = vsel %vm689, %v1949, 0.0
    %1960 = vadd.xlane.f32.xlu0 %v1959
    %v1961 = vpop.xlane.xlu0 %1960
    %v1962 = vsel %vm689, %v1950, 0.0
    %1963 = vadd.xlane.f32.xlu0 %v1962
    %v1964 = vpop.xlane.xlu0 %1963
    %v1965 = vsel %vm689, %v1951, 0.0
    %1966 = vadd.xlane.f32.xlu0 %v1965
    %v1967 = vpop.xlane.xlu0 %1966
    %v1968 = vsel %vm689, %v1952, 0.0
    %1969 = vadd.xlane.f32.xlu0 %v1968
    %v1970 = vpop.xlane.xlu0 %1969
    %v1971 = vrcp.pop %v1955
    %v1972 = vrcp.pop %v1958
    %v1973 = vrcp.pop %v1961
    %v1974 = vrcp.pop %v1964
    %v1975 = vrcp.pop %v1967
    %v1976 = vrcp.pop %v1970
    %v1977 = vsel %vm682, %v1971, 0.0
    %v1978 = vsel %vm682, %v1972, 0.0
    %v1979 = vsel %vm682, %v1973, 0.0
    %v1980 = vsel %vm682, %v1974, 0.0
    %v1981 = vsel %vm682, %v1975, 0.0
    %v1982 = vsel %vm682, %v1976, 0.0
    %v1983 = vsel %vm715, %v1936, 0.0
    %v1984 = vsel %vm715, %v1938, 0.0
    %v1985 = vsel %vm715, %v1940, 0.0
    %v1986 = vsel %vm715, %v1942, 0.0
    %v1987 = vsel %vm715, %v1944, 0.0
    %v1988 = vsel %vm715, %v1946, 0.0
    %v1989 = vsel %vm689, %v1983, 0.0
    %1990 = vadd.xlane.f32.xlu0 %v1989
    %v1991 = vpop.xlane.xlu0 %1990
    %v1992 = vsel %vm689, %v1984, 0.0
    %1993 = vadd.xlane.f32.xlu0 %v1992
    %v1994 = vpop.xlane.xlu0 %1993
    %v1995 = vsel %vm689, %v1985, 0.0
    %1996 = vadd.xlane.f32.xlu0 %v1995
    %v1997 = vpop.xlane.xlu0 %1996
    %v1998 = vsel %vm689, %v1986, 0.0
    %1999 = vadd.xlane.f32.xlu0 %v1998
    %v2000 = vpop.xlane.xlu0 %1999
    %v2001 = vsel %vm689, %v1987, 0.0
    %2002 = vadd.xlane.f32.xlu0 %v2001
    %v2003 = vpop.xlane.xlu0 %2002
    %v2004 = vsel %vm689, %v1988, 0.0
    %2005 = vadd.xlane.f32.xlu0 %v2004
    %v2006 = vpop.xlane.xlu0 %2005
    %v2007 = vrcp.pop %v1991
    %v2008 = vrcp.pop %v1994
    %v2009 = vrcp.pop %v1997
    %v2010 = vrcp.pop %v2000
    %v2011 = vrcp.pop %v2003
    %v2012 = vrcp.pop %v2006
    %v2013 = vsel %vm715, %v2007, %v1977
    %v2014 = vsel %vm715, %v2008, %v1978
    %v2015 = vsel %vm715, %v2009, %v1979
    %v2016 = vsel %vm715, %v2010, %v1980
    %v2017 = vsel %vm715, %v2011, %v1981
    %v2018 = vsel %vm715, %v2012, %v1982
    %v2019 = vmul.f32 %v1936, %v2013
    %v2020 = vmul.f32 %v1938, %v2014
    %v2021 = vmul.f32 %v1940, %v2015
    %v2022 = vmul.f32 %v1942, %v2016
    %v2023 = vmul.f32 %v1944, %v2017
    %v2024 = vmul.f32 %v1946, %v2018
    %v2025 = vpack.c.bf16 %v2020, %v2019
    %v2026 = vpack.c.bf16 %v2021, %v2021
    %v2027 = vpack.c.bf16 %v2023, %v2022
    %v2028 = vpack.c.bf16 %v2024, %v2024
    %2030 = vrot.lane.b32.xlu0 %v1701, 64
    %v2031 = vpop.permute.xlu0 %2030
    %2032 = vrot.lane.b32.xlu0 %v1723, 64
    %v2033 = vpop.permute.xlu0 %2032
    %2034 = vrot.lane.b32.xlu0 %v1718, 64
    %v2035 = vpop.permute.xlu0 %2034
    %v2040 = vsel %vm689, %v2025, 0
    %v2043 = vsel %vm689, %v2026, 0
    %2045 = vmatprep.subr.bf16.mxu0 0
    %2046 = vmatpush1.bf16.msra.mxu0 %v2031
    %2047 = vmatprep.subr.bf16.mxu0 0
    %2048 = vmatpush1.bf16.msra.mxu0 %v2033
    %2049 = vmatprep.subr.bf16.mxu0 0
    %2050 = vmatpush1.bf16.msra.mxu0 %v2035
    %2051 = vmatprep.subr.bf16.mxu0 0
    %2052 = vmatpush1.bf16.msra.mxu0 0
    %2053 = vmatprep.subr.bf16.mxu0 0
    %2054 = vmatpush1.bf16.msra.mxu0 0
    %2055 = vmatprep.subr.bf16.mxu0 0
    %2056 = vmatpush1.bf16.msra.mxu0 0
    %2057 = vmatprep.subr.bf16.mxu0 0
    %2058 = vmatpush1.bf16.msra.mxu0 0
    %2059 = vmatprep.subr.bf16.mxu0 0
    %2060 = vmatpush1.bf16.msra.mxu0 0
    %2061 = vmatprep.subr.bf16.mxu0 0
    %2062 = vmatpush1.bf16.msra.mxu0 0
    %2063 = vmatprep.subr.bf16.mxu0 0
    %2064 = vmatpush1.bf16.msra.mxu0 0
    %2065 = vmatprep.subr.bf16.mxu0 0
    %2066 = vmatpush1.bf16.msra.mxu0 0
    %2067 = vmatprep.subr.bf16.mxu0 0
    %2068 = vmatpush1.bf16.msra.mxu0 0
    %2069 = vmatprep.subr.bf16.mxu0 0
    %2070 = vmatpush1.bf16.msra.mxu0 0
    %2071 = vmatprep.subr.bf16.mxu0 0
    %2072 = vmatpush1.bf16.msra.mxu0 0
    %2073 = vmatprep.subr.bf16.mxu0 0
    %2074 = vmatpush1.bf16.msra.mxu0 0
    %2075 = vmatprep.subr.bf16.mxu0 0
    %2076 = vmatpush1.bf16.msra.mxu0 0
    %2077 = vmatprep.mubr.bf16.mxu0 0
    %2078 = vmatmul.mubr.bf16.gmra.mrb[0].mxu0 %v2040
    %v2079 = vpop.f32.mrb[0].mxu0
    %v2080 = vadd.f32 0.0, %v2079
    %v2081 = vpop.f32.mrb[0].mxu0
    %v2082 = vpop.f32.mrb[0].mxu0
    %v2083 = vadd.f32 0.0, %v2082
    %v2084 = vpop.f32.mrb[0].mxu0
    %2085 = vmatprep.mubr.bf16.mxu0 0
    %2086 = vmatmul.mubr.bf16.gmra.mrb[0].mxu0 %v2043
    %v2087 = vpop.f32.mrb[0].mxu0
    %v2088 = vadd.f32 0.0, %v2087
    %v2089 = vpop.f32.mrb[0].mxu0
    %v2090 = vpop.f32.mrb[0].mxu0
    %v2091 = vpop.f32.mrb[0].mxu0
    %2092 = vdwg.mxu0
    %2094 = vrot.lane.b32.xlu0 %v1703, 64
    %v2095 = vpop.permute.xlu0 %2094
    %2096 = vrot.lane.b32.xlu0 %v1726, 64
    %v2097 = vpop.permute.xlu0 %2096
    %2098 = vrot.lane.b32.xlu0 %v1720, 64
    %v2099 = vpop.permute.xlu0 %2098
    %v2104 = vsel %vm689, %v2027, 0
    %v2107 = vsel %vm689, %v2028, 0
    %2109 = vmatprep.subr.bf16.mxu0 0
    %2110 = vmatpush1.bf16.msra.mxu0 %v2095
    %2111 = vmatprep.subr.bf16.mxu0 0
    %2112 = vmatpush1.bf16.msra.mxu0 %v2097
    %2113 = vmatprep.subr.bf16.mxu0 0
    %2114 = vmatpush1.bf16.msra.mxu0 %v2099
    %2115 = vmatprep.subr.bf16.mxu0 0
    %2116 = vmatpush1.bf16.msra.mxu0 0
    %2117 = vmatprep.subr.bf16.mxu0 0
    %2118 = vmatpush1.bf16.msra.mxu0 0
    %2119 = vmatprep.subr.bf16.mxu0 0
    %2120 = vmatpush1.bf16.msra.mxu0 0
    %2121 = vmatprep.subr.bf16.mxu0 0
    %2122 = vmatpush1.bf16.msra.mxu0 0
    %2123 = vmatprep.subr.bf16.mxu0 0
    %2124 = vmatpush1.bf16.msra.mxu0 0
    %2125 = vmatprep.subr.bf16.mxu0 0
    %2126 = vmatpush1.bf16.msra.mxu0 0
    %2127 = vmatprep.subr.bf16.mxu0 0
    %2128 = vmatpush1.bf16.msra.mxu0 0
    %2129 = vmatprep.subr.bf16.mxu0 0
    %2130 = vmatpush1.bf16.msra.mxu0 0
    %2131 = vmatprep.subr.bf16.mxu0 0
    %2132 = vmatpush1.bf16.msra.mxu0 0
    %2133 = vmatprep.subr.bf16.mxu0 0
    %2134 = vmatpush1.bf16.msra.mxu0 0
    %2135 = vmatprep.subr.bf16.mxu0 0
    %2136 = vmatpush1.bf16.msra.mxu0 0
    %2137 = vmatprep.subr.bf16.mxu0 0
    %2138 = vmatpush1.bf16.msra.mxu0 0
    %2139 = vmatprep.subr.bf16.mxu0 0
    %2140 = vmatpush1.bf16.msra.mxu0 0
    %2141 = vmatprep.mubr.bf16.mxu0 0
    %2142 = vmatmul.mubr.bf16.gmra.mrb[0].mxu0 %v2104
    %v2143 = vpop.f32.mrb[0].mxu0
    %v2144 = vadd.f32 0.0, %v2143
    %v2145 = vpop.f32.mrb[0].mxu0
    %v2146 = vpop.f32.mrb[0].mxu0
    %v2147 = vadd.f32 0.0, %v2146
    %v2148 = vpop.f32.mrb[0].mxu0
    %2149 = vmatprep.mubr.bf16.mxu0 0
    %2150 = vmatmul.mubr.bf16.gmra.mrb[0].mxu0 %v2107
    %v2151 = vpop.f32.mrb[0].mxu0
    %v2152 = vadd.f32 0.0, %v2151
    %v2153 = vpop.f32.mrb[0].mxu0
    %v2154 = vpop.f32.mrb[0].mxu0
    %v2155 = vpop.f32.mrb[0].mxu0
    %2156 = vdwg.mxu0
    %v2157 = vpack.c.bf16 %v2083, %v2080
    %v2158 = vpack.c.bf16 %v2144, %v2088
    %v2159 = vpack.c.bf16 %v2152, %v2147
    %v2160 = vlaneseq
    %v2161 = vshrl.u32 %v2160, 7
    %v2162 = vsub.s32 4, %v2161
    %v2163 = vrot.slane %v209, %v2162
    %v2168 = vunpack.c.l.b16 %v164
    %v2169 = vunpack.c.l.b16 %v165
    %v2170 = vunpack.c.l.b16 %v166
    %v2171 = vunpack.c.l.b16 %v167
    %v2172 = vpack.c.b16 %v2169, %v2168
    %v2173 = vpack.c.b16 %v2171, %v2170
    %v2177 = vsel %vm224, %v2157, 0
    %v2180 = vsel %vm224, %v2158, 0
    %v2183 = vsel %vm224, %v2159, 0
    %2185 = vmatprep.subr.bf16.mxu0 0
    %2186 = vmatpush1.bf16.msra.mxu0 %v2172
    %2187 = vmatprep.subr.bf16.mxu0 0
    %2188 = vmatpush1.bf16.msra.mxu0 %v2173
    %2189 = vmatprep.subr.bf16.mxu0 0
    %2190 = vmatpush1.bf16.msra.mxu0 0
    %2191 = vmatprep.subr.bf16.mxu0 0
    %2192 = vmatpush1.bf16.msra.mxu0 0
    %2193 = vmatprep.subr.bf16.mxu0 0
    %2194 = vmatpush1.bf16.msra.mxu0 0
    %2195 = vmatprep.subr.bf16.mxu0 0
    %2196 = vmatpush1.bf16.msra.mxu0 0
    %2197 = vmatprep.subr.bf16.mxu0 0
    %2198 = vmatpush1.bf16.msra.mxu0 0
    %2199 = vmatprep.subr.bf16.mxu0 0
    %2200 = vmatpush1.bf16.msra.mxu0 0
    %2201 = vmatprep.subr.bf16.mxu0 0
    %2202 = vmatpush1.bf16.msra.mxu0 0
    %2203 = vmatprep.subr.bf16.mxu0 0
    %2204 = vmatpush1.bf16.msra.mxu0 0
    %2205 = vmatprep.subr.bf16.mxu0 0
    %2206 = vmatpush1.bf16.msra.mxu0 0
    %2207 = vmatprep.subr.bf16.mxu0 0
    %2208 = vmatpush1.bf16.msra.mxu0 0
    %2209 = vmatprep.subr.bf16.mxu0 0
    %2210 = vmatpush1.bf16.msra.mxu0 0
    %2211 = vmatprep.subr.bf16.mxu0 0
    %2212 = vmatpush1.bf16.msra.mxu0 0
    %2213 = vmatprep.subr.bf16.mxu0 0
    %2214 = vmatpush1.bf16.msra.mxu0 0
    %2215 = vmatprep.subr.bf16.mxu0 0
    %2216 = vmatpush1.bf16.msra.mxu0 0
    %2217 = vmatprep.mubr.bf16.mxu0 0
    %2218 = vmatmul.mubr.bf16.gmra.mrb[0].mxu0 %v2177
    %v2219 = vpop.f32.mrb[0].mxu0
    %v2220 = vadd.f32 %v2163, %v2219
    %v2221 = vpop.f32.mrb[0].mxu0
    %v2222 = vpop.f32.mrb[0].mxu0
    %v2223 = vadd.f32 %v2163, %v2222
    %v2224 = vpop.f32.mrb[0].mxu0
    %2225 = vmatprep.mubr.bf16.mxu0 0
    %2226 = vmatmul.mubr.bf16.gmra.mrb[0].mxu0 %v2180
    %v2227 = vpop.f32.mrb[0].mxu0
    %v2228 = vadd.f32 %v2163, %v2227
    %v2229 = vpop.f32.mrb[0].mxu0
    %v2230 = vpop.f32.mrb[0].mxu0
    %v2231 = vadd.f32 %v2163, %v2230
    %v2232 = vpop.f32.mrb[0].mxu0
    %2233 = vmatprep.mubr.bf16.mxu0 0
    %2234 = vmatmul.mubr.bf16.gmra.mrb[0].mxu0 %v2183
    %v2235 = vpop.f32.mrb[0].mxu0
    %v2236 = vadd.f32 %v2163, %v2235
    %v2237 = vpop.f32.mrb[0].mxu0
    %v2238 = vpop.f32.mrb[0].mxu0
    %v2239 = vadd.f32 %v2163, %v2238
    %v2240 = vpop.f32.mrb[0].mxu0
    %2241 = vdwg.mxu0
    %v2242 = vadd.f32 %v1414, %v2220
    %v2243 = vadd.f32 %v1415, %v2223
    %v2244 = vadd.f32 %v1416, %v2228
    %v2245 = vadd.f32 %v1417, %v2231
    %v2246 = vadd.f32 %v1418, %v2236
    %v2247 = vadd.f32 %v1419, %v2239
    %v2248 = vsel %vm224, %v2242, 0.0
    %2249 = vadd.xlane.f32.xlu0 %v2248
    %v2250 = vpop.xlane.xlu0 %2249
    %v2251 = vsel %vm224, %v2243, 0.0
    %2252 = vadd.xlane.f32.xlu0 %v2251
    %v2253 = vpop.xlane.xlu0 %2252
    %v2254 = vsel %vm224, %v2244, 0.0
    %2255 = vadd.xlane.f32.xlu0 %v2254
    %v2256 = vpop.xlane.xlu0 %2255
    %v2257 = vsel %vm224, %v2245, 0.0
    %2258 = vadd.xlane.f32.xlu0 %v2257
    %v2259 = vpop.xlane.xlu0 %2258
    %v2260 = vsel %vm224, %v2246, 0.0
    %2261 = vadd.xlane.f32.xlu0 %v2260
    %v2262 = vpop.xlane.xlu0 %2261
    %v2263 = vsel %vm224, %v2247, 0.0
    %2264 = vadd.xlane.f32.xlu0 %v2263
    %v2265 = vpop.xlane.xlu0 %2264
    %v2266 = vmul.f32 %v2250, %v240
    %v2267 = vmul.f32 %v2253, %v240
    %v2268 = vmul.f32 %v2256, %v240
    %v2269 = vmul.f32 %v2259, %v240
    %v2270 = vmul.f32 %v2262, %v240
    %v2271 = vmul.f32 %v2265, %v240
    %v2272 = vsub.f32 %v2242, %v2266
    %v2273 = vsub.f32 %v2243, %v2267
    %v2274 = vsub.f32 %v2244, %v2268
    %v2275 = vsub.f32 %v2245, %v2269
    %v2276 = vsub.f32 %v2246, %v2270
    %v2277 = vsub.f32 %v2247, %v2271
    %v2278 = vmul.f32 %v2272, %v2272
    %v2279 = vmul.f32 %v2273, %v2273
    %v2280 = vmul.f32 %v2274, %v2274
    %v2281 = vmul.f32 %v2275, %v2275
    %v2282 = vmul.f32 %v2276, %v2276
    %v2283 = vmul.f32 %v2277, %v2277
    %v2284 = vsel %vm224, %v2278, 0.0
    %2285 = vadd.xlane.f32.xlu0 %v2284
    %v2286 = vpop.xlane.xlu0 %2285
    %v2287 = vsel %vm224, %v2279, 0.0
    %2288 = vadd.xlane.f32.xlu0 %v2287
    %v2289 = vpop.xlane.xlu0 %2288
    %v2290 = vsel %vm224, %v2280, 0.0
    %2291 = vadd.xlane.f32.xlu0 %v2290
    %v2292 = vpop.xlane.xlu0 %2291
    %v2293 = vsel %vm224, %v2281, 0.0
    %2294 = vadd.xlane.f32.xlu0 %v2293
    %v2295 = vpop.xlane.xlu0 %2294
    %v2296 = vsel %vm224, %v2282, 0.0
    %2297 = vadd.xlane.f32.xlu0 %v2296
    %v2298 = vpop.xlane.xlu0 %2297
    %v2299 = vsel %vm224, %v2283, 0.0
    %2300 = vadd.xlane.f32.xlu0 %v2299
    %v2301 = vpop.xlane.xlu0 %2300
    %v2302 = vmul.f32 %v2286, %v240
    %v2303 = vmul.f32 %v2289, %v240
    %v2304 = vmul.f32 %v2292, %v240
    %v2305 = vmul.f32 %v2295, %v240
    %v2306 = vmul.f32 %v2298, %v240
    %v2307 = vmul.f32 %v2301, %v240
    %v2308 = vadd.f32 %v2302, 1e-05
    %v2309 = vadd.f32 %v2303, 1e-05
    %v2310 = vadd.f32 %v2304, 1e-05
    %v2311 = vadd.f32 %v2305, 1e-05
    %v2312 = vadd.f32 %v2306, 1e-05
    %v2313 = vadd.f32 %v2307, 1e-05
    %v2314 = vrsqrt.pop %v2308
    %v2315 = vrsqrt.pop %v2309
    %v2316 = vrsqrt.pop %v2310
    %v2317 = vrsqrt.pop %v2311
    %v2318 = vrsqrt.pop %v2312
    %v2319 = vrsqrt.pop %v2313
    %v2320 = vmul.f32 %v2272, %v2314
    %v2321 = vmul.f32 %v2273, %v2315
    %v2322 = vmul.f32 %v2274, %v2316
    %v2323 = vmul.f32 %v2275, %v2317
    %v2324 = vmul.f32 %v2276, %v2318
    %v2325 = vmul.f32 %v2277, %v2319
    %v2326 = vlaneseq
    %v2327 = vshrl.u32 %v2326, 7
    %v2328 = vsub.s32 2, %v2327
    %v2329 = vrot.slane %v209, %v2328
    %v2330 = vmul.f32 %v2320, %v2329
    %v2331 = vmul.f32 %v2321, %v2329
    %v2332 = vmul.f32 %v2322, %v2329
    %v2333 = vmul.f32 %v2323, %v2329
    %v2334 = vmul.f32 %v2324, %v2329
    %v2335 = vmul.f32 %v2325, %v2329
    %v2336 = vlaneseq
    %v2337 = vshrl.u32 %v2336, 7
    %v2338 = vsub.s32 3, %v2337
    %v2339 = vrot.slane %v209, %v2338
    %v2340 = vadd.f32 %v2330, %v2339
    %v2341 = vadd.f32 %v2331, %v2339
    %v2342 = vadd.f32 %v2332, %v2339
    %v2343 = vadd.f32 %v2333, %v2339
    %v2344 = vadd.f32 %v2334, %v2339
    %v2345 = vadd.f32 %v2335, %v2339
    %v2346 = vpack.c.bf16 %v2341, %v2340
    %v2347 = vpack.c.bf16 %v2343, %v2342
    %v2348 = vpack.c.bf16 %v2345, %v2344
    %v2349 = vlaneseq
    %v2350 = vshrl.u32 %v2349, 7
    %v2351 = vsub.s32 1, %v2350
    %v2352 = vrot.slane %v210, %v2351
    %v2357 = vunpack.c.l.b16 %v172
    %v2358 = vunpack.c.l.b16 %v173
    %v2359 = vunpack.c.l.b16 %v174
    %v2360 = vunpack.c.l.b16 %v175
    %v2361 = vpack.c.b16 %v2358, %v2357
    %v2362 = vpack.c.b16 %v2360, %v2359
    %v2366 = vsel %vm224, %v2346, 0
    %v2369 = vsel %vm224, %v2347, 0
    %v2372 = vsel %vm224, %v2348, 0
    %2374 = vmatprep.subr.bf16.mxu0 0
    %2375 = vmatpush1.bf16.msra.mxu0 %v2361
    %2376 = vmatprep.subr.bf16.mxu0 0
    %2377 = vmatpush1.bf16.msra.mxu0 %v2362
    %2378 = vmatprep.subr.bf16.mxu0 0
    %2379 = vmatpush1.bf16.msra.mxu0 0
    %2380 = vmatprep.subr.bf16.mxu0 0
    %2381 = vmatpush1.bf16.msra.mxu0 0
    %2382 = vmatprep.subr.bf16.mxu0 0
    %2383 = vmatpush1.bf16.msra.mxu0 0
    %2384 = vmatprep.subr.bf16.mxu0 0
    %2385 = vmatpush1.bf16.msra.mxu0 0
    %2386 = vmatprep.subr.bf16.mxu0 0
    %2387 = vmatpush1.bf16.msra.mxu0 0
    %2388 = vmatprep.subr.bf16.mxu0 0
    %2389 = vmatpush1.bf16.msra.mxu0 0
    %2390 = vmatprep.subr.bf16.mxu0 0
    %2391 = vmatpush1.bf16.msra.mxu0 0
    %2392 = vmatprep.subr.bf16.mxu0 0
    %2393 = vmatpush1.bf16.msra.mxu0 0
    %2394 = vmatprep.subr.bf16.mxu0 0
    %2395 = vmatpush1.bf16.msra.mxu0 0
    %2396 = vmatprep.subr.bf16.mxu0 0
    %2397 = vmatpush1.bf16.msra.mxu0 0
    %2398 = vmatprep.subr.bf16.mxu0 0
    %2399 = vmatpush1.bf16.msra.mxu0 0
    %2400 = vmatprep.subr.bf16.mxu0 0
    %2401 = vmatpush1.bf16.msra.mxu0 0
    %2402 = vmatprep.subr.bf16.mxu0 0
    %2403 = vmatpush1.bf16.msra.mxu0 0
    %2404 = vmatprep.subr.bf16.mxu0 0
    %2405 = vmatpush1.bf16.msra.mxu0 0
    %2406 = vmatprep.mubr.bf16.mxu0 0
    %2407 = vmatmul.mubr.bf16.gmra.mrb[0].mxu0 %v2366
    %v2408 = vpop.f32.mrb[0].mxu0
    %v2409 = vadd.f32 %v2352, %v2408
    %v2410 = vpop.f32.mrb[0].mxu0
    %v2411 = vpop.f32.mrb[0].mxu0
    %v2412 = vadd.f32 %v2352, %v2411
    %v2413 = vpop.f32.mrb[0].mxu0
    %2414 = vmatprep.mubr.bf16.mxu0 0
    %2415 = vmatmul.mubr.bf16.gmra.mrb[0].mxu0 %v2369
    %v2416 = vpop.f32.mrb[0].mxu0
    %v2417 = vadd.f32 %v2352, %v2416
    %v2418 = vpop.f32.mrb[0].mxu0
    %v2419 = vpop.f32.mrb[0].mxu0
    %v2420 = vadd.f32 %v2352, %v2419
    %v2421 = vpop.f32.mrb[0].mxu0
    %2422 = vmatprep.mubr.bf16.mxu0 0
    %2423 = vmatmul.mubr.bf16.gmra.mrb[0].mxu0 %v2372
    %v2424 = vpop.f32.mrb[0].mxu0
    %v2425 = vadd.f32 %v2352, %v2424
    %v2426 = vpop.f32.mrb[0].mxu0
    %v2427 = vpop.f32.mrb[0].mxu0
    %v2428 = vadd.f32 %v2352, %v2427
    %v2429 = vpop.f32.mrb[0].mxu0
    %2430 = vdwg.mxu0
    %v2431 = vmul.f32 %v2409, %v2409
    %v2432 = vmul.f32 %v2412, %v2412
    %v2433 = vmul.f32 %v2417, %v2417
    %v2434 = vmul.f32 %v2420, %v2420
    %v2435 = vmul.f32 %v2425, %v2425
    %v2436 = vmul.f32 %v2428, %v2428
    %v2437 = vmul.f32 %v2409, %v2431
    %v2438 = vmul.f32 %v2412, %v2432
    %v2439 = vmul.f32 %v2417, %v2433
    %v2440 = vmul.f32 %v2420, %v2434
    %v2441 = vmul.f32 %v2425, %v2435
    %v2442 = vmul.f32 %v2428, %v2436
    %v2443 = vmul.f32 %v2437, 0.044715
    %v2444 = vmul.f32 %v2438, 0.044715
    %v2445 = vmul.f32 %v2439, 0.044715
    %v2446 = vmul.f32 %v2440, 0.044715
    %v2447 = vmul.f32 %v2441, 0.044715
    %v2448 = vmul.f32 %v2442, 0.044715
    %v2449 = vadd.f32 %v2409, %v2443
    %v2450 = vadd.f32 %v2412, %v2444
    %v2451 = vadd.f32 %v2417, %v2445
    %v2452 = vadd.f32 %v2420, %v2446
    %v2453 = vadd.f32 %v2425, %v2447
    %v2454 = vadd.f32 %v2428, %v2448
    %v2455 = vmul.f32 %v2449, 0.7978846
    %v2456 = vmul.f32 %v2450, 0.7978846
    %v2457 = vmul.f32 %v2451, 0.7978846
    %v2458 = vmul.f32 %v2452, 0.7978846
    %v2459 = vmul.f32 %v2453, 0.7978846
    %v2460 = vmul.f32 %v2454, 0.7978846
    %v2461 = vtanh.pop %v2455
    %v2462 = vtanh.pop %v2456
    %v2463 = vtanh.pop %v2457
    %v2464 = vtanh.pop %v2458
    %v2465 = vtanh.pop %v2459
    %v2466 = vtanh.pop %v2460
    %v2467 = vadd.f32 %v2461, 1.0
    %v2468 = vadd.f32 %v2462, 1.0
    %v2469 = vadd.f32 %v2463, 1.0
    %v2470 = vadd.f32 %v2464, 1.0
    %v2471 = vadd.f32 %v2465, 1.0
    %v2472 = vadd.f32 %v2466, 1.0
    %v2473 = vmul.f32 %v2467, 0.5
    %v2474 = vmul.f32 %v2468, 0.5
    %v2475 = vmul.f32 %v2469, 0.5
    %v2476 = vmul.f32 %v2470, 0.5
    %v2477 = vmul.f32 %v2471, 0.5
    %v2478 = vmul.f32 %v2472, 0.5
    %v2479 = vmul.f32 %v2409, %v2473
    %v2480 = vmul.f32 %v2412, %v2474
    %v2481 = vmul.f32 %v2417, %v2475
    %v2482 = vmul.f32 %v2420, %v2476
    %v2483 = vmul.f32 %v2425, %v2477
    %v2484 = vmul.f32 %v2428, %v2478
    %v2485 = vpack.c.bf16 %v2480, %v2479
    %v2486 = vpack.c.bf16 %v2482, %v2481
    %v2487 = vpack.c.bf16 %v2484, %v2483
    %v2488 = vlaneseq
    %v2489 = vshrl.u32 %v2488, 7
    %v2490 = vsub.s32 5, %v2489
    %v2491 = vrot.slane %v209, %v2490
    %v2508 = vunpack.c.l.b16 %v192
    %v2509 = vunpack.c.l.b16 %v193
    %v2510 = vunpack.c.l.b16 %v194
    %v2511 = vunpack.c.l.b16 %v195
    %v2512 = vunpack.c.l.b16 %v196
    %v2513 = vunpack.c.l.b16 %v197
    %v2514 = vunpack.c.l.b16 %v198
    %v2515 = vunpack.c.l.b16 %v199
    %v2516 = vunpack.c.l.b16 %v200
    %v2517 = vunpack.c.l.b16 %v201
    %v2518 = vunpack.c.l.b16 %v202
    %v2519 = vunpack.c.l.b16 %v203
    %v2520 = vunpack.c.l.b16 %v204
    %v2521 = vunpack.c.l.b16 %v205
    %v2522 = vunpack.c.l.b16 %v206
    %v2523 = vunpack.c.l.b16 %v207
    %v2524 = vpack.c.b16 %v2509, %v2508
    %v2525 = vpack.c.b16 %v2511, %v2510
    %v2526 = vpack.c.b16 %v2513, %v2512
    %v2527 = vpack.c.b16 %v2515, %v2514
    %v2528 = vpack.c.b16 %v2517, %v2516
    %v2529 = vpack.c.b16 %v2519, %v2518
    %v2530 = vpack.c.b16 %v2521, %v2520
    %v2531 = vpack.c.b16 %v2523, %v2522
    %2540 = vmatprep.subr.bf16.mxu0 0
    %2541 = vmatpush1.bf16.msra.mxu0 %v2524
    %2542 = vmatprep.subr.bf16.mxu0 0
    %2543 = vmatpush1.bf16.msra.mxu0 %v2525
    %2544 = vmatprep.subr.bf16.mxu0 0
    %2545 = vmatpush1.bf16.msra.mxu0 %v2526
    %2546 = vmatprep.subr.bf16.mxu0 0
    %2547 = vmatpush1.bf16.msra.mxu0 %v2527
    %2548 = vmatprep.subr.bf16.mxu0 0
    %2549 = vmatpush1.bf16.msra.mxu0 %v2528
    %2550 = vmatprep.subr.bf16.mxu0 0
    %2551 = vmatpush1.bf16.msra.mxu0 %v2529
    %2552 = vmatprep.subr.bf16.mxu0 0
    %2553 = vmatpush1.bf16.msra.mxu0 %v2530
    %2554 = vmatprep.subr.bf16.mxu0 0
    %2555 = vmatpush1.bf16.msra.mxu0 %v2531
    %2556 = vmatprep.subr.bf16.mxu0 0
    %2557 = vmatpush1.bf16.msra.mxu0 0
    %2558 = vmatprep.subr.bf16.mxu0 0
    %2559 = vmatpush1.bf16.msra.mxu0 0
    %2560 = vmatprep.subr.bf16.mxu0 0
    %2561 = vmatpush1.bf16.msra.mxu0 0
    %2562 = vmatprep.subr.bf16.mxu0 0
    %2563 = vmatpush1.bf16.msra.mxu0 0
    %2564 = vmatprep.subr.bf16.mxu0 0
    %2565 = vmatpush1.bf16.msra.mxu0 0
    %2566 = vmatprep.subr.bf16.mxu0 0
    %2567 = vmatpush1.bf16.msra.mxu0 0
    %2568 = vmatprep.subr.bf16.mxu0 0
    %2569 = vmatpush1.bf16.msra.mxu0 0
    %2570 = vmatprep.subr.bf16.mxu0 0
    %2571 = vmatpush1.bf16.msra.mxu0 0
    %2572 = vmatprep.mubr.bf16.mxu0 0
    %2573 = vmatmul.mubr.bf16.gmra.mrb[0].mxu0 %v2485
    %v2574 = vpop.f32.mrb[0].mxu0
    %v2575 = vadd.f32 %v2491, %v2574
    %v2576 = vpop.f32.mrb[0].mxu0
    %v2577 = vpop.f32.mrb[0].mxu0
    %v2578 = vpop.f32.mrb[0].mxu0
    %2579 = vmatprep.mubr.bf16.mxu0 0
    %2580 = vmatmul.mubr.bf16.gmra.mrb[0].mxu0 %v2486
    %v2581 = vpop.f32.mrb[0].mxu0
    %v2582 = vpop.f32.mrb[0].mxu0
    %v2583 = vpop.f32.mrb[0].mxu0
    %v2584 = vadd.f32 %v2491, %v2583
    %v2585 = vpop.f32.mrb[0].mxu0
    %2586 = vmatprep.mubr.bf16.mxu0 0
    %2587 = vmatmul.mubr.bf16.gmra.mrb[0].mxu0 %v2487
    %v2588 = vpop.f32.mrb[0].mxu0
    %v2589 = vpop.f32.mrb[0].mxu0
    %v2590 = vpop.f32.mrb[0].mxu0
    %v2591 = vpop.f32.mrb[0].mxu0
    %2592 = vdwg.mxu0
    %v2593 = vadd.f32 %v2242, %v2575
    %v2594 = vadd.f32 %v2245, %v2584
    %v2595 = vpack.c.bf16 %v2594, %v2593
    %v2596 = vld [vmem:[%s10] sm:$0xf]
    %v2597 = vld [vmem:[%s10 + $0x4] sm:$0xf]
    %v2598 = vld [vmem:[%s10 + $0x8] sm:$0xf]
    %v2599 = vld [vmem:[%s10 + $0xc] sm:$0xf]
    %v2604 = vunpack.c.l.b16 %v2596
    %v2605 = vunpack.c.l.b16 %v2597
    %v2606 = vunpack.c.l.b16 %v2598
    %v2607 = vunpack.c.l.b16 %v2599
    %v2608 = vpack.c.b16 %v2605, %v2604
    %v2609 = vpack.c.b16 %v2607, %v2606
    %v2613 = vsel %vm224, %v2595, 0
    %2615 = vmatprep.subr.bf16.mxu0 0
    %2616 = vmatpush1.bf16.msra.mxu0 %v2608
    %2617 = vmatprep.subr.bf16.mxu0 0
    %2618 = vmatpush1.bf16.msra.mxu0 %v2609
    %2619 = vmatprep.subr.bf16.mxu0 0
    %2620 = vmatpush1.bf16.msra.mxu0 0
    %2621 = vmatprep.subr.bf16.mxu0 0
    %2622 = vmatpush1.bf16.msra.mxu0 0
    %2623 = vmatprep.subr.bf16.mxu0 0
    %2624 = vmatpush1.bf16.msra.mxu0 0
    %2625 = vmatprep.subr.bf16.mxu0 0
    %2626 = vmatpush1.bf16.msra.mxu0 0
    %2627 = vmatprep.subr.bf16.mxu0 0
    %2628 = vmatpush1.bf16.msra.mxu0 0
    %2629 = vmatprep.subr.bf16.mxu0 0
    %2630 = vmatpush1.bf16.msra.mxu0 0
    %2631 = vmatprep.subr.bf16.mxu0 0
    %2632 = vmatpush1.bf16.msra.mxu0 0
    %2633 = vmatprep.subr.bf16.mxu0 0
    %2634 = vmatpush1.bf16.msra.mxu0 0
    %2635 = vmatprep.subr.bf16.mxu0 0
    %2636 = vmatpush1.bf16.msra.mxu0 0
    %2637 = vmatprep.subr.bf16.mxu0 0
    %2638 = vmatpush1.bf16.msra.mxu0 0
    %2639 = vmatprep.subr.bf16.mxu0 0
    %2640 = vmatpush1.bf16.msra.mxu0 0
    %2641 = vmatprep.subr.bf16.mxu0 0
    %2642 = vmatpush1.bf16.msra.mxu0 0
    %2643 = vmatprep.subr.bf16.mxu0 0
    %2644 = vmatpush1.bf16.msra.mxu0 0
    %2645 = vmatprep.subr.bf16.mxu0 0
    %2646 = vmatpush1.bf16.msra.mxu0 0
    %2647 = vmatprep.mubr.bf16.mxu0 0
    %2648 = vmatmul.mubr.bf16.gmra.mrb[0].mxu0 %v2613
    %v2649 = vpop.f32.mrb[0].mxu0
    %v2650 = vadd.f32 0.0, %v2649
    %v2651 = vpop.f32.mrb[0].mxu0
    %v2652 = vpop.f32.mrb[0].mxu0
    %v2653 = vadd.f32 0.0, %v2652
    %v2654 = vpop.f32.mrb[0].mxu0
    %2655 = vdwg.mxu0
    %vm2656 = vcmask 64512
    %2657 = vst.msk [vmem:[#allocation2] sm:$0xff] %vm2656, %v2650
    %2658 = vst.msk [vmem:[#allocation2 + $0x8] sm:$0xff] %vm2656, %v2653
    // Predicated region
    $region46: #{tpu_custom_call.1} parent=1 // pred_check
      _
    $region47: #{tpu_custom_call.1} parent=1 // pred_check_branch
      %2660 = sbr.rel (0) target = $region49
    $region48: #{tpu_custom_call.1} parent=1 // pred_region
      %s2662 = ssub.s32 256, 256
      %2663 = vsyncadd [#allocation3], %s2662
      %s2664 = sshll.u32 [#allocation2], 4
      %s2665 = int_to_ptr.vmem [resolvable:$true] %s2664
      %2670 = dma.vmem_to_hbm [thread:$0]  %s2665, 256, %s11, [#allocation3], 128, 128, 8
    $region49: #{tpu_custom_call.1} parent=1 // pred_fallthru
      _
    // Predicated region
    $region50: #{tpu_custom_call.1} parent=1 // pred_check
      _
    $region51: #{tpu_custom_call.1} parent=1 // pred_check_branch
      %2672 = sbr.rel (0) target = $region53
    $region52: #{tpu_custom_call.1} parent=1 // pred_region
      %2673 = dma.done [#allocation3], 256
    $region53: #{tpu_custom_call.1} parent=1 // pred_fallthru
      _
    %2674 = vsyncpa [#allocation3], 1

</llo_original>
